<compile_context>
chip_gen: v5e
topology: v5e:2x2
jax: 0.10.0
libtpu: 0.0.40
codegen_flags: <defaults>
</compile_context>

<pallas_src>
import jax
import jax.numpy as jnp
from jax.experimental import pallas as pl
from jax.experimental.pallas import tpu as pltpu


def _make_kernel(H, W, Cin, Cout, P):
    S = H * W            # flattened spatial size
    SLOPE = 0.2          # LeakyReLU negative slope

    def kernel(al_ref, x_ref, w1_ref, b1_ref, w2_ref, b2_ref, wfc_ref, bfc_ref,
               out_ref, xbuf, ybuf):
        # --- zero only the halo/pad rows of the padded staging buffers --------
        xbuf[0:P, :] = jnp.zeros((P, Cin), jnp.float32)
        xbuf[P + S:P + S + P, :] = jnp.zeros((P, Cin), jnp.float32)
        ybuf[0:P, :] = jnp.zeros((P, Cout), jnp.float32)
        ybuf[P + S:P + S + P, :] = jnp.zeros((P, Cout), jnp.float32)

        # --- stage this batch's image (already in VMEM via the pipeline) into
        #     the vertically zero-padded interior ------------------------------
        xbuf[P:P + S, :] = x_ref[0]

        # Horizontal SAME-padding masks, hoisted and shared by both convs.
        wcoord = jax.lax.broadcasted_iota(jnp.int32, (S, 1), 0) % W
        left_ok = wcoord != 0          # tap dw = -1 is valid
        right_ok = wcoord != W - 1     # tap dw = +1 is valid

        def conv3x3(buf, w_ref, b_ref):
            # 9 shifted matmuls over the vertically zero-padded buffer.
            acc = None
            for kw in range(3):
                part = None
                for kh in range(3):
                    start = P + (kh - 1) * W + (kw - 1)   # static shift
                    t = jnp.dot(buf[start:start + S, :], w_ref[kh, kw, :, :],
                                preferred_element_type=jnp.float32)
                    part = t if part is None else part + t
                # horizontal SAME padding: one select per kw-column of taps
                if kw == 0:
                    part = jnp.where(left_ok, part, 0.0)
                elif kw == 2:
                    part = jnp.where(right_ok, part, 0.0)
                acc = part if acc is None else acc + part
            return acc + b_ref[...]

        def lrelu(v):
            return jnp.where(v > 0, v, SLOPE * v)

        # ---- conv1 + LeakyReLU -----------------------------------------------
        y1 = lrelu(conv3x3(xbuf, w1_ref, b1_ref))

        # ---- conv2 + LeakyReLU (stage y1 into the padded buffer) --------------
        ybuf[P:P + S, :] = y1
        y2 = lrelu(conv3x3(ybuf, w2_ref, b2_ref))

        # ---- SE layer: global avg pool -> Linear -> tanh -> channel gate ------
        pooled = jnp.mean(y2, axis=0, keepdims=True)                    # (1, Cout)
        gate = jnp.tanh(jnp.dot(pooled, wfc_ref[...],
                                preferred_element_type=jnp.float32) + bfc_ref[...])
        gate = gate * al_ref[0]         # fold `al` into the tiny (1, Cout) gate

        # ---- channel scale + residual add -------------------------------------
        out_ref[0] = (y2 * gate + xbuf[P:P + S, :]).astype(out_ref.dtype)

    return kernel


def res_block_a(x, params, al=1.0):
    """x: (B, C, H, W) float32 (NCHW, as in the PyTorch module)."""
    w1, b1, w2, b2, wfc, bfc = params
    B, C, H, W = x.shape
    Cout = w1.shape[-1]
    assert C == Cout, "residual add requires in_ch == out_ch"
    S = H * W
    # top/bottom halo rows: >= W+1 and sublane-aligned (multiple of 8)
    P = max(8, ((W + 1 + 7) // 8) * 8)
    ROWS = 2 * P + S

    x_flat = jnp.transpose(x, (0, 2, 3, 1)).reshape(B, S, C)   # (B, H*W, C)
    al_arr = jnp.full((1,), al, jnp.float32)

    # ---- cost estimate + VMEM budget -----------------------------------------
    conv_flops = 2 * 9 * S * C * Cout + 2 * 9 * S * Cout * Cout
    misc_flops = 6 * S * Cout + 2 * Cout * Cout
    cost = pl.CostEstimate(
        flops=int(B * (conv_flops + misc_flops)),
        transcendentals=int(B * Cout),
        bytes_accessed=int(4 * (B * S * C + B * S * Cout
                                + 9 * C * Cout + 9 * Cout * Cout
                                + Cout * Cout + 3 * Cout)))

    param_bytes = 4 * (9 * C * Cout + 9 * Cout * Cout + Cout * Cout + 3 * Cout)
    est_vmem = (4 * ROWS * (C + Cout)          # padded staging buffers
                + 2 * 4 * S * C                # double-buffered x block
                + 2 * 4 * S * Cout             # double-buffered output block
                + 2 * param_bytes              # double-buffered params
                + 8 * 4 * S * max(C, Cout))    # in-kernel temporaries
    vmem_limit = int(min(64 * 2**20, max(32 * 2**20, 2 * est_vmem)))

    kernel = _make_kernel(H, W, C, Cout, P)
    out_flat = pl.pallas_call(
        kernel,
        out_shape=jax.ShapeDtypeStruct((B, S, Cout), x.dtype),
        grid=(B,),
        in_specs=[
            pl.BlockSpec(memory_space=pltpu.SMEM),                    # al scalar
            pl.BlockSpec((1, S, C), lambda b: (b, 0, 0)),             # x (pipelined)
            pl.BlockSpec((3, 3, C, Cout), lambda b: (0, 0, 0, 0)),    # conv1 weight
            pl.BlockSpec((1, Cout), lambda b: (0, 0)),                # conv1 bias
            pl.BlockSpec((3, 3, Cout, Cout), lambda b: (0, 0, 0, 0)), # conv2 weight
            pl.BlockSpec((1, Cout), lambda b: (0, 0)),                # conv2 bias
            pl.BlockSpec((Cout, Cout), lambda b: (0, 0)),             # SE fc weight (in,out)
            pl.BlockSpec((1, Cout), lambda b: (0, 0)),                # SE fc bias
        ],
        out_specs=pl.BlockSpec((1, S, Cout), lambda b: (b, 0, 0)),
        scratch_shapes=[
            pltpu.VMEM((ROWS, C), jnp.float32),                       # padded x buffer
            pltpu.VMEM((ROWS, Cout), jnp.float32),                    # padded y1 buffer
        ],
        compiler_params=pltpu.CompilerParams(
            dimension_semantics=("parallel",),
            vmem_limit_bytes=vmem_limit),
        cost_estimate=cost,
    )(al_arr, x_flat, w1, b1, w2, b2, wfc, bfc)

    return out_flat.reshape(B, H, W, Cout).transpose(0, 3, 1, 2)      # back to NCHW


def _reference(x, params, al):
    """Pure-JAX reference matching the PyTorch forward."""
    w1, b1, w2, b2, wfc, bfc = params

    def conv(inp, w, b):
        out = jax.lax.conv_general_dilated(
            inp, w, window_strides=(1, 1), padding="SAME",
            dimension_numbers=("NCHW", "HWIO", "NCHW"))
        return out + b.reshape(1, -1, 1, 1)

    lrelu = lambda v: jnp.where(v > 0, v, 0.2 * v)
    y = lrelu(conv(x, w1, b1))
    y = lrelu(conv(y, w2, b2))
    pooled = jnp.mean(y, axis=(2, 3))                  # (B, C)
    gate = jnp.tanh(pooled @ wfc + bfc)                # (B, C)
    y = y * gate[:, :, None, None]
    y = y * al
    return y + x


if __name__ == "__main__":
    B, C, H, W = 2, 4, 16, 16
    key = jax.random.PRNGKey(0)
    ks = jax.random.split(key, 7)
    scale = 0.3

    x = jax.random.normal(ks[0], (B, C, H, W), jnp.float32)
    # deterministic synthetic parameters (shapes per nn.Conv2d(C,C,3,p=1) / nn.Linear(C,C))
    w1 = scale * jax.random.normal(ks[1], (3, 3, C, C), jnp.float32)   # HWIO
    b1 = scale * jax.random.normal(ks[2], (1, C), jnp.float32)
    w2 = scale * jax.random.normal(ks[3], (3, 3, C, C), jnp.float32)
    b2 = scale * jax.random.normal(ks[4], (1, C), jnp.float32)
    wfc = scale * jax.random.normal(ks[5], (C, C), jnp.float32)        # stored as (in, out)
    bfc = scale * jax.random.normal(ks[6], (1, C), jnp.float32)
    params = (w1, b1, w2, b2, wfc, bfc)

    out = jax.block_until_ready(res_block_a(x, params, al=1.0))
    ref = jax.block_until_ready(_reference(x, params, 1.0))

    assert out.shape == x.shape
    err = float(jnp.max(jnp.abs(out - ref)))
    assert err < 1e-4, f"max abs err {err}"
    print("KERNEL_OK")
</pallas_src>

<mosaic_0001>
module attributes {stable_mosaic.version = 11 : i64} {
  func.func @kernel(%arg0: i32, %arg1: memref<1xf32, #tpu.memory_space<smem>>, %arg2: memref<1x256x4xf32, #tpu.memory_space<vmem>>, %arg3: memref<3x3x4x4xf32, #tpu.memory_space<vmem>>, %arg4: memref<1x4xf32, #tpu.memory_space<vmem>>, %arg5: memref<3x3x4x4xf32, #tpu.memory_space<vmem>>, %arg6: memref<1x4xf32, #tpu.memory_space<vmem>>, %arg7: memref<4x4xf32, #tpu.memory_space<vmem>>, %arg8: memref<1x4xf32, #tpu.memory_space<vmem>>, %arg9: memref<1x256x4xf32, #tpu.memory_space<vmem>>, %arg10: memref<304x4xf32, #tpu.memory_space<vmem>>, %arg11: memref<304x4xf32, #tpu.memory_space<vmem>>) attributes {dimension_semantics = [#tpu.dimension_semantics<parallel>], iteration_bounds = array<i64: 2>, scalar_prefetch = 0 : i64, scratch_operands = 2 : i64, tpu.core_type = #tpu.core_type<tc>, window_params = [{transform_indices = @transform_0, window_bounds = array<i64: 1>}, {transform_indices = @transform_1, window_bounds = array<i64: 1, 256, 4>}, {pipeline_mode = #tpu.pipeline_mode<synchronous>, transform_indices = @transform_2, window_bounds = array<i64: 3, 3, 4, 4>}, {pipeline_mode = #tpu.pipeline_mode<synchronous>, transform_indices = @transform_3, window_bounds = array<i64: 1, 4>}, {pipeline_mode = #tpu.pipeline_mode<synchronous>, transform_indices = @transform_4, window_bounds = array<i64: 3, 3, 4, 4>}, {pipeline_mode = #tpu.pipeline_mode<synchronous>, transform_indices = @transform_5, window_bounds = array<i64: 1, 4>}, {pipeline_mode = #tpu.pipeline_mode<synchronous>, transform_indices = @transform_6, window_bounds = array<i64: 4, 4>}, {pipeline_mode = #tpu.pipeline_mode<synchronous>, transform_indices = @transform_7, window_bounds = array<i64: 1, 4>}, {transform_indices = @transform_8, window_bounds = array<i64: 1, 256, 4>}]} {
    %cst = arith.constant 0.000000e+00 : f32
    %0 = vector.broadcast %cst : f32 to vector<24x4xf32>
    %c0 = arith.constant 0 : index
    %c0_0 = arith.constant 0 : index
    %1 = vector.load %arg10[%c0, %c0_0] : memref<304x4xf32, #tpu.memory_space<vmem>>, vector<24x4xf32>
    tpu.vector_store %arg10[%c0, %c0_0], %0 {strides = array<i32>} : memref<304x4xf32, #tpu.memory_space<vmem>>, vector<24x4xf32>,
    %cst_1 = arith.constant 0.000000e+00 : f32
    %2 = vector.broadcast %cst_1 : f32 to vector<24x4xf32>
    %c280 = arith.constant 280 : index
    %c0_2 = arith.constant 0 : index
    %3 = vector.load %arg10[%c280, %c0_2] : memref<304x4xf32, #tpu.memory_space<vmem>>, vector<24x4xf32>
    tpu.vector_store %arg10[%c280, %c0_2], %2 {strides = array<i32>} : memref<304x4xf32, #tpu.memory_space<vmem>>, vector<24x4xf32>,
    %cst_3 = arith.constant 0.000000e+00 : f32
    %4 = vector.broadcast %cst_3 : f32 to vector<24x4xf32>
    %c0_4 = arith.constant 0 : index
    %c0_5 = arith.constant 0 : index
    %5 = vector.load %arg11[%c0_4, %c0_5] : memref<304x4xf32, #tpu.memory_space<vmem>>, vector<24x4xf32>
    tpu.vector_store %arg11[%c0_4, %c0_5], %4 {strides = array<i32>} : memref<304x4xf32, #tpu.memory_space<vmem>>, vector<24x4xf32>,
    %cst_6 = arith.constant 0.000000e+00 : f32
    %6 = vector.broadcast %cst_6 : f32 to vector<24x4xf32>
    %c280_7 = arith.constant 280 : index
    %c0_8 = arith.constant 0 : index
    %7 = vector.load %arg11[%c280_7, %c0_8] : memref<304x4xf32, #tpu.memory_space<vmem>>, vector<24x4xf32>
    tpu.vector_store %arg11[%c280_7, %c0_8], %6 {strides = array<i32>} : memref<304x4xf32, #tpu.memory_space<vmem>>, vector<24x4xf32>,
    %c0_9 = arith.constant 0 : index
    %c0_10 = arith.constant 0 : index
    %c0_11 = arith.constant 0 : index
    %8 = vector.load %arg2[%c0_9, %c0_10, %c0_11] : memref<1x256x4xf32, #tpu.memory_space<vmem>>, vector<1x256x4xf32>
    %9 = vector.shape_cast %8 : vector<1x256x4xf32> to vector<256x4xf32>
    %c24 = arith.constant 24 : index
    %c0_12 = arith.constant 0 : index
    %10 = vector.load %arg10[%c24, %c0_12] : memref<304x4xf32, #tpu.memory_space<vmem>>, vector<256x4xf32>
    tpu.vector_store %arg10[%c24, %c0_12], %9 {strides = array<i32>} : memref<304x4xf32, #tpu.memory_space<vmem>>, vector<256x4xf32>,
    %11 = tpu.iota {dimensions = array<i32: 0>} : vector<256x1xi32>
    %c16_i32 = arith.constant 16 : i32
    %c0_i32 = arith.constant 0 : i32
    %12 = arith.cmpi eq, %c16_i32, %c0_i32 : i32
    %c1_i32 = arith.constant 1 : i32
    %13 = arith.select %12, %c1_i32, %c16_i32 : i32
    %14 = vector.broadcast %13 : i32 to vector<256x1xi32>
    %15 = arith.remsi %11, %14 : vector<256x1xi32>
    %c0_i32_13 = arith.constant 0 : i32
    %16 = vector.broadcast %c0_i32_13 : i32 to vector<256x1xi32>
    %17 = arith.cmpi ne, %15, %16 : vector<256x1xi32>
    %c0_i32_14 = arith.constant 0 : i32
    %18 = vector.broadcast %c0_i32_14 : i32 to vector<256x1xi32>
    %19 = arith.cmpi slt, %15, %18 : vector<256x1xi32>
    %c0_i32_15 = arith.constant 0 : i32
    %20 = arith.cmpi slt, %13, %c0_i32_15 : i32
    %21 = vector.broadcast %20 : i1 to vector<256x1xi1>
    %22 = vector.broadcast %21 : vector<256x1xi1> to vector<256x1xi1>
    %23 = arith.xori %19, %22 : vector<256x1xi1>
    %24 = arith.andi %23, %17 : vector<256x1xi1>
    %25 = vector.broadcast %13 : i32 to vector<256x1xi32>
    %26 = arith.addi %15, %25 : vector<256x1xi32>
    %27 = arith.select %24, %26, %15 : vector<256x1xi1>, vector<256x1xi32>
    %c0_i32_16 = arith.constant 0 : i32
    %28 = vector.broadcast %c0_i32_16 : i32 to vector<256x1xi32>
    %29 = arith.cmpi ne, %27, %28 : vector<256x1xi32>
    %c15_i32 = arith.constant 15 : i32
    %30 = vector.broadcast %c15_i32 : i32 to vector<256x1xi32>
    %31 = arith.cmpi ne, %27, %30 : vector<256x1xi32>
    %c7 = arith.constant 7 : index
    %c0_17 = arith.constant 0 : index
    %32 = vector.load %arg10[%c7, %c0_17] : memref<304x4xf32, #tpu.memory_space<vmem>>, vector<256x4xf32>
    %c0_18 = arith.constant 0 : index
    %c0_19 = arith.constant 0 : index
    %c0_20 = arith.constant 0 : index
    %c0_21 = arith.constant 0 : index
    %33 = vector.load %arg3[%c0_18, %c0_19, %c0_20, %c0_21] : memref<3x3x4x4xf32, #tpu.memory_space<vmem>>, vector<1x1x4x4xf32>
    %34 = vector.shape_cast %33 : vector<1x1x4x4xf32> to vector<4x4xf32>
    %cst_22 = arith.constant dense<0.000000e+00> : vector<256x4xf32>
    %35 = tpu.matmul %32, %34, %cst_22 {dimension_numbers = #tpu.dot_dimension_numbers<[1], [0], [0], [1], [0, 0, 1, 1], [], []>} : vector<256x4xf32>, vector<4x4xf32>, vector<256x4xf32> -> vector<256x4xf32>
    %c23 = arith.constant 23 : index
    %c0_23 = arith.constant 0 : index
    %36 = vector.load %arg10[%c23, %c0_23] : memref<304x4xf32, #tpu.memory_space<vmem>>, vector<256x4xf32>
    %c1 = arith.constant 1 : index
    %c0_24 = arith.constant 0 : index
    %c0_25 = arith.constant 0 : index
    %c0_26 = arith.constant 0 : index
    %37 = vector.load %arg3[%c1, %c0_24, %c0_25, %c0_26] : memref<3x3x4x4xf32, #tpu.memory_space<vmem>>, vector<1x1x4x4xf32>
    %38 = vector.shape_cast %37 : vector<1x1x4x4xf32> to vector<4x4xf32>
    %cst_27 = arith.constant dense<0.000000e+00> : vector<256x4xf32>
    %39 = tpu.matmul %36, %38, %cst_27 {dimension_numbers = #tpu.dot_dimension_numbers<[1], [0], [0], [1], [0, 0, 1, 1], [], []>} : vector<256x4xf32>, vector<4x4xf32>, vector<256x4xf32> -> vector<256x4xf32>
    %40 = arith.addf %35, %39 : vector<256x4xf32>
    %c39 = arith.constant 39 : index
    %c0_28 = arith.constant 0 : index
    %41 = vector.load %arg10[%c39, %c0_28] : memref<304x4xf32, #tpu.memory_space<vmem>>, vector<256x4xf32>
    %c2 = arith.constant 2 : index
    %c0_29 = arith.constant 0 : index
    %c0_30 = arith.constant 0 : index
    %c0_31 = arith.constant 0 : index
    %42 = vector.load %arg3[%c2, %c0_29, %c0_30, %c0_31] : memref<3x3x4x4xf32, #tpu.memory_space<vmem>>, vector<1x1x4x4xf32>
    %43 = vector.shape_cast %42 : vector<1x1x4x4xf32> to vector<4x4xf32>
    %cst_32 = arith.constant dense<0.000000e+00> : vector<256x4xf32>
    %44 = tpu.matmul %41, %43, %cst_32 {dimension_numbers = #tpu.dot_dimension_numbers<[1], [0], [0], [1], [0, 0, 1, 1], [], []>} : vector<256x4xf32>, vector<4x4xf32>, vector<256x4xf32> -> vector<256x4xf32>
    %45 = arith.addf %40, %44 : vector<256x4xf32>
    %cst_33 = arith.constant 0.000000e+00 : f32
    %46 = vector.shape_cast %29 : vector<256x1xi1> to vector<256x1xi1>
    %47 = vector.broadcast %46 : vector<256x1xi1> to vector<256x4xi1>
    %48 = vector.broadcast %cst_33 : f32 to vector<256x4xf32>
    %49 = arith.select %47, %45, %48 : vector<256x4xi1>, vector<256x4xf32>
    %c8 = arith.constant 8 : index
    %c0_34 = arith.constant 0 : index
    %50 = vector.load %arg10[%c8, %c0_34] : memref<304x4xf32, #tpu.memory_space<vmem>>, vector<256x4xf32>
    %c0_35 = arith.constant 0 : index
    %c1_36 = arith.constant 1 : index
    %c0_37 = arith.constant 0 : index
    %c0_38 = arith.constant 0 : index
    %51 = vector.load %arg3[%c0_35, %c1_36, %c0_37, %c0_38] : memref<3x3x4x4xf32, #tpu.memory_space<vmem>>, vector<1x1x4x4xf32>
    %52 = vector.shape_cast %51 : vector<1x1x4x4xf32> to vector<4x4xf32>
    %cst_39 = arith.constant dense<0.000000e+00> : vector<256x4xf32>
    %53 = tpu.matmul %50, %52, %cst_39 {dimension_numbers = #tpu.dot_dimension_numbers<[1], [0], [0], [1], [0, 0, 1, 1], [], []>} : vector<256x4xf32>, vector<4x4xf32>, vector<256x4xf32> -> vector<256x4xf32>
    %c24_40 = arith.constant 24 : index
    %c0_41 = arith.constant 0 : index
    %54 = vector.load %arg10[%c24_40, %c0_41] : memref<304x4xf32, #tpu.memory_space<vmem>>, vector<256x4xf32>
    %c1_42 = arith.constant 1 : index
    %c1_43 = arith.constant 1 : index
    %c0_44 = arith.constant 0 : index
    %c0_45 = arith.constant 0 : index
    %55 = vector.load %arg3[%c1_42, %c1_43, %c0_44, %c0_45] : memref<3x3x4x4xf32, #tpu.memory_space<vmem>>, vector<1x1x4x4xf32>
    %56 = vector.shape_cast %55 : vector<1x1x4x4xf32> to vector<4x4xf32>
    %cst_46 = arith.constant dense<0.000000e+00> : vector<256x4xf32>
    %57 = tpu.matmul %54, %56, %cst_46 {dimension_numbers = #tpu.dot_dimension_numbers<[1], [0], [0], [1], [0, 0, 1, 1], [], []>} : vector<256x4xf32>, vector<4x4xf32>, vector<256x4xf32> -> vector<256x4xf32>
    %58 = arith.addf %53, %57 : vector<256x4xf32>
    %c40 = arith.constant 40 : index
    %c0_47 = arith.constant 0 : index
    %59 = vector.load %arg10[%c40, %c0_47] : memref<304x4xf32, #tpu.memory_space<vmem>>, vector<256x4xf32>
    %c2_48 = arith.constant 2 : index
    %c1_49 = arith.constant 1 : index
    %c0_50 = arith.constant 0 : index
    %c0_51 = arith.constant 0 : index
    %60 = vector.load %arg3[%c2_48, %c1_49, %c0_50, %c0_51] : memref<3x3x4x4xf32, #tpu.memory_space<vmem>>, vector<1x1x4x4xf32>
    %61 = vector.shape_cast %60 : vector<1x1x4x4xf32> to vector<4x4xf32>
    %cst_52 = arith.constant dense<0.000000e+00> : vector<256x4xf32>
    %62 = tpu.matmul %59, %61, %cst_52 {dimension_numbers = #tpu.dot_dimension_numbers<[1], [0], [0], [1], [0, 0, 1, 1], [], []>} : vector<256x4xf32>, vector<4x4xf32>, vector<256x4xf32> -> vector<256x4xf32>
    %63 = arith.addf %58, %62 : vector<256x4xf32>
    %64 = arith.addf %49, %63 : vector<256x4xf32>
    %c9 = arith.constant 9 : index
    %c0_53 = arith.constant 0 : index
    %65 = vector.load %arg10[%c9, %c0_53] : memref<304x4xf32, #tpu.memory_space<vmem>>, vector<256x4xf32>
    %c0_54 = arith.constant 0 : index
    %c2_55 = arith.constant 2 : index
    %c0_56 = arith.constant 0 : index
    %c0_57 = arith.constant 0 : index
    %66 = vector.load %arg3[%c0_54, %c2_55, %c0_56, %c0_57] : memref<3x3x4x4xf32, #tpu.memory_space<vmem>>, vector<1x1x4x4xf32>
    %67 = vector.shape_cast %66 : vector<1x1x4x4xf32> to vector<4x4xf32>
    %cst_58 = arith.constant dense<0.000000e+00> : vector<256x4xf32>
    %68 = tpu.matmul %65, %67, %cst_58 {dimension_numbers = #tpu.dot_dimension_numbers<[1], [0], [0], [1], [0, 0, 1, 1], [], []>} : vector<256x4xf32>, vector<4x4xf32>, vector<256x4xf32> -> vector<256x4xf32>
    %c25 = arith.constant 25 : index
    %c0_59 = arith.constant 0 : index
    %69 = vector.load %arg10[%c25, %c0_59] : memref<304x4xf32, #tpu.memory_space<vmem>>, vector<256x4xf32>
    %c1_60 = arith.constant 1 : index
    %c2_61 = arith.constant 2 : index
    %c0_62 = arith.constant 0 : index
    %c0_63 = arith.constant 0 : index
    %70 = vector.load %arg3[%c1_60, %c2_61, %c0_62, %c0_63] : memref<3x3x4x4xf32, #tpu.memory_space<vmem>>, vector<1x1x4x4xf32>
    %71 = vector.shape_cast %70 : vector<1x1x4x4xf32> to vector<4x4xf32>
    %cst_64 = arith.constant dense<0.000000e+00> : vector<256x4xf32>
    %72 = tpu.matmul %69, %71, %cst_64 {dimension_numbers = #tpu.dot_dimension_numbers<[1], [0], [0], [1], [0, 0, 1, 1], [], []>} : vector<256x4xf32>, vector<4x4xf32>, vector<256x4xf32> -> vector<256x4xf32>
    %73 = arith.addf %68, %72 : vector<256x4xf32>
    %c41 = arith.constant 41 : index
    %c0_65 = arith.constant 0 : index
    %74 = vector.load %arg10[%c41, %c0_65] : memref<304x4xf32, #tpu.memory_space<vmem>>, vector<256x4xf32>
    %c2_66 = arith.constant 2 : index
    %c2_67 = arith.constant 2 : index
    %c0_68 = arith.constant 0 : index
    %c0_69 = arith.constant 0 : index
    %75 = vector.load %arg3[%c2_66, %c2_67, %c0_68, %c0_69] : memref<3x3x4x4xf32, #tpu.memory_space<vmem>>, vector<1x1x4x4xf32>
    %76 = vector.shape_cast %75 : vector<1x1x4x4xf32> to vector<4x4xf32>
    %cst_70 = arith.constant dense<0.000000e+00> : vector<256x4xf32>
    %77 = tpu.matmul %74, %76, %cst_70 {dimension_numbers = #tpu.dot_dimension_numbers<[1], [0], [0], [1], [0, 0, 1, 1], [], []>} : vector<256x4xf32>, vector<4x4xf32>, vector<256x4xf32> -> vector<256x4xf32>
    %78 = arith.addf %73, %77 : vector<256x4xf32>
    %cst_71 = arith.constant 0.000000e+00 : f32
    %79 = vector.shape_cast %31 : vector<256x1xi1> to vector<256x1xi1>
    %80 = vector.broadcast %79 : vector<256x1xi1> to vector<256x4xi1>
    %81 = vector.broadcast %cst_71 : f32 to vector<256x4xf32>
    %82 = arith.select %80, %78, %81 : vector<256x4xi1>, vector<256x4xf32>
    %83 = arith.addf %64, %82 : vector<256x4xf32>
    %c0_72 = arith.constant 0 : index
    %c0_73 = arith.constant 0 : index
    %84 = vector.load %arg4[%c0_72, %c0_73] : memref<1x4xf32, #tpu.memory_space<vmem>>, vector<1x4xf32>
    %85 = vector.broadcast %84 : vector<1x4xf32> to vector<256x4xf32>
    %86 = arith.addf %83, %85 : vector<256x4xf32>
    %cst_74 = arith.constant 0.000000e+00 : f32
    %87 = vector.broadcast %cst_74 : f32 to vector<256x4xf32>
    %88 = arith.cmpf ogt, %86, %87 : vector<256x4xf32>
    %cst_75 = arith.constant 2.000000e-01 : f32
    %89 = vector.broadcast %cst_75 : f32 to vector<256x4xf32>
    %90 = arith.mulf %89, %86 : vector<256x4xf32>
    %91 = arith.select %88, %86, %90 : vector<256x4xi1>, vector<256x4xf32>
    %c24_76 = arith.constant 24 : index
    %c0_77 = arith.constant 0 : index
    %92 = vector.load %arg11[%c24_76, %c0_77] : memref<304x4xf32, #tpu.memory_space<vmem>>, vector<256x4xf32>
    tpu.vector_store %arg11[%c24_76, %c0_77], %91 {strides = array<i32>} : memref<304x4xf32, #tpu.memory_space<vmem>>, vector<256x4xf32>,
    %c7_78 = arith.constant 7 : index
    %c0_79 = arith.constant 0 : index
    %93 = vector.load %arg11[%c7_78, %c0_79] : memref<304x4xf32, #tpu.memory_space<vmem>>, vector<256x4xf32>
    %c0_80 = arith.constant 0 : index
    %c0_81 = arith.constant 0 : index
    %c0_82 = arith.constant 0 : index
    %c0_83 = arith.constant 0 : index
    %94 = vector.load %arg5[%c0_80, %c0_81, %c0_82, %c0_83] : memref<3x3x4x4xf32, #tpu.memory_space<vmem>>, vector<1x1x4x4xf32>
    %95 = vector.shape_cast %94 : vector<1x1x4x4xf32> to vector<4x4xf32>
    %cst_84 = arith.constant dense<0.000000e+00> : vector<256x4xf32>
    %96 = tpu.matmul %93, %95, %cst_84 {dimension_numbers = #tpu.dot_dimension_numbers<[1], [0], [0], [1], [0, 0, 1, 1], [], []>} : vector<256x4xf32>, vector<4x4xf32>, vector<256x4xf32> -> vector<256x4xf32>
    %c23_85 = arith.constant 23 : index
    %c0_86 = arith.constant 0 : index
    %97 = vector.load %arg11[%c23_85, %c0_86] : memref<304x4xf32, #tpu.memory_space<vmem>>, vector<256x4xf32>
    %c1_87 = arith.constant 1 : index
    %c0_88 = arith.constant 0 : index
    %c0_89 = arith.constant 0 : index
    %c0_90 = arith.constant 0 : index
    %98 = vector.load %arg5[%c1_87, %c0_88, %c0_89, %c0_90] : memref<3x3x4x4xf32, #tpu.memory_space<vmem>>, vector<1x1x4x4xf32>
    %99 = vector.shape_cast %98 : vector<1x1x4x4xf32> to vector<4x4xf32>
    %cst_91 = arith.constant dense<0.000000e+00> : vector<256x4xf32>
    %100 = tpu.matmul %97, %99, %cst_91 {dimension_numbers = #tpu.dot_dimension_numbers<[1], [0], [0], [1], [0, 0, 1, 1], [], []>} : vector<256x4xf32>, vector<4x4xf32>, vector<256x4xf32> -> vector<256x4xf32>
    %101 = arith.addf %96, %100 : vector<256x4xf32>
    %c39_92 = arith.constant 39 : index
    %c0_93 = arith.constant 0 : index
    %102 = vector.load %arg11[%c39_92, %c0_93] : memref<304x4xf32, #tpu.memory_space<vmem>>, vector<256x4xf32>
    %c2_94 = arith.constant 2 : index
    %c0_95 = arith.constant 0 : index
    %c0_96 = arith.constant 0 : index
    %c0_97 = arith.constant 0 : index
    %103 = vector.load %arg5[%c2_94, %c0_95, %c0_96, %c0_97] : memref<3x3x4x4xf32, #tpu.memory_space<vmem>>, vector<1x1x4x4xf32>
    %104 = vector.shape_cast %103 : vector<1x1x4x4xf32> to vector<4x4xf32>
    %cst_98 = arith.constant dense<0.000000e+00> : vector<256x4xf32>
    %105 = tpu.matmul %102, %104, %cst_98 {dimension_numbers = #tpu.dot_dimension_numbers<[1], [0], [0], [1], [0, 0, 1, 1], [], []>} : vector<256x4xf32>, vector<4x4xf32>, vector<256x4xf32> -> vector<256x4xf32>
    %106 = arith.addf %101, %105 : vector<256x4xf32>
    %cst_99 = arith.constant 0.000000e+00 : f32
    %107 = vector.shape_cast %29 : vector<256x1xi1> to vector<256x1xi1>
    %108 = vector.broadcast %107 : vector<256x1xi1> to vector<256x4xi1>
    %109 = vector.broadcast %cst_99 : f32 to vector<256x4xf32>
    %110 = arith.select %108, %106, %109 : vector<256x4xi1>, vector<256x4xf32>
    %c8_100 = arith.constant 8 : index
    %c0_101 = arith.constant 0 : index
    %111 = vector.load %arg11[%c8_100, %c0_101] : memref<304x4xf32, #tpu.memory_space<vmem>>, vector<256x4xf32>
    %c0_102 = arith.constant 0 : index
    %c1_103 = arith.constant 1 : index
    %c0_104 = arith.constant 0 : index
    %c0_105 = arith.constant 0 : index
    %112 = vector.load %arg5[%c0_102, %c1_103, %c0_104, %c0_105] : memref<3x3x4x4xf32, #tpu.memory_space<vmem>>, vector<1x1x4x4xf32>
    %113 = vector.shape_cast %112 : vector<1x1x4x4xf32> to vector<4x4xf32>
    %cst_106 = arith.constant dense<0.000000e+00> : vector<256x4xf32>
    %114 = tpu.matmul %111, %113, %cst_106 {dimension_numbers = #tpu.dot_dimension_numbers<[1], [0], [0], [1], [0, 0, 1, 1], [], []>} : vector<256x4xf32>, vector<4x4xf32>, vector<256x4xf32> -> vector<256x4xf32>
    %c24_107 = arith.constant 24 : index
    %c0_108 = arith.constant 0 : index
    %115 = vector.load %arg11[%c24_107, %c0_108] : memref<304x4xf32, #tpu.memory_space<vmem>>, vector<256x4xf32>
    %c1_109 = arith.constant 1 : index
    %c1_110 = arith.constant 1 : index
    %c0_111 = arith.constant 0 : index
    %c0_112 = arith.constant 0 : index
    %116 = vector.load %arg5[%c1_109, %c1_110, %c0_111, %c0_112] : memref<3x3x4x4xf32, #tpu.memory_space<vmem>>, vector<1x1x4x4xf32>
    %117 = vector.shape_cast %116 : vector<1x1x4x4xf32> to vector<4x4xf32>
    %cst_113 = arith.constant dense<0.000000e+00> : vector<256x4xf32>
    %118 = tpu.matmul %115, %117, %cst_113 {dimension_numbers = #tpu.dot_dimension_numbers<[1], [0], [0], [1], [0, 0, 1, 1], [], []>} : vector<256x4xf32>, vector<4x4xf32>, vector<256x4xf32> -> vector<256x4xf32>
    %119 = arith.addf %114, %118 : vector<256x4xf32>
    %c40_114 = arith.constant 40 : index
    %c0_115 = arith.constant 0 : index
    %120 = vector.load %arg11[%c40_114, %c0_115] : memref<304x4xf32, #tpu.memory_space<vmem>>, vector<256x4xf32>
    %c2_116 = arith.constant 2 : index
    %c1_117 = arith.constant 1 : index
    %c0_118 = arith.constant 0 : index
    %c0_119 = arith.constant 0 : index
    %121 = vector.load %arg5[%c2_116, %c1_117, %c0_118, %c0_119] : memref<3x3x4x4xf32, #tpu.memory_space<vmem>>, vector<1x1x4x4xf32>
    %122 = vector.shape_cast %121 : vector<1x1x4x4xf32> to vector<4x4xf32>
    %cst_120 = arith.constant dense<0.000000e+00> : vector<256x4xf32>
    %123 = tpu.matmul %120, %122, %cst_120 {dimension_numbers = #tpu.dot_dimension_numbers<[1], [0], [0], [1], [0, 0, 1, 1], [], []>} : vector<256x4xf32>, vector<4x4xf32>, vector<256x4xf32> -> vector<256x4xf32>
    %124 = arith.addf %119, %123 : vector<256x4xf32>
    %125 = arith.addf %110, %124 : vector<256x4xf32>
    %c9_121 = arith.constant 9 : index
    %c0_122 = arith.constant 0 : index
    %126 = vector.load %arg11[%c9_121, %c0_122] : memref<304x4xf32, #tpu.memory_space<vmem>>, vector<256x4xf32>
    %c0_123 = arith.constant 0 : index
    %c2_124 = arith.constant 2 : index
    %c0_125 = arith.constant 0 : index
    %c0_126 = arith.constant 0 : index
    %127 = vector.load %arg5[%c0_123, %c2_124, %c0_125, %c0_126] : memref<3x3x4x4xf32, #tpu.memory_space<vmem>>, vector<1x1x4x4xf32>
    %128 = vector.shape_cast %127 : vector<1x1x4x4xf32> to vector<4x4xf32>
    %cst_127 = arith.constant dense<0.000000e+00> : vector<256x4xf32>
    %129 = tpu.matmul %126, %128, %cst_127 {dimension_numbers = #tpu.dot_dimension_numbers<[1], [0], [0], [1], [0, 0, 1, 1], [], []>} : vector<256x4xf32>, vector<4x4xf32>, vector<256x4xf32> -> vector<256x4xf32>
    %c25_128 = arith.constant 25 : index
    %c0_129 = arith.constant 0 : index
    %130 = vector.load %arg11[%c25_128, %c0_129] : memref<304x4xf32, #tpu.memory_space<vmem>>, vector<256x4xf32>
    %c1_130 = arith.constant 1 : index
    %c2_131 = arith.constant 2 : index
    %c0_132 = arith.constant 0 : index
    %c0_133 = arith.constant 0 : index
    %131 = vector.load %arg5[%c1_130, %c2_131, %c0_132, %c0_133] : memref<3x3x4x4xf32, #tpu.memory_space<vmem>>, vector<1x1x4x4xf32>
    %132 = vector.shape_cast %131 : vector<1x1x4x4xf32> to vector<4x4xf32>
    %cst_134 = arith.constant dense<0.000000e+00> : vector<256x4xf32>
    %133 = tpu.matmul %130, %132, %cst_134 {dimension_numbers = #tpu.dot_dimension_numbers<[1], [0], [0], [1], [0, 0, 1, 1], [], []>} : vector<256x4xf32>, vector<4x4xf32>, vector<256x4xf32> -> vector<256x4xf32>
    %134 = arith.addf %129, %133 : vector<256x4xf32>
    %c41_135 = arith.constant 41 : index
    %c0_136 = arith.constant 0 : index
    %135 = vector.load %arg11[%c41_135, %c0_136] : memref<304x4xf32, #tpu.memory_space<vmem>>, vector<256x4xf32>
    %c2_137 = arith.constant 2 : index
    %c2_138 = arith.constant 2 : index
    %c0_139 = arith.constant 0 : index
    %c0_140 = arith.constant 0 : index
    %136 = vector.load %arg5[%c2_137, %c2_138, %c0_139, %c0_140] : memref<3x3x4x4xf32, #tpu.memory_space<vmem>>, vector<1x1x4x4xf32>
    %137 = vector.shape_cast %136 : vector<1x1x4x4xf32> to vector<4x4xf32>
    %cst_141 = arith.constant dense<0.000000e+00> : vector<256x4xf32>
    %138 = tpu.matmul %135, %137, %cst_141 {dimension_numbers = #tpu.dot_dimension_numbers<[1], [0], [0], [1], [0, 0, 1, 1], [], []>} : vector<256x4xf32>, vector<4x4xf32>, vector<256x4xf32> -> vector<256x4xf32>
    %139 = arith.addf %134, %138 : vector<256x4xf32>
    %cst_142 = arith.constant 0.000000e+00 : f32
    %140 = vector.shape_cast %31 : vector<256x1xi1> to vector<256x1xi1>
    %141 = vector.broadcast %140 : vector<256x1xi1> to vector<256x4xi1>
    %142 = vector.broadcast %cst_142 : f32 to vector<256x4xf32>
    %143 = arith.select %141, %139, %142 : vector<256x4xi1>, vector<256x4xf32>
    %144 = arith.addf %125, %143 : vector<256x4xf32>
    %c0_143 = arith.constant 0 : index
    %c0_144 = arith.constant 0 : index
    %145 = vector.load %arg6[%c0_143, %c0_144] : memref<1x4xf32, #tpu.memory_space<vmem>>, vector<1x4xf32>
    %146 = vector.broadcast %145 : vector<1x4xf32> to vector<256x4xf32>
    %147 = arith.addf %144, %146 : vector<256x4xf32>
    %cst_145 = arith.constant 0.000000e+00 : f32
    %148 = vector.broadcast %cst_145 : f32 to vector<256x4xf32>
    %149 = arith.cmpf ogt, %147, %148 : vector<256x4xf32>
    %cst_146 = arith.constant 2.000000e-01 : f32
    %150 = vector.broadcast %cst_146 : f32 to vector<256x4xf32>
    %151 = arith.mulf %150, %147 : vector<256x4xf32>
    %152 = arith.select %149, %147, %151 : vector<256x4xi1>, vector<256x4xf32>
    %cst_147 = arith.constant dense<0.000000e+00> : vector<4xf32>
    %153 = vector.multi_reduction <add>, %152, %cst_147 [0] : vector<256x4xf32> to vector<4xf32>
    %154 = vector.shape_cast %153 : vector<4xf32> to vector<1x4xf32>
    %cst_148 = arith.constant 2.560000e+02 : f32
    %155 = vector.broadcast %cst_148 : f32 to vector<1x4xf32>
    %156 = arith.divf %154, %155 : vector<1x4xf32>
    %c0_149 = arith.constant 0 : index
    %c0_150 = arith.constant 0 : index
    %157 = vector.load %arg7[%c0_149, %c0_150] : memref<4x4xf32, #tpu.memory_space<vmem>>, vector<4x4xf32>
    %cst_151 = arith.constant dense<0.000000e+00> : vector<1x4xf32>
    %158 = tpu.matmul %156, %157, %cst_151 {dimension_numbers = #tpu.dot_dimension_numbers<[1], [0], [0], [1], [0, 0, 1, 1], [], []>} : vector<1x4xf32>, vector<4x4xf32>, vector<1x4xf32> -> vector<1x4xf32>
    %c0_152 = arith.constant 0 : index
    %c0_153 = arith.constant 0 : index
    %159 = vector.load %arg8[%c0_152, %c0_153] : memref<1x4xf32, #tpu.memory_space<vmem>>, vector<1x4xf32>
    %160 = arith.addf %158, %159 : vector<1x4xf32>
    %161 = math.tanh %160 : vector<1x4xf32>
    %c0_154 = arith.constant 0 : index
    %162 = memref.load %arg1[%c0_154] : memref<1xf32, #tpu.memory_space<smem>>
    %163 = vector.broadcast %162 : f32 to vector<1x4xf32>
    %164 = arith.mulf %161, %163 : vector<1x4xf32>
    %165 = vector.broadcast %164 : vector<1x4xf32> to vector<256x4xf32>
    %166 = arith.mulf %152, %165 : vector<256x4xf32>
    %c24_155 = arith.constant 24 : index
    %c0_156 = arith.constant 0 : index
    %167 = vector.load %arg10[%c24_155, %c0_156] : memref<304x4xf32, #tpu.memory_space<vmem>>, vector<256x4xf32>
    %168 = arith.addf %166, %167 : vector<256x4xf32>
    %c0_157 = arith.constant 0 : index
    %c0_158 = arith.constant 0 : index
    %c0_159 = arith.constant 0 : index
    %169 = vector.load %arg9[%c0_157, %c0_158, %c0_159] : memref<1x256x4xf32, #tpu.memory_space<vmem>>, vector<1x256x4xf32>
    %170 = vector.shape_cast %169 : vector<1x256x4xf32> to vector<256x4xf32>
    %171 = vector.shape_cast %168 : vector<256x4xf32> to vector<1x256x4xf32>
    tpu.vector_store %arg9[%c0_157, %c0_158, %c0_159], %171 {strides = array<i32>} : memref<1x256x4xf32, #tpu.memory_space<vmem>>, vector<1x256x4xf32>,
    return
  }
  func.func @transform_0(%arg0: i32) -> i32 {
    %c0_i32 = arith.constant 0 : i32
    %c0_i32_0 = arith.constant 0 : i32
    return %c0_i32 : i32
  }
  func.func @transform_1(%arg0: i32) -> (i32, i32, i32) {
    %c0_i32 = arith.constant 0 : i32
    %c0_i32_0 = arith.constant 0 : i32
    %c0_i32_1 = arith.constant 0 : i32
    return %arg0, %c0_i32, %c0_i32_0 : i32, i32, i32
  }
  func.func @transform_2(%arg0: i32) -> (i32, i32, i32, i32) {
    %c0_i32 = arith.constant 0 : i32
    %c0_i32_0 = arith.constant 0 : i32
    %c0_i32_1 = arith.constant 0 : i32
    %c0_i32_2 = arith.constant 0 : i32
    %c0_i32_3 = arith.constant 0 : i32
    return %c0_i32, %c0_i32_0, %c0_i32_1, %c0_i32_2 : i32, i32, i32, i32
  }
  func.func @transform_3(%arg0: i32) -> (i32, i32) {
    %c0_i32 = arith.constant 0 : i32
    %c0_i32_0 = arith.constant 0 : i32
    %c0_i32_1 = arith.constant 0 : i32
    return %c0_i32, %c0_i32_0 : i32, i32
  }
  func.func @transform_4(%arg0: i32) -> (i32, i32, i32, i32) {
    %c0_i32 = arith.constant 0 : i32
    %c0_i32_0 = arith.constant 0 : i32
    %c0_i32_1 = arith.constant 0 : i32
    %c0_i32_2 = arith.constant 0 : i32
    %c0_i32_3 = arith.constant 0 : i32
    return %c0_i32, %c0_i32_0, %c0_i32_1, %c0_i32_2 : i32, i32, i32, i32
  }
  func.func @transform_5(%arg0: i32) -> (i32, i32) {
    %c0_i32 = arith.constant 0 : i32
    %c0_i32_0 = arith.constant 0 : i32
    %c0_i32_1 = arith.constant 0 : i32
    return %c0_i32, %c0_i32_0 : i32, i32
  }
  func.func @transform_6(%arg0: i32) -> (i32, i32) {
    %c0_i32 = arith.constant 0 : i32
    %c0_i32_0 = arith.constant 0 : i32
    %c0_i32_1 = arith.constant 0 : i32
    return %c0_i32, %c0_i32_0 : i32, i32
  }
  func.func @transform_7(%arg0: i32) -> (i32, i32) {
    %c0_i32 = arith.constant 0 : i32
    %c0_i32_0 = arith.constant 0 : i32
    %c0_i32_1 = arith.constant 0 : i32
    return %c0_i32, %c0_i32_0 : i32, i32
  }
  func.func @transform_8(%arg0: i32) -> (i32, i32, i32) {
    %c0_i32 = arith.constant 0 : i32
    %c0_i32_0 = arith.constant 0 : i32
    %c0_i32_1 = arith.constant 0 : i32
    return %arg0, %c0_i32, %c0_i32_0 : i32, i32, i32
  }
}

</mosaic_0001>

<llo_original>
// kernel: tpu_custom_call.1
$region0: #{tpu_custom_call.1}
  #allocation0 [shape = 'u32[]', space=smem, size = 0x4, offset = 0x4, fixed_abs, tag = 'smem constant byte address 0x4 - core index']
  #allocation1 [shape = 'u32[72,128]{1,0:T(1,128)}', space=vmem, size = 0x9000, scoped, tag = 'internal scratch']
  #allocation2 [shape = 'f32[304,4]{1,0:T(8,128)}', space=vmem, size = 0x26000, scoped, tag = 'scratch operand']
  #allocation3 [shape = 'f32[304,4]{1,0:T(8,128)}', space=vmem, size = 0x26000, scoped, tag = 'scratch operand']
  #allocation4 [shape = 'f32[1]{0:T(128)S(6)}', space=smem, size = 0x200, scoped, tag = 'scoped memory for tpu_custom_call.1']
  %s0 = inlined_call_operand.<no memory space> [shape: f32[1], index: 0, kind: input, shape index: {}]
  %s1 = inlined_call_operand.vmem [shape: f32[2,256,4], index: 1, kind: input, shape index: {}]
  %s2 = inlined_call_operand.vmem [shape: f32[3,3,4,4], index: 2, kind: input, shape index: {}]
  %s3 = inlined_call_operand.vmem [shape: f32[1,4], index: 3, kind: input, shape index: {}]
  %s4 = inlined_call_operand.vmem [shape: f32[3,3,4,4], index: 4, kind: input, shape index: {}]
  %s5 = inlined_call_operand.vmem [shape: f32[1,4], index: 5, kind: input, shape index: {}]
  %s6 = inlined_call_operand.vmem [shape: f32[4,4], index: 6, kind: input, shape index: {}]
  %s7 = inlined_call_operand.vmem [shape: f32[1,4], index: 7, kind: input, shape index: {}]
  %s8 = inlined_call_operand.vmem [shape: f32[2,256,4], index: 8, kind: output, shape index: {}]
  %s9 = sld [smem:[#allocation0]]
  $region65: #{tpu_custom_call.1} parent=0
    _
  %s11 = ssub.s32 1, %s9
  %s12 = scalar_select 0, %s11, %s9
  %13 = sst [smem:[#allocation4]] %s0
  loop: start=0, step=1, limit=4
  $region2: #{tpu_custom_call.1} parent=0 // loop_pre_header
    _
  $region3: #{tpu_custom_call.1} parent=0 // loop_header
    %s15 = sphi 0, %s19
    %p16 = scmp.ge.s32.totalorder %s15, 4
    %s23 = sphi 0, %s23
    %s25 = sphi 0, %s23
    %s26 = sphi 0, %s25
    %s40 = sphi 0, %s26
    %s46 = sphi 0, %s48
    %s49 = sphi 0, %s46
    %s50 = sphi 0, %s49
    %s66 = sphi 0, %s50
    %s70 = sphi 0, %s70
    %s72 = sphi 0, %s70
    %s73 = sphi 0, %s72
    %s87 = sphi 0, %s73
    %s91 = sphi 0, %s91
    %s93 = sphi 0, %s91
    %s94 = sphi 0, %s93
    %s108 = sphi 0, %s94
    %s112 = sphi 0, %s112
    %s114 = sphi 0, %s112
    %s115 = sphi 0, %s114
    %s129 = sphi 0, %s115
    %s133 = sphi 0, %s133
    %s135 = sphi 0, %s133
    %s136 = sphi 0, %s135
    %s150 = sphi 0, %s136
    %s154 = sphi 0, %s154
    %s156 = sphi 0, %s154
    %s157 = sphi 0, %s156
    %s171 = sphi 0, %s157
    %s175 = sphi 0, %s175
    %s177 = sphi 0, %s175
    %s178 = sphi 0, %s177
    %s192 = sphi 0, %s178
    %s198 = sphi 0, %s200
    %s201 = sphi 0, %s198
    %s202 = sphi 0, %s201
    %s218 = sphi 0, %s202
  $region4: #{tpu_custom_call.1} parent=0 // loop_header_branch
    %18 = sbr.rel (%p16) target = $region8
  $region5: #{tpu_custom_call.1} parent=0 // loop_body
    %s20 = ssub.s32 %s15, 1
    %s21 = ssub.s32 %s15, 2
    %s22 = sadd.s32 %s15, 1
    %s24 = sadd.s32 %s23, 1
    %p27 = scmp.eq.s32.totalorder %s15, 1
    %p28 = scmp.ne.s32.totalorder %s23, %s25
    %p29 = scmp.eq.s32.totalorder %s15, 0
    %p30 = por %p28, %p29
    %p31 = scmp.ne.s32.totalorder %s23, %s25
    %p32 = scmp.eq.s32.totalorder %s20, 1
    %p33 = por %p31, %p32
    %p34 = scmp.ne.s32.totalorder %s25, %s26
    %p35 = scmp.eq.s32.totalorder %s20, 0
    %p36 = por %p34, %p35
    %p37 = scmp.ne.s32.totalorder %s25, %s26
    %p38 = scmp.eq.s32.totalorder %s21, 1
    %p39 = por %p37, %p38
    %p41 = scmp.ne.s32.totalorder %s26, %s40
    %p42 = scmp.eq.s32.totalorder %s21, 0
    %p43 = por %p41, %p42
    %s44 = ssub.s32 %s15, %s22
    %p45 = scmp.eq.s32.totalorder %s44, 0
    %s47 = sadd.s32 %s46, 1
    %s48 = scalar_select %p45, %s46, %s47
    %p51 = pneg %p45
    %p52 = scmp.eq.s32.totalorder %s15, 1
    %p53 = por %p51, %p52
    %p54 = scmp.ne.s32.totalorder %s46, %s49
    %p55 = scmp.eq.s32.totalorder %s15, 0
    %p56 = por %p54, %p55
    %p57 = scmp.ne.s32.totalorder %s46, %s49
    %p58 = scmp.eq.s32.totalorder %s20, 1
    %p59 = por %p57, %p58
    %p60 = scmp.ne.s32.totalorder %s49, %s50
    %p61 = scmp.eq.s32.totalorder %s20, 0
    %p62 = por %p60, %p61
    %p63 = scmp.ne.s32.totalorder %s49, %s50
    %p64 = scmp.eq.s32.totalorder %s21, 1
    %p65 = por %p63, %p64
    %p67 = scmp.ne.s32.totalorder %s50, %s66
    %p68 = scmp.eq.s32.totalorder %s21, 0
    %p69 = por %p67, %p68
    %s71 = sadd.s32 %s70, 1
    %p74 = scmp.eq.s32.totalorder %s15, 1
    %p75 = scmp.ne.s32.totalorder %s70, %s72
    %p76 = scmp.eq.s32.totalorder %s15, 0
    %p77 = por %p75, %p76
    %p78 = scmp.ne.s32.totalorder %s70, %s72
    %p79 = scmp.eq.s32.totalorder %s20, 1
    %p80 = por %p78, %p79
    %p81 = scmp.ne.s32.totalorder %s72, %s73
    %p82 = scmp.eq.s32.totalorder %s20, 0
    %p83 = por %p81, %p82
    %p84 = scmp.ne.s32.totalorder %s72, %s73
    %p85 = scmp.eq.s32.totalorder %s21, 1
    %p86 = por %p84, %p85
    %p88 = scmp.ne.s32.totalorder %s73, %s87
    %p89 = scmp.eq.s32.totalorder %s21, 0
    %p90 = por %p88, %p89
    %s92 = sadd.s32 %s91, 1
    %p95 = scmp.eq.s32.totalorder %s15, 1
    %p96 = scmp.ne.s32.totalorder %s91, %s93
    %p97 = scmp.eq.s32.totalorder %s15, 0
    %p98 = por %p96, %p97
    %p99 = scmp.ne.s32.totalorder %s91, %s93
    %p100 = scmp.eq.s32.totalorder %s20, 1
    %p101 = por %p99, %p100
    %p102 = scmp.ne.s32.totalorder %s93, %s94
    %p103 = scmp.eq.s32.totalorder %s20, 0
    %p104 = por %p102, %p103
    %p105 = scmp.ne.s32.totalorder %s93, %s94
    %p106 = scmp.eq.s32.totalorder %s21, 1
    %p107 = por %p105, %p106
    %p109 = scmp.ne.s32.totalorder %s94, %s108
    %p110 = scmp.eq.s32.totalorder %s21, 0
    %p111 = por %p109, %p110
    %s113 = sadd.s32 %s112, 1
    %p116 = scmp.eq.s32.totalorder %s15, 1
    %p117 = scmp.ne.s32.totalorder %s112, %s114
    %p118 = scmp.eq.s32.totalorder %s15, 0
    %p119 = por %p117, %p118
    %p120 = scmp.ne.s32.totalorder %s112, %s114
    %p121 = scmp.eq.s32.totalorder %s20, 1
    %p122 = por %p120, %p121
    %p123 = scmp.ne.s32.totalorder %s114, %s115
    %p124 = scmp.eq.s32.totalorder %s20, 0
    %p125 = por %p123, %p124
    %p126 = scmp.ne.s32.totalorder %s114, %s115
    %p127 = scmp.eq.s32.totalorder %s21, 1
    %p128 = por %p126, %p127
    %p130 = scmp.ne.s32.totalorder %s115, %s129
    %p131 = scmp.eq.s32.totalorder %s21, 0
    %p132 = por %p130, %p131
    %s134 = sadd.s32 %s133, 1
    %p137 = scmp.eq.s32.totalorder %s15, 1
    %p138 = scmp.ne.s32.totalorder %s133, %s135
    %p139 = scmp.eq.s32.totalorder %s15, 0
    %p140 = por %p138, %p139
    %p141 = scmp.ne.s32.totalorder %s133, %s135
    %p142 = scmp.eq.s32.totalorder %s20, 1
    %p143 = por %p141, %p142
    %p144 = scmp.ne.s32.totalorder %s135, %s136
    %p145 = scmp.eq.s32.totalorder %s20, 0
    %p146 = por %p144, %p145
    %p147 = scmp.ne.s32.totalorder %s135, %s136
    %p148 = scmp.eq.s32.totalorder %s21, 1
    %p149 = por %p147, %p148
    %p151 = scmp.ne.s32.totalorder %s136, %s150
    %p152 = scmp.eq.s32.totalorder %s21, 0
    %p153 = por %p151, %p152
    %s155 = sadd.s32 %s154, 1
    %p158 = scmp.eq.s32.totalorder %s15, 1
    %p159 = scmp.ne.s32.totalorder %s154, %s156
    %p160 = scmp.eq.s32.totalorder %s15, 0
    %p161 = por %p159, %p160
    %p162 = scmp.ne.s32.totalorder %s154, %s156
    %p163 = scmp.eq.s32.totalorder %s20, 1
    %p164 = por %p162, %p163
    %p165 = scmp.ne.s32.totalorder %s156, %s157
    %p166 = scmp.eq.s32.totalorder %s20, 0
    %p167 = por %p165, %p166
    %p168 = scmp.ne.s32.totalorder %s156, %s157
    %p169 = scmp.eq.s32.totalorder %s21, 1
    %p170 = por %p168, %p169
    %p172 = scmp.ne.s32.totalorder %s157, %s171
    %p173 = scmp.eq.s32.totalorder %s21, 0
    %p174 = por %p172, %p173
    %s176 = sadd.s32 %s175, 1
    %p179 = scmp.eq.s32.totalorder %s15, 1
    %p180 = scmp.ne.s32.totalorder %s175, %s177
    %p181 = scmp.eq.s32.totalorder %s15, 0
    %p182 = por %p180, %p181
    %p183 = scmp.ne.s32.totalorder %s175, %s177
    %p184 = scmp.eq.s32.totalorder %s20, 1
    %p185 = por %p183, %p184
    %p186 = scmp.ne.s32.totalorder %s177, %s178
    %p187 = scmp.eq.s32.totalorder %s20, 0
    %p188 = por %p186, %p187
    %p189 = scmp.ne.s32.totalorder %s177, %s178
    %p190 = scmp.eq.s32.totalorder %s21, 1
    %p191 = por %p189, %p190
    %p193 = scmp.ne.s32.totalorder %s178, %s192
    %p194 = scmp.eq.s32.totalorder %s21, 0
    %p195 = por %p193, %p194
    %s196 = ssub.s32 %s15, %s22
    %p197 = scmp.eq.s32.totalorder %s196, 0
    %s199 = sadd.s32 %s198, 1
    %s200 = scalar_select %p197, %s198, %s199
    %p203 = pneg %p197
    %p204 = scmp.eq.s32.totalorder %s15, 1
    %p205 = por %p203, %p204
    %p206 = scmp.ne.s32.totalorder %s198, %s201
    %p207 = scmp.eq.s32.totalorder %s15, 0
    %p208 = por %p206, %p207
    %p209 = scmp.ne.s32.totalorder %s198, %s201
    %p210 = scmp.eq.s32.totalorder %s20, 1
    %p211 = por %p209, %p210
    %p212 = scmp.ne.s32.totalorder %s201, %s202
    %p213 = scmp.eq.s32.totalorder %s20, 0
    %p214 = por %p212, %p213
    %p215 = scmp.ne.s32.totalorder %s201, %s202
    %p216 = scmp.eq.s32.totalorder %s21, 1
    %p217 = por %p215, %p216
    %p219 = scmp.ne.s32.totalorder %s202, %s218
    %p220 = scmp.eq.s32.totalorder %s21, 0
    %p221 = por %p219, %p220
    %p222 = scmp.le.s32.totalorder 1, %s15
    %p223 = scmp.lt.s32.totalorder %s15, 3
    %p224 = pnand %p222, %p223
    %p225 = pneg %p224
    // Predicated region
    $region9: #{tpu_custom_call.1} parent=5 // pred_check
      _
    $region10: #{tpu_custom_call.1} parent=5 // pred_check_branch
      %227 = sbr.rel (%p224) target = $region12
    $region11: #{tpu_custom_call.1} parent=5 // pred_region
      %s228 = ssub.s32 %s15, 1
      // Predicated region
      $region13: #{tpu_custom_call.1} parent=11 // pred_check
        %p229 = pneg %p36
      $region14: #{tpu_custom_call.1} parent=11 // pred_check_branch
        %231 = sbr.rel (%p229) target = $region16
      $region15: #{tpu_custom_call.1} parent=11 // pred_region
        _
      $region16: #{tpu_custom_call.1} parent=11 // pred_fallthru
        _
      // Predicated region
      $region17: #{tpu_custom_call.1} parent=11 // pred_check
        %p232 = pneg %p83
      $region18: #{tpu_custom_call.1} parent=11 // pred_check_branch
        %234 = sbr.rel (%p232) target = $region20
      $region19: #{tpu_custom_call.1} parent=11 // pred_region
        _
      $region20: #{tpu_custom_call.1} parent=11 // pred_fallthru
        _
      // Predicated region
      $region21: #{tpu_custom_call.1} parent=11 // pred_check
        %p235 = pneg %p104
      $region22: #{tpu_custom_call.1} parent=11 // pred_check_branch
        %237 = sbr.rel (%p235) target = $region24
      $region23: #{tpu_custom_call.1} parent=11 // pred_region
        _
      $region24: #{tpu_custom_call.1} parent=11 // pred_fallthru
        _
      // Predicated region
      $region25: #{tpu_custom_call.1} parent=11 // pred_check
        %p238 = pneg %p125
      $region26: #{tpu_custom_call.1} parent=11 // pred_check_branch
        %240 = sbr.rel (%p238) target = $region28
      $region27: #{tpu_custom_call.1} parent=11 // pred_region
        _
      $region28: #{tpu_custom_call.1} parent=11 // pred_fallthru
        _
      // Predicated region
      $region29: #{tpu_custom_call.1} parent=11 // pred_check
        %p241 = pneg %p146
      $region30: #{tpu_custom_call.1} parent=11 // pred_check_branch
        %243 = sbr.rel (%p241) target = $region32
      $region31: #{tpu_custom_call.1} parent=11 // pred_region
        _
      $region32: #{tpu_custom_call.1} parent=11 // pred_fallthru
        _
      // Predicated region
      $region33: #{tpu_custom_call.1} parent=11 // pred_check
        %p244 = pneg %p167
      $region34: #{tpu_custom_call.1} parent=11 // pred_check_branch
        %246 = sbr.rel (%p244) target = $region36
      $region35: #{tpu_custom_call.1} parent=11 // pred_region
        _
      $region36: #{tpu_custom_call.1} parent=11 // pred_fallthru
        _
      // Predicated region
      $region37: #{tpu_custom_call.1} parent=11 // pred_check
        %p247 = pneg %p188
      $region38: #{tpu_custom_call.1} parent=11 // pred_check_branch
        %249 = sbr.rel (%p247) target = $region40
      $region39: #{tpu_custom_call.1} parent=11 // pred_region
        _
      $region40: #{tpu_custom_call.1} parent=11 // pred_fallthru
        _
    $region12: #{tpu_custom_call.1} parent=5 // pred_fallthru
      _
    %p250 = scmp.lt.s32.totalorder %s15, 2
    // Predicated region
    $region41: #{tpu_custom_call.1} parent=5 // pred_check
      %p251 = pneg %p250
    $region42: #{tpu_custom_call.1} parent=5 // pred_check_branch
      %253 = sbr.rel (%p251) target = $region44
    $region43: #{tpu_custom_call.1} parent=5 // pred_region
      // Predicated region
      $region45: #{tpu_custom_call.1} parent=43 // pred_check
        %p254 = pneg %p56
      $region46: #{tpu_custom_call.1} parent=43 // pred_check_branch
        %256 = sbr.rel (%p254) target = $region48
      $region47: #{tpu_custom_call.1} parent=43 // pred_region
        %p257 = scmp.lt.s32.totalorder %s15, 1
        %s258 = scalar_select %p257, %s15, 1
        %s259 = smul.addr %s258, 32
        %s260 = smul.addr %s259, 8
        %s261 = scalar_lea.vmem %s1, %s260
      $region48: #{tpu_custom_call.1} parent=43 // pred_fallthru
        _
    $region44: #{tpu_custom_call.1} parent=5 // pred_fallthru
      _
    %p262 = scmp.le.s32.totalorder 1, %s15
    %p263 = scmp.lt.s32.totalorder %s15, 3
    %p264 = pnand %p262, %p263
    %p265 = pneg %p264
    // Predicated region
    $region49: #{tpu_custom_call.1} parent=5 // pred_check
      _
    $region50: #{tpu_custom_call.1} parent=5 // pred_check_branch
      %267 = sbr.rel (%p264) target = $region52
    $region51: #{tpu_custom_call.1} parent=5 // pred_region
      %s268 = ssub.s32 %s15, 1
      %p269 = pneg %p36
      %p270 = pneg %p33
      %p271 = scmp.lt.s32.totalorder %s20, 1
      %s272 = scalar_select %p271, %s20, 1
      %s273 = smul.addr %s272, 32
      %s274 = smul.addr %s273, 8
      %s275 = scalar_lea.vmem %s1, %s274
      %p276 = pneg %p62
      %p277 = pneg %p59
      %p278 = pneg %p83
      %p279 = pneg %p80
      %p280 = pneg %p104
      %p281 = pneg %p101
      %p282 = pneg %p125
      %p283 = pneg %p122
      %p284 = pneg %p146
      %p285 = pneg %p143
      %p286 = pneg %p167
      %p287 = pneg %p164
      %p288 = pneg %p188
      %p289 = pneg %p185
      %p290 = pneg %p214
      %p291 = pneg %p211
      %p292 = scmp.lt.s32.totalorder %s20, 1
      %s293 = scalar_select %p292, %s20, 1
      %s294 = smul.addr %s293, 32
      %s295 = smul.addr %s294, 8
      %s296 = scalar_lea.vmem %s8, %s295
      %p297 = scmp.lt.s32.totalorder %s20, 1
      %s298 = scalar_select %p297, %s20, 1
      %s299 = smul.addr %s298, 32
      %s300 = smul.addr %s299, 8
      %s301 = scalar_lea.vmem %s1, %s300
      %p302 = scmp.lt.s32.totalorder %s20, 1
      %s303 = scalar_select %p302, %s20, 1
      %s304 = smul.addr %s303, 32
      %s305 = smul.addr %s304, 8
      %s306 = scalar_lea.vmem %s8, %s305
      %vm307 = vcmask 31744
      %308 = vst.msk [vmem:[#allocation2] sm:$0xff] %vm307, 0.0
      %309 = vst.msk [vmem:[#allocation2 + $0x8] sm:$0xff] %vm307, 0.0
      %310 = vst.msk [vmem:[#allocation2 + $0x10] sm:$0xff] %vm307, 0.0
      %311 = vst.msk [vmem:[#allocation2 + $0x118] sm:$0xff] %vm307, 0.0
      %312 = vst.msk [vmem:[#allocation2 + $0x120] sm:$0xff] %vm307, 0.0
      %313 = vst.msk [vmem:[#allocation2 + $0x128] sm:$0xff] %vm307, 0.0
      %314 = vst.msk [vmem:[#allocation3] sm:$0xff] %vm307, 0.0
      %315 = vst.msk [vmem:[#allocation3 + $0x8] sm:$0xff] %vm307, 0.0
      %316 = vst.msk [vmem:[#allocation3 + $0x10] sm:$0xff] %vm307, 0.0
      %317 = vst.msk [vmem:[#allocation3 + $0x118] sm:$0xff] %vm307, 0.0
      %318 = vst.msk [vmem:[#allocation3 + $0x120] sm:$0xff] %vm307, 0.0
      %319 = vst.msk [vmem:[#allocation3 + $0x128] sm:$0xff] %vm307, 0.0
      %v320 = vld [vmem:[%s301] sm:$0xff]
      %v321 = vld [vmem:[%s301 + $0x8] sm:$0xff]
      %v322 = vld [vmem:[%s301 + $0x10] sm:$0xff]
      %v323 = vld [vmem:[%s301 + $0x18] sm:$0xff]
      %v324 = vld [vmem:[%s301 + $0x20] sm:$0xff]
      %v325 = vld [vmem:[%s301 + $0x28] sm:$0xff]
      %v326 = vld [vmem:[%s301 + $0x30] sm:$0xff]
      %v327 = vld [vmem:[%s301 + $0x38] sm:$0xff]
      %v328 = vld [vmem:[%s301 + $0x40] sm:$0xff]
      %v329 = vld [vmem:[%s301 + $0x48] sm:$0xff]
      %v330 = vld [vmem:[%s301 + $0x50] sm:$0xff]
      %v331 = vld [vmem:[%s301 + $0x58] sm:$0xff]
      %v332 = vld [vmem:[%s301 + $0x60] sm:$0xff]
      %v333 = vld [vmem:[%s301 + $0x68] sm:$0xff]
      %v334 = vld [vmem:[%s301 + $0x70] sm:$0xff]
      %v335 = vld [vmem:[%s301 + $0x78] sm:$0xff]
      %v336 = vld [vmem:[%s301 + $0x80] sm:$0xff]
      %v337 = vld [vmem:[%s301 + $0x88] sm:$0xff]
      %v338 = vld [vmem:[%s301 + $0x90] sm:$0xff]
      %v339 = vld [vmem:[%s301 + $0x98] sm:$0xff]
      %v340 = vld [vmem:[%s301 + $0xa0] sm:$0xff]
      %v341 = vld [vmem:[%s301 + $0xa8] sm:$0xff]
      %v342 = vld [vmem:[%s301 + $0xb0] sm:$0xff]
      %v343 = vld [vmem:[%s301 + $0xb8] sm:$0xff]
      %v344 = vld [vmem:[%s301 + $0xc0] sm:$0xff]
      %v345 = vld [vmem:[%s301 + $0xc8] sm:$0xff]
      %v346 = vld [vmem:[%s301 + $0xd0] sm:$0xff]
      %v347 = vld [vmem:[%s301 + $0xd8] sm:$0xff]
      %v348 = vld [vmem:[%s301 + $0xe0] sm:$0xff]
      %v349 = vld [vmem:[%s301 + $0xe8] sm:$0xff]
      %v350 = vld [vmem:[%s301 + $0xf0] sm:$0xff]
      %v351 = vld [vmem:[%s301 + $0xf8] sm:$0xff]
      %352 = vst.msk [vmem:[#allocation2 + $0x18] sm:$0xff] %vm307, %v320
      %353 = vst.msk [vmem:[#allocation2 + $0x20] sm:$0xff] %vm307, %v321
      %354 = vst.msk [vmem:[#allocation2 + $0x28] sm:$0xff] %vm307, %v322
      %355 = vst.msk [vmem:[#allocation2 + $0x30] sm:$0xff] %vm307, %v323
      %356 = vst.msk [vmem:[#allocation2 + $0x38] sm:$0xff] %vm307, %v324
      %357 = vst.msk [vmem:[#allocation2 + $0x40] sm:$0xff] %vm307, %v325
      %358 = vst.msk [vmem:[#allocation2 + $0x48] sm:$0xff] %vm307, %v326
      %359 = vst.msk [vmem:[#allocation2 + $0x50] sm:$0xff] %vm307, %v327
      %360 = vst.msk [vmem:[#allocation2 + $0x58] sm:$0xff] %vm307, %v328
      %361 = vst.msk [vmem:[#allocation2 + $0x60] sm:$0xff] %vm307, %v329
      %362 = vst.msk [vmem:[#allocation2 + $0x68] sm:$0xff] %vm307, %v330
      %363 = vst.msk [vmem:[#allocation2 + $0x70] sm:$0xff] %vm307, %v331
      %364 = vst.msk [vmem:[#allocation2 + $0x78] sm:$0xff] %vm307, %v332
      %365 = vst.msk [vmem:[#allocation2 + $0x80] sm:$0xff] %vm307, %v333
      %366 = vst.msk [vmem:[#allocation2 + $0x88] sm:$0xff] %vm307, %v334
      %367 = vst.msk [vmem:[#allocation2 + $0x90] sm:$0xff] %vm307, %v335
      %368 = vst.msk [vmem:[#allocation2 + $0x98] sm:$0xff] %vm307, %v336
      %369 = vst.msk [vmem:[#allocation2 + $0xa0] sm:$0xff] %vm307, %v337
      %370 = vst.msk [vmem:[#allocation2 + $0xa8] sm:$0xff] %vm307, %v338
      %371 = vst.msk [vmem:[#allocation2 + $0xb0] sm:$0xff] %vm307, %v339
      %372 = vst.msk [vmem:[#allocation2 + $0xb8] sm:$0xff] %vm307, %v340
      %373 = vst.msk [vmem:[#allocation2 + $0xc0] sm:$0xff] %vm307, %v341
      %374 = vst.msk [vmem:[#allocation2 + $0xc8] sm:$0xff] %vm307, %v342
      %375 = vst.msk [vmem:[#allocation2 + $0xd0] sm:$0xff] %vm307, %v343
      %376 = vst.msk [vmem:[#allocation2 + $0xd8] sm:$0xff] %vm307, %v344
      %377 = vst.msk [vmem:[#allocation2 + $0xe0] sm:$0xff] %vm307, %v345
      %378 = vst.msk [vmem:[#allocation2 + $0xe8] sm:$0xff] %vm307, %v346
      %379 = vst.msk [vmem:[#allocation2 + $0xf0] sm:$0xff] %vm307, %v347
      %380 = vst.msk [vmem:[#allocation2 + $0xf8] sm:$0xff] %vm307, %v348
      %381 = vst.msk [vmem:[#allocation2 + $0x100] sm:$0xff] %vm307, %v349
      %382 = vst.msk [vmem:[#allocation2 + $0x108] sm:$0xff] %vm307, %v350
      %383 = vst.msk [vmem:[#allocation2 + $0x110] sm:$0xff] %vm307, %v351
      %v384 = vlaneseq
      %v385 = vshrl.u32 %v384, 7
      %v386 = vadd.s32 %v385, 8
      %v387 = vadd.s32 %v385, 16
      %v388 = vadd.s32 %v385, 24
      %v389 = vadd.s32 %v385, 32
      %v390 = vadd.s32 %v385, 40
      %v391 = vadd.s32 %v385, 48
      %v392 = vadd.s32 %v385, 56
      %v393 = vadd.s32 %v385, 64
      %v394 = vadd.s32 %v385, 72
      %v395 = vadd.s32 %v385, 80
      %v396 = vadd.s32 %v385, 88
      %v397 = vadd.s32 %v385, 96
      %v398 = vadd.s32 %v385, 104
      %v399 = vadd.s32 %v385, 112
      %v400 = vadd.s32 %v385, 120
      %v401 = vadd.s32 %v385, 128
      %v402 = vadd.s32 %v385, 136
      %v403 = vadd.s32 %v385, 144
      %v404 = vadd.s32 %v385, 152
      %v405 = vadd.s32 %v385, 160
      %v406 = vadd.s32 %v385, 168
      %v407 = vadd.s32 %v385, 176
      %v408 = vadd.s32 %v385, 184
      %v409 = vadd.s32 %v385, 192
      %v410 = vadd.s32 %v385, 200
      %v411 = vadd.s32 %v385, 208
      %v412 = vadd.s32 %v385, 216
      %v413 = vadd.s32 %v385, 224
      %v414 = vadd.s32 %v385, 232
      %v415 = vadd.s32 %v385, 240
      %v416 = vadd.s32 %v385, 248
      %vm417 = vcmp.lt.s32.totalorder %v385, 0
      %v418 = vsub.s32 0, %v385
      %v419 = vsel %vm417, %v418, %v385
      %v420 = vshrl.u32 %v419, 4
      %v421 = vand.u32 %v419, 15
      %v422 = vsub.s32 0, %v421
      %v423 = vsel %vm417, %v422, %v421
      %vm424 = vcmp.lt.s32.totalorder %v386, 0
      %v425 = vsub.s32 0, %v386
      %v426 = vsel %vm424, %v425, %v386
      %v427 = vshrl.u32 %v426, 4
      %v428 = vand.u32 %v426, 15
      %v429 = vsub.s32 0, %v428
      %v430 = vsel %vm424, %v429, %v428
      %vm431 = vcmp.lt.s32.totalorder %v387, 0
      %v432 = vsub.s32 0, %v387
      %v433 = vsel %vm431, %v432, %v387
      %v434 = vshrl.u32 %v433, 4
      %v435 = vand.u32 %v433, 15
      %v436 = vsub.s32 0, %v435
      %v437 = vsel %vm431, %v436, %v435
      %vm438 = vcmp.lt.s32.totalorder %v388, 0
      %v439 = vsub.s32 0, %v388
      %v440 = vsel %vm438, %v439, %v388
      %v441 = vshrl.u32 %v440, 4
      %v442 = vand.u32 %v440, 15
      %v443 = vsub.s32 0, %v442
      %v444 = vsel %vm438, %v443, %v442
      %vm445 = vcmp.lt.s32.totalorder %v389, 0
      %v446 = vsub.s32 0, %v389
      %v447 = vsel %vm445, %v446, %v389
      %v448 = vshrl.u32 %v447, 4
      %v449 = vand.u32 %v447, 15
      %v450 = vsub.s32 0, %v449
      %v451 = vsel %vm445, %v450, %v449
      %vm452 = vcmp.lt.s32.totalorder %v390, 0
      %v453 = vsub.s32 0, %v390
      %v454 = vsel %vm452, %v453, %v390
      %v455 = vshrl.u32 %v454, 4
      %v456 = vand.u32 %v454, 15
      %v457 = vsub.s32 0, %v456
      %v458 = vsel %vm452, %v457, %v456
      %vm459 = vcmp.lt.s32.totalorder %v391, 0
      %v460 = vsub.s32 0, %v391
      %v461 = vsel %vm459, %v460, %v391
      %v462 = vshrl.u32 %v461, 4
      %v463 = vand.u32 %v461, 15
      %v464 = vsub.s32 0, %v463
      %v465 = vsel %vm459, %v464, %v463
      %vm466 = vcmp.lt.s32.totalorder %v392, 0
      %v467 = vsub.s32 0, %v392
      %v468 = vsel %vm466, %v467, %v392
      %v469 = vshrl.u32 %v468, 4
      %v470 = vand.u32 %v468, 15
      %v471 = vsub.s32 0, %v470
      %v472 = vsel %vm466, %v471, %v470
      %vm473 = vcmp.lt.s32.totalorder %v393, 0
      %v474 = vsub.s32 0, %v393
      %v475 = vsel %vm473, %v474, %v393
      %v476 = vshrl.u32 %v475, 4
      %v477 = vand.u32 %v475, 15
      %v478 = vsub.s32 0, %v477
      %v479 = vsel %vm473, %v478, %v477
      %vm480 = vcmp.lt.s32.totalorder %v394, 0
      %v481 = vsub.s32 0, %v394
      %v482 = vsel %vm480, %v481, %v394
      %v483 = vshrl.u32 %v482, 4
      %v484 = vand.u32 %v482, 15
      %v485 = vsub.s32 0, %v484
      %v486 = vsel %vm480, %v485, %v484
      %vm487 = vcmp.lt.s32.totalorder %v395, 0
      %v488 = vsub.s32 0, %v395
      %v489 = vsel %vm487, %v488, %v395
      %v490 = vshrl.u32 %v489, 4
      %v491 = vand.u32 %v489, 15
      %v492 = vsub.s32 0, %v491
      %v493 = vsel %vm487, %v492, %v491
      %vm494 = vcmp.lt.s32.totalorder %v396, 0
      %v495 = vsub.s32 0, %v396
      %v496 = vsel %vm494, %v495, %v396
      %v497 = vshrl.u32 %v496, 4
      %v498 = vand.u32 %v496, 15
      %v499 = vsub.s32 0, %v498
      %v500 = vsel %vm494, %v499, %v498
      %vm501 = vcmp.lt.s32.totalorder %v397, 0
      %v502 = vsub.s32 0, %v397
      %v503 = vsel %vm501, %v502, %v397
      %v504 = vshrl.u32 %v503, 4
      %v505 = vand.u32 %v503, 15
      %v506 = vsub.s32 0, %v505
      %v507 = vsel %vm501, %v506, %v505
      %vm508 = vcmp.lt.s32.totalorder %v398, 0
      %v509 = vsub.s32 0, %v398
      %v510 = vsel %vm508, %v509, %v398
      %v511 = vshrl.u32 %v510, 4
      %v512 = vand.u32 %v510, 15
      %v513 = vsub.s32 0, %v512
      %v514 = vsel %vm508, %v513, %v512
      %vm515 = vcmp.lt.s32.totalorder %v399, 0
      %v516 = vsub.s32 0, %v399
      %v517 = vsel %vm515, %v516, %v399
      %v518 = vshrl.u32 %v517, 4
      %v519 = vand.u32 %v517, 15
      %v520 = vsub.s32 0, %v519
      %v521 = vsel %vm515, %v520, %v519
      %vm522 = vcmp.lt.s32.totalorder %v400, 0
      %v523 = vsub.s32 0, %v400
      %v524 = vsel %vm522, %v523, %v400
      %v525 = vshrl.u32 %v524, 4
      %v526 = vand.u32 %v524, 15
      %v527 = vsub.s32 0, %v526
      %v528 = vsel %vm522, %v527, %v526
      %vm529 = vcmp.lt.s32.totalorder %v401, 0
      %v530 = vsub.s32 0, %v401
      %v531 = vsel %vm529, %v530, %v401
      %v532 = vshrl.u32 %v531, 4
      %v533 = vand.u32 %v531, 15
      %v534 = vsub.s32 0, %v533
      %v535 = vsel %vm529, %v534, %v533
      %vm536 = vcmp.lt.s32.totalorder %v402, 0
      %v537 = vsub.s32 0, %v402
      %v538 = vsel %vm536, %v537, %v402
      %v539 = vshrl.u32 %v538, 4
      %v540 = vand.u32 %v538, 15
      %v541 = vsub.s32 0, %v540
      %v542 = vsel %vm536, %v541, %v540
      %vm543 = vcmp.lt.s32.totalorder %v403, 0
      %v544 = vsub.s32 0, %v403
      %v545 = vsel %vm543, %v544, %v403
      %v546 = vshrl.u32 %v545, 4
      %v547 = vand.u32 %v545, 15
      %v548 = vsub.s32 0, %v547
      %v549 = vsel %vm543, %v548, %v547
      %vm550 = vcmp.lt.s32.totalorder %v404, 0
      %v551 = vsub.s32 0, %v404
      %v552 = vsel %vm550, %v551, %v404
      %v553 = vshrl.u32 %v552, 4
      %v554 = vand.u32 %v552, 15
      %v555 = vsub.s32 0, %v554
      %v556 = vsel %vm550, %v555, %v554
      %vm557 = vcmp.lt.s32.totalorder %v405, 0
      %v558 = vsub.s32 0, %v405
      %v559 = vsel %vm557, %v558, %v405
      %v560 = vshrl.u32 %v559, 4
      %v561 = vand.u32 %v559, 15
      %v562 = vsub.s32 0, %v561
      %v563 = vsel %vm557, %v562, %v561
      %vm564 = vcmp.lt.s32.totalorder %v406, 0
      %v565 = vsub.s32 0, %v406
      %v566 = vsel %vm564, %v565, %v406
      %v567 = vshrl.u32 %v566, 4
      %v568 = vand.u32 %v566, 15
      %v569 = vsub.s32 0, %v568
      %v570 = vsel %vm564, %v569, %v568
      %vm571 = vcmp.lt.s32.totalorder %v407, 0
      %v572 = vsub.s32 0, %v407
      %v573 = vsel %vm571, %v572, %v407
      %v574 = vshrl.u32 %v573, 4
      %v575 = vand.u32 %v573, 15
      %v576 = vsub.s32 0, %v575
      %v577 = vsel %vm571, %v576, %v575
      %vm578 = vcmp.lt.s32.totalorder %v408, 0
      %v579 = vsub.s32 0, %v408
      %v580 = vsel %vm578, %v579, %v408
      %v581 = vshrl.u32 %v580, 4
      %v582 = vand.u32 %v580, 15
      %v583 = vsub.s32 0, %v582
      %v584 = vsel %vm578, %v583, %v582
      %vm585 = vcmp.lt.s32.totalorder %v409, 0
      %v586 = vsub.s32 0, %v409
      %v587 = vsel %vm585, %v586, %v409
      %v588 = vshrl.u32 %v587, 4
      %v589 = vand.u32 %v587, 15
      %v590 = vsub.s32 0, %v589
      %v591 = vsel %vm585, %v590, %v589
      %vm592 = vcmp.lt.s32.totalorder %v410, 0
      %v593 = vsub.s32 0, %v410
      %v594 = vsel %vm592, %v593, %v410
      %v595 = vshrl.u32 %v594, 4
      %v596 = vand.u32 %v594, 15
      %v597 = vsub.s32 0, %v596
      %v598 = vsel %vm592, %v597, %v596
      %vm599 = vcmp.lt.s32.totalorder %v411, 0
      %v600 = vsub.s32 0, %v411
      %v601 = vsel %vm599, %v600, %v411
      %v602 = vshrl.u32 %v601, 4
      %v603 = vand.u32 %v601, 15
      %v604 = vsub.s32 0, %v603
      %v605 = vsel %vm599, %v604, %v603
      %vm606 = vcmp.lt.s32.totalorder %v412, 0
      %v607 = vsub.s32 0, %v412
      %v608 = vsel %vm606, %v607, %v412
      %v609 = vshrl.u32 %v608, 4
      %v610 = vand.u32 %v608, 15
      %v611 = vsub.s32 0, %v610
      %v612 = vsel %vm606, %v611, %v610
      %vm613 = vcmp.lt.s32.totalorder %v413, 0
      %v614 = vsub.s32 0, %v413
      %v615 = vsel %vm613, %v614, %v413
      %v616 = vshrl.u32 %v615, 4
      %v617 = vand.u32 %v615, 15
      %v618 = vsub.s32 0, %v617
      %v619 = vsel %vm613, %v618, %v617
      %vm620 = vcmp.lt.s32.totalorder %v414, 0
      %v621 = vsub.s32 0, %v414
      %v622 = vsel %vm620, %v621, %v414
      %v623 = vshrl.u32 %v622, 4
      %v624 = vand.u32 %v622, 15
      %v625 = vsub.s32 0, %v624
      %v626 = vsel %vm620, %v625, %v624
      %vm627 = vcmp.lt.s32.totalorder %v415, 0
      %v628 = vsub.s32 0, %v415
      %v629 = vsel %vm627, %v628, %v415
      %v630 = vshrl.u32 %v629, 4
      %v631 = vand.u32 %v629, 15
      %v632 = vsub.s32 0, %v631
      %v633 = vsel %vm627, %v632, %v631
      %vm634 = vcmp.lt.s32.totalorder %v416, 0
      %v635 = vsub.s32 0, %v416
      %v636 = vsel %vm634, %v635, %v416
      %v637 = vshrl.u32 %v636, 4
      %v638 = vand.u32 %v636, 15
      %v639 = vsub.s32 0, %v638
      %v640 = vsel %vm634, %v639, %v638
      %vm641 = vcmp.ne.s32.totalorder %v423, 0
      %vm642 = vcmp.ne.s32.totalorder %v430, 0
      %vm643 = vcmp.ne.s32.totalorder %v437, 0
      %vm644 = vcmp.ne.s32.totalorder %v444, 0
      %vm645 = vcmp.ne.s32.totalorder %v451, 0
      %vm646 = vcmp.ne.s32.totalorder %v458, 0
      %vm647 = vcmp.ne.s32.totalorder %v465, 0
      %vm648 = vcmp.ne.s32.totalorder %v472, 0
      %vm649 = vcmp.ne.s32.totalorder %v479, 0
      %vm650 = vcmp.ne.s32.totalorder %v486, 0
      %vm651 = vcmp.ne.s32.totalorder %v493, 0
      %vm652 = vcmp.ne.s32.totalorder %v500, 0
      %vm653 = vcmp.ne.s32.totalorder %v507, 0
      %vm654 = vcmp.ne.s32.totalorder %v514, 0
      %vm655 = vcmp.ne.s32.totalorder %v521, 0
      %vm656 = vcmp.ne.s32.totalorder %v528, 0
      %vm657 = vcmp.ne.s32.totalorder %v535, 0
      %vm658 = vcmp.ne.s32.totalorder %v542, 0
      %vm659 = vcmp.ne.s32.totalorder %v549, 0
      %vm660 = vcmp.ne.s32.totalorder %v556, 0
      %vm661 = vcmp.ne.s32.totalorder %v563, 0
      %vm662 = vcmp.ne.s32.totalorder %v570, 0
      %vm663 = vcmp.ne.s32.totalorder %v577, 0
      %vm664 = vcmp.ne.s32.totalorder %v584, 0
      %vm665 = vcmp.ne.s32.totalorder %v591, 0
      %vm666 = vcmp.ne.s32.totalorder %v598, 0
      %vm667 = vcmp.ne.s32.totalorder %v605, 0
      %vm668 = vcmp.ne.s32.totalorder %v612, 0
      %vm669 = vcmp.ne.s32.totalorder %v619, 0
      %vm670 = vcmp.ne.s32.totalorder %v626, 0
      %vm671 = vcmp.ne.s32.totalorder %v633, 0
      %vm672 = vcmp.ne.s32.totalorder %v640, 0
      %vm673 = vcmp.lt.s32.totalorder %v423, 0
      %vm674 = vcmp.lt.s32.totalorder %v430, 0
      %vm675 = vcmp.lt.s32.totalorder %v437, 0
      %vm676 = vcmp.lt.s32.totalorder %v444, 0
      %vm677 = vcmp.lt.s32.totalorder %v451, 0
      %vm678 = vcmp.lt.s32.totalorder %v458, 0
      %vm679 = vcmp.lt.s32.totalorder %v465, 0
      %vm680 = vcmp.lt.s32.totalorder %v472, 0
      %vm681 = vcmp.lt.s32.totalorder %v479, 0
      %vm682 = vcmp.lt.s32.totalorder %v486, 0
      %vm683 = vcmp.lt.s32.totalorder %v493, 0
      %vm684 = vcmp.lt.s32.totalorder %v500, 0
      %vm685 = vcmp.lt.s32.totalorder %v507, 0
      %vm686 = vcmp.lt.s32.totalorder %v514, 0
      %vm687 = vcmp.lt.s32.totalorder %v521, 0
      %vm688 = vcmp.lt.s32.totalorder %v528, 0
      %vm689 = vcmp.lt.s32.totalorder %v535, 0
      %vm690 = vcmp.lt.s32.totalorder %v542, 0
      %vm691 = vcmp.lt.s32.totalorder %v549, 0
      %vm692 = vcmp.lt.s32.totalorder %v556, 0
      %vm693 = vcmp.lt.s32.totalorder %v563, 0
      %vm694 = vcmp.lt.s32.totalorder %v570, 0
      %vm695 = vcmp.lt.s32.totalorder %v577, 0
      %vm696 = vcmp.lt.s32.totalorder %v584, 0
      %vm697 = vcmp.lt.s32.totalorder %v591, 0
      %vm698 = vcmp.lt.s32.totalorder %v598, 0
      %vm699 = vcmp.lt.s32.totalorder %v605, 0
      %vm700 = vcmp.lt.s32.totalorder %v612, 0
      %vm701 = vcmp.lt.s32.totalorder %v619, 0
      %vm702 = vcmp.lt.s32.totalorder %v626, 0
      %vm703 = vcmp.lt.s32.totalorder %v633, 0
      %vm704 = vcmp.lt.s32.totalorder %v640, 0
      %vm705 = vmand %vm673, %vm641
      %vm706 = vmand %vm674, %vm642
      %vm707 = vmand %vm675, %vm643
      %vm708 = vmand %vm676, %vm644
      %vm709 = vmand %vm677, %vm645
      %vm710 = vmand %vm678, %vm646
      %vm711 = vmand %vm679, %vm647
      %vm712 = vmand %vm680, %vm648
      %vm713 = vmand %vm681, %vm649
      %vm714 = vmand %vm682, %vm650
      %vm715 = vmand %vm683, %vm651
      %vm716 = vmand %vm684, %vm652
      %vm717 = vmand %vm685, %vm653
      %vm718 = vmand %vm686, %vm654
      %vm719 = vmand %vm687, %vm655
      %vm720 = vmand %vm688, %vm656
      %vm721 = vmand %vm689, %vm657
      %vm722 = vmand %vm690, %vm658
      %vm723 = vmand %vm691, %vm659
      %vm724 = vmand %vm692, %vm660
      %vm725 = vmand %vm693, %vm661
      %vm726 = vmand %vm694, %vm662
      %vm727 = vmand %vm695, %vm663
      %vm728 = vmand %vm696, %vm664
      %vm729 = vmand %vm697, %vm665
      %vm730 = vmand %vm698, %vm666
      %vm731 = vmand %vm699, %vm667
      %vm732 = vmand %vm700, %vm668
      %vm733 = vmand %vm701, %vm669
      %vm734 = vmand %vm702, %vm670
      %vm735 = vmand %vm703, %vm671
      %vm736 = vmand %vm704, %vm672
      %v737 = vadd.s32 %v423, 16
      %v738 = vadd.s32 %v430, 16
      %v739 = vadd.s32 %v437, 16
      %v740 = vadd.s32 %v444, 16
      %v741 = vadd.s32 %v451, 16
      %v742 = vadd.s32 %v458, 16
      %v743 = vadd.s32 %v465, 16
      %v744 = vadd.s32 %v472, 16
      %v745 = vadd.s32 %v479, 16
      %v746 = vadd.s32 %v486, 16
      %v747 = vadd.s32 %v493, 16
      %v748 = vadd.s32 %v500, 16
      %v749 = vadd.s32 %v507, 16
      %v750 = vadd.s32 %v514, 16
      %v751 = vadd.s32 %v521, 16
      %v752 = vadd.s32 %v528, 16
      %v753 = vadd.s32 %v535, 16
      %v754 = vadd.s32 %v542, 16
      %v755 = vadd.s32 %v549, 16
      %v756 = vadd.s32 %v556, 16
      %v757 = vadd.s32 %v563, 16
      %v758 = vadd.s32 %v570, 16
      %v759 = vadd.s32 %v577, 16
      %v760 = vadd.s32 %v584, 16
      %v761 = vadd.s32 %v591, 16
      %v762 = vadd.s32 %v598, 16
      %v763 = vadd.s32 %v605, 16
      %v764 = vadd.s32 %v612, 16
      %v765 = vadd.s32 %v619, 16
      %v766 = vadd.s32 %v626, 16
      %v767 = vadd.s32 %v633, 16
      %v768 = vadd.s32 %v640, 16
      %v769 = vsel %vm705, %v737, %v423
      %v770 = vsel %vm706, %v738, %v430
      %v771 = vsel %vm707, %v739, %v437
      %v772 = vsel %vm708, %v740, %v444
      %v773 = vsel %vm709, %v741, %v451
      %v774 = vsel %vm710, %v742, %v458
      %v775 = vsel %vm711, %v743, %v465
      %v776 = vsel %vm712, %v744, %v472
      %v777 = vsel %vm713, %v745, %v479
      %v778 = vsel %vm714, %v746, %v486
      %v779 = vsel %vm715, %v747, %v493
      %v780 = vsel %vm716, %v748, %v500
      %v781 = vsel %vm717, %v749, %v507
      %v782 = vsel %vm718, %v750, %v514
      %v783 = vsel %vm719, %v751, %v521
      %v784 = vsel %vm720, %v752, %v528
      %v785 = vsel %vm721, %v753, %v535
      %v786 = vsel %vm722, %v754, %v542
      %v787 = vsel %vm723, %v755, %v549
      %v788 = vsel %vm724, %v756, %v556
      %v789 = vsel %vm725, %v757, %v563
      %v790 = vsel %vm726, %v758, %v570
      %v791 = vsel %vm727, %v759, %v577
      %v792 = vsel %vm728, %v760, %v584
      %v793 = vsel %vm729, %v761, %v591
      %v794 = vsel %vm730, %v762, %v598
      %v795 = vsel %vm731, %v763, %v605
      %v796 = vsel %vm732, %v764, %v612
      %v797 = vsel %vm733, %v765, %v619
      %v798 = vsel %vm734, %v766, %v626
      %v799 = vsel %vm735, %v767, %v633
      %v800 = vsel %vm736, %v768, %v640
      %vm801 = vcmp.ne.s32.totalorder %v769, 0
      %vm802 = vcmp.ne.s32.totalorder %v770, 0
      %vm803 = vcmp.ne.s32.totalorder %v771, 0
      %vm804 = vcmp.ne.s32.totalorder %v772, 0
      %vm805 = vcmp.ne.s32.totalorder %v773, 0
      %vm806 = vcmp.ne.s32.totalorder %v774, 0
      %vm807 = vcmp.ne.s32.totalorder %v775, 0
      %vm808 = vcmp.ne.s32.totalorder %v776, 0
      %vm809 = vcmp.ne.s32.totalorder %v777, 0
      %vm810 = vcmp.ne.s32.totalorder %v778, 0
      %vm811 = vcmp.ne.s32.totalorder %v779, 0
      %vm812 = vcmp.ne.s32.totalorder %v780, 0
      %vm813 = vcmp.ne.s32.totalorder %v781, 0
      %vm814 = vcmp.ne.s32.totalorder %v782, 0
      %vm815 = vcmp.ne.s32.totalorder %v783, 0
      %vm816 = vcmp.ne.s32.totalorder %v784, 0
      %vm817 = vcmp.ne.s32.totalorder %v785, 0
      %vm818 = vcmp.ne.s32.totalorder %v786, 0
      %vm819 = vcmp.ne.s32.totalorder %v787, 0
      %vm820 = vcmp.ne.s32.totalorder %v788, 0
      %vm821 = vcmp.ne.s32.totalorder %v789, 0
      %vm822 = vcmp.ne.s32.totalorder %v790, 0
      %vm823 = vcmp.ne.s32.totalorder %v791, 0
      %vm824 = vcmp.ne.s32.totalorder %v792, 0
      %vm825 = vcmp.ne.s32.totalorder %v793, 0
      %vm826 = vcmp.ne.s32.totalorder %v794, 0
      %vm827 = vcmp.ne.s32.totalorder %v795, 0
      %vm828 = vcmp.ne.s32.totalorder %v796, 0
      %vm829 = vcmp.ne.s32.totalorder %v797, 0
      %vm830 = vcmp.ne.s32.totalorder %v798, 0
      %vm831 = vcmp.ne.s32.totalorder %v799, 0
      %vm832 = vcmp.ne.s32.totalorder %v800, 0
      %vm833 = vcmp.ne.s32.totalorder %v769, 15
      %vm834 = vcmp.ne.s32.totalorder %v770, 15
      %vm835 = vcmp.ne.s32.totalorder %v771, 15
      %vm836 = vcmp.ne.s32.totalorder %v772, 15
      %vm837 = vcmp.ne.s32.totalorder %v773, 15
      %vm838 = vcmp.ne.s32.totalorder %v774, 15
      %vm839 = vcmp.ne.s32.totalorder %v775, 15
      %vm840 = vcmp.ne.s32.totalorder %v776, 15
      %vm841 = vcmp.ne.s32.totalorder %v777, 15
      %vm842 = vcmp.ne.s32.totalorder %v778, 15
      %vm843 = vcmp.ne.s32.totalorder %v779, 15
      %vm844 = vcmp.ne.s32.totalorder %v780, 15
      %vm845 = vcmp.ne.s32.totalorder %v781, 15
      %vm846 = vcmp.ne.s32.totalorder %v782, 15
      %vm847 = vcmp.ne.s32.totalorder %v783, 15
      %vm848 = vcmp.ne.s32.totalorder %v784, 15
      %vm849 = vcmp.ne.s32.totalorder %v785, 15
      %vm850 = vcmp.ne.s32.totalorder %v786, 15
      %vm851 = vcmp.ne.s32.totalorder %v787, 15
      %vm852 = vcmp.ne.s32.totalorder %v788, 15
      %vm853 = vcmp.ne.s32.totalorder %v789, 15
      %vm854 = vcmp.ne.s32.totalorder %v790, 15
      %vm855 = vcmp.ne.s32.totalorder %v791, 15
      %vm856 = vcmp.ne.s32.totalorder %v792, 15
      %vm857 = vcmp.ne.s32.totalorder %v793, 15
      %vm858 = vcmp.ne.s32.totalorder %v794, 15
      %vm859 = vcmp.ne.s32.totalorder %v795, 15
      %vm860 = vcmp.ne.s32.totalorder %v796, 15
      %vm861 = vcmp.ne.s32.totalorder %v797, 15
      %vm862 = vcmp.ne.s32.totalorder %v798, 15
      %vm863 = vcmp.ne.s32.totalorder %v799, 15
      %vm864 = vcmp.ne.s32.totalorder %v800, 15
      %v865 = vld [vmem:[#allocation2 + $0x7] sm:$0xff]
      %v866 = vld [vmem:[#allocation2 + $0xf] sm:$0xff]
      %v867 = vld [vmem:[#allocation2 + $0x17] sm:$0xff]
      %v868 = vld [vmem:[#allocation2 + $0x1f] sm:$0xff]
      %v869 = vld [vmem:[#allocation2 + $0x27] sm:$0xff]
      %v870 = vld [vmem:[#allocation2 + $0x2f] sm:$0xff]
      %v871 = vld [vmem:[#allocation2 + $0x37] sm:$0xff]
      %v872 = vld [vmem:[#allocation2 + $0x3f] sm:$0xff]
      %v873 = vld [vmem:[#allocation2 + $0x47] sm:$0xff]
      %v874 = vld [vmem:[#allocation2 + $0x4f] sm:$0xff]
      %v875 = vld [vmem:[#allocation2 + $0x57] sm:$0xff]
      %v876 = vld [vmem:[#allocation2 + $0x5f] sm:$0xff]
      %v877 = vld [vmem:[#allocation2 + $0x67] sm:$0xff]
      %v878 = vld [vmem:[#allocation2 + $0x6f] sm:$0xff]
      %v879 = vld [vmem:[#allocation2 + $0x77] sm:$0xff]
      %v880 = vld [vmem:[#allocation2 + $0x7f] sm:$0xff]
      %v881 = vld [vmem:[#allocation2 + $0x87] sm:$0xff]
      %v882 = vld [vmem:[#allocation2 + $0x8f] sm:$0xff]
      %v883 = vld [vmem:[#allocation2 + $0x97] sm:$0xff]
      %v884 = vld [vmem:[#allocation2 + $0x9f] sm:$0xff]
      %v885 = vld [vmem:[#allocation2 + $0xa7] sm:$0xff]
      %v886 = vld [vmem:[#allocation2 + $0xaf] sm:$0xff]
      %v887 = vld [vmem:[#allocation2 + $0xb7] sm:$0xff]
      %v888 = vld [vmem:[#allocation2 + $0xbf] sm:$0xff]
      %v889 = vld [vmem:[#allocation2 + $0xc7] sm:$0xff]
      %v890 = vld [vmem:[#allocation2 + $0xcf] sm:$0xff]
      %v891 = vld [vmem:[#allocation2 + $0xd7] sm:$0xff]
      %v892 = vld [vmem:[#allocation2 + $0xdf] sm:$0xff]
      %v893 = vld [vmem:[#allocation2 + $0xe7] sm:$0xff]
      %v894 = vld [vmem:[#allocation2 + $0xef] sm:$0xff]
      %v895 = vld [vmem:[#allocation2 + $0xf7] sm:$0xff]
      %v896 = vld [vmem:[#allocation2 + $0xff] sm:$0xff]
      %v897 = vld [vmem:[%s2] sm:$0xf]
      %v898 = vld [vmem:[#allocation2 + $0x107] sm:$0xff]
      %v899 = vld [vmem:[#allocation2 + $0x10f] sm:$0xff]
      %s900 = scalar_lea.vmem %s2, 12
      %v901 = vld [vmem:[%s900] sm:$0xf]
      %v903 = vsel %vm307, %v867, 0
      %v906 = vsel %vm307, %v868, 0
      %v909 = vsel %vm307, %v869, 0
      %v912 = vsel %vm307, %v870, 0
      %v915 = vsel %vm307, %v871, 0
      %v918 = vsel %vm307, %v872, 0
      %v921 = vsel %vm307, %v873, 0
      %v924 = vsel %vm307, %v874, 0
      %v927 = vsel %vm307, %v875, 0
      %v930 = vsel %vm307, %v876, 0
      %v933 = vsel %vm307, %v877, 0
      %v936 = vsel %vm307, %v878, 0
      %v939 = vsel %vm307, %v879, 0
      %v942 = vsel %vm307, %v880, 0
      %v945 = vsel %vm307, %v881, 0
      %v948 = vsel %vm307, %v882, 0
      %v951 = vsel %vm307, %v883, 0
      %v954 = vsel %vm307, %v884, 0
      %v957 = vsel %vm307, %v885, 0
      %v960 = vsel %vm307, %v886, 0
      %v963 = vsel %vm307, %v887, 0
      %v966 = vsel %vm307, %v888, 0
      %v969 = vsel %vm307, %v889, 0
      %v972 = vsel %vm307, %v890, 0
      %v975 = vsel %vm307, %v891, 0
      %v978 = vsel %vm307, %v892, 0
      %v981 = vsel %vm307, %v893, 0
      %v984 = vsel %vm307, %v894, 0
      %v987 = vsel %vm307, %v895, 0
      %v990 = vsel %vm307, %v896, 0
      %v993 = vsel %vm307, %v898, 0
      %v996 = vsel %vm307, %v899, 0
      %vm998 = vcmask 1043456
      %v1000 = vsel %vm998, %v901, 0
      %1002 = vmatpush.msra.mxu0 0.0
      %1003 = vmatpush.msra.mxu0 0.0
      %1004 = vmatpush.msra.mxu0 0.0
      %1005 = vmatpush.msra.mxu0 0.0
      %1006 = vmatpush.msra.mxu0 0.0
      %1007 = vmatpush.msra.mxu0 0.0
      %1008 = vmatpush.msra.mxu0 0.0
      %1009 = vmatpush.msra.mxu0 0.0
      %1010 = vmatpush.msra.mxu0 0.0
      %1011 = vmatpush.msra.mxu0 0.0
      %1012 = vmatpush.msra.mxu0 0.0
      %1013 = vmatpush.msra.mxu0 0.0
      %1014 = vmatpush.msra.mxu0 0.0
      %1015 = vmatpush.msra.mxu0 0.0
      %1016 = vmatpush.msra.mxu0 0.0
      %1017 = vmatpush.msra.mxu0 %v1000
      %1018 = vmatmul.f32.gmra.mxu0 %v903
      %v1019 = vpop.f32.mrf.mxu0
      %v1020 = vadd.f32 0.0, %v1019
      %1021 = vmatmul.f32.gmra.mxu0 %v906
      %v1022 = vpop.f32.mrf.mxu0
      %v1023 = vadd.f32 0.0, %v1022
      %1024 = vmatmul.f32.gmra.mxu0 %v909
      %v1025 = vpop.f32.mrf.mxu0
      %v1026 = vadd.f32 0.0, %v1025
      %1027 = vmatmul.f32.gmra.mxu0 %v912
      %v1028 = vpop.f32.mrf.mxu0
      %v1029 = vadd.f32 0.0, %v1028
      %1030 = vmatmul.f32.gmra.mxu0 %v915
      %v1031 = vpop.f32.mrf.mxu0
      %v1032 = vadd.f32 0.0, %v1031
      %1033 = vmatmul.f32.gmra.mxu0 %v918
      %v1034 = vpop.f32.mrf.mxu0
      %v1035 = vadd.f32 0.0, %v1034
      %1036 = vmatmul.f32.gmra.mxu0 %v921
      %v1037 = vpop.f32.mrf.mxu0
      %v1038 = vadd.f32 0.0, %v1037
      %1039 = vmatmul.f32.gmra.mxu0 %v924
      %v1040 = vpop.f32.mrf.mxu0
      %v1041 = vadd.f32 0.0, %v1040
      %1042 = vmatmul.f32.gmra.mxu0 %v927
      %v1043 = vpop.f32.mrf.mxu0
      %v1044 = vadd.f32 0.0, %v1043
      %1045 = vmatmul.f32.gmra.mxu0 %v930
      %v1046 = vpop.f32.mrf.mxu0
      %v1047 = vadd.f32 0.0, %v1046
      %1048 = vmatmul.f32.gmra.mxu0 %v933
      %v1049 = vpop.f32.mrf.mxu0
      %v1050 = vadd.f32 0.0, %v1049
      %1051 = vmatmul.f32.gmra.mxu0 %v936
      %v1052 = vpop.f32.mrf.mxu0
      %v1053 = vadd.f32 0.0, %v1052
      %1054 = vmatmul.f32.gmra.mxu0 %v939
      %v1055 = vpop.f32.mrf.mxu0
      %v1056 = vadd.f32 0.0, %v1055
      %1057 = vmatmul.f32.gmra.mxu0 %v942
      %v1058 = vpop.f32.mrf.mxu0
      %v1059 = vadd.f32 0.0, %v1058
      %1060 = vmatmul.f32.gmra.mxu0 %v945
      %v1061 = vpop.f32.mrf.mxu0
      %v1062 = vadd.f32 0.0, %v1061
      %1063 = vmatmul.f32.gmra.mxu0 %v948
      %v1064 = vpop.f32.mrf.mxu0
      %v1065 = vadd.f32 0.0, %v1064
      %1066 = vmatmul.f32.gmra.mxu0 %v951
      %v1067 = vpop.f32.mrf.mxu0
      %v1068 = vadd.f32 0.0, %v1067
      %1069 = vmatmul.f32.gmra.mxu0 %v954
      %v1070 = vpop.f32.mrf.mxu0
      %v1071 = vadd.f32 0.0, %v1070
      %1072 = vmatmul.f32.gmra.mxu0 %v957
      %v1073 = vpop.f32.mrf.mxu0
      %v1074 = vadd.f32 0.0, %v1073
      %1075 = vmatmul.f32.gmra.mxu0 %v960
      %v1076 = vpop.f32.mrf.mxu0
      %v1077 = vadd.f32 0.0, %v1076
      %1078 = vmatmul.f32.gmra.mxu0 %v963
      %v1079 = vpop.f32.mrf.mxu0
      %v1080 = vadd.f32 0.0, %v1079
      %1081 = vmatmul.f32.gmra.mxu0 %v966
      %v1082 = vpop.f32.mrf.mxu0
      %v1083 = vadd.f32 0.0, %v1082
      %1084 = vmatmul.f32.gmra.mxu0 %v969
      %v1085 = vpop.f32.mrf.mxu0
      %v1086 = vadd.f32 0.0, %v1085
      %1087 = vmatmul.f32.gmra.mxu0 %v972
      %v1088 = vpop.f32.mrf.mxu0
      %v1089 = vadd.f32 0.0, %v1088
      %1090 = vmatmul.f32.gmra.mxu0 %v975
      %v1091 = vpop.f32.mrf.mxu0
      %v1092 = vadd.f32 0.0, %v1091
      %1093 = vmatmul.f32.gmra.mxu0 %v978
      %v1094 = vpop.f32.mrf.mxu0
      %v1095 = vadd.f32 0.0, %v1094
      %1096 = vmatmul.f32.gmra.mxu0 %v981
      %v1097 = vpop.f32.mrf.mxu0
      %v1098 = vadd.f32 0.0, %v1097
      %1099 = vmatmul.f32.gmra.mxu0 %v984
      %v1100 = vpop.f32.mrf.mxu0
      %v1101 = vadd.f32 0.0, %v1100
      %1102 = vmatmul.f32.gmra.mxu0 %v987
      %v1103 = vpop.f32.mrf.mxu0
      %v1104 = vadd.f32 0.0, %v1103
      %1105 = vmatmul.f32.gmra.mxu0 %v990
      %v1106 = vpop.f32.mrf.mxu0
      %v1107 = vadd.f32 0.0, %v1106
      %1108 = vmatmul.f32.gmra.mxu0 %v993
      %v1109 = vpop.f32.mrf.mxu0
      %v1110 = vadd.f32 0.0, %v1109
      %1111 = vmatmul.f32.gmra.mxu0 %v996
      %v1112 = vpop.f32.mrf.mxu0
      %v1113 = vadd.f32 0.0, %v1112
      %1114 = vdwg.mxu0
      %v1116 = vsel %vm307, %v865, 0
      %v1119 = vsel %vm307, %v866, 0
      %v1122 = vsel %vm998, %v897, 0
      %1124 = vmatpush.msra.mxu0 0.0
      %1125 = vmatpush.msra.mxu0 0.0
      %1126 = vmatpush.msra.mxu0 0.0
      %1127 = vmatpush.msra.mxu0 0.0
      %1128 = vmatpush.msra.mxu0 0.0
      %1129 = vmatpush.msra.mxu0 0.0
      %1130 = vmatpush.msra.mxu0 0.0
      %1131 = vmatpush.msra.mxu0 0.0
      %1132 = vmatpush.msra.mxu0 0.0
      %1133 = vmatpush.msra.mxu0 0.0
      %1134 = vmatpush.msra.mxu0 0.0
      %1135 = vmatpush.msra.mxu0 0.0
      %1136 = vmatpush.msra.mxu0 0.0
      %1137 = vmatpush.msra.mxu0 0.0
      %1138 = vmatpush.msra.mxu0 0.0
      %1139 = vmatpush.msra.mxu0 %v1122
      %1140 = vmatmul.f32.gmra.mxu0 %v1116
      %v1141 = vpop.f32.mrf.mxu0
      %v1142 = vadd.f32 %v1020, %v1141
      %1143 = vmatmul.f32.gmra.mxu0 %v1119
      %v1144 = vpop.f32.mrf.mxu0
      %v1145 = vadd.f32 %v1023, %v1144
      %1146 = vmatmul.f32.gmra.mxu0 %v903
      %v1147 = vpop.f32.mrf.mxu0
      %v1148 = vadd.f32 %v1026, %v1147
      %1149 = vmatmul.f32.gmra.mxu0 %v906
      %v1150 = vpop.f32.mrf.mxu0
      %v1151 = vadd.f32 %v1029, %v1150
      %1152 = vmatmul.f32.gmra.mxu0 %v909
      %v1153 = vpop.f32.mrf.mxu0
      %v1154 = vadd.f32 %v1032, %v1153
      %1155 = vmatmul.f32.gmra.mxu0 %v912
      %v1156 = vpop.f32.mrf.mxu0
      %v1157 = vadd.f32 %v1035, %v1156
      %1158 = vmatmul.f32.gmra.mxu0 %v915
      %v1159 = vpop.f32.mrf.mxu0
      %v1160 = vadd.f32 %v1038, %v1159
      %1161 = vmatmul.f32.gmra.mxu0 %v918
      %v1162 = vpop.f32.mrf.mxu0
      %v1163 = vadd.f32 %v1041, %v1162
      %1164 = vmatmul.f32.gmra.mxu0 %v921
      %v1165 = vpop.f32.mrf.mxu0
      %v1166 = vadd.f32 %v1044, %v1165
      %1167 = vmatmul.f32.gmra.mxu0 %v924
      %v1168 = vpop.f32.mrf.mxu0
      %v1169 = vadd.f32 %v1047, %v1168
      %1170 = vmatmul.f32.gmra.mxu0 %v927
      %v1171 = vpop.f32.mrf.mxu0
      %v1172 = vadd.f32 %v1050, %v1171
      %1173 = vmatmul.f32.gmra.mxu0 %v930
      %v1174 = vpop.f32.mrf.mxu0
      %v1175 = vadd.f32 %v1053, %v1174
      %1176 = vmatmul.f32.gmra.mxu0 %v933
      %v1177 = vpop.f32.mrf.mxu0
      %v1178 = vadd.f32 %v1056, %v1177
      %1179 = vmatmul.f32.gmra.mxu0 %v936
      %v1180 = vpop.f32.mrf.mxu0
      %v1181 = vadd.f32 %v1059, %v1180
      %1182 = vmatmul.f32.gmra.mxu0 %v939
      %v1183 = vpop.f32.mrf.mxu0
      %v1184 = vadd.f32 %v1062, %v1183
      %1185 = vmatmul.f32.gmra.mxu0 %v942
      %v1186 = vpop.f32.mrf.mxu0
      %v1187 = vadd.f32 %v1065, %v1186
      %1188 = vmatmul.f32.gmra.mxu0 %v945
      %v1189 = vpop.f32.mrf.mxu0
      %v1190 = vadd.f32 %v1068, %v1189
      %1191 = vmatmul.f32.gmra.mxu0 %v948
      %v1192 = vpop.f32.mrf.mxu0
      %v1193 = vadd.f32 %v1071, %v1192
      %1194 = vmatmul.f32.gmra.mxu0 %v951
      %v1195 = vpop.f32.mrf.mxu0
      %v1196 = vadd.f32 %v1074, %v1195
      %1197 = vmatmul.f32.gmra.mxu0 %v954
      %v1198 = vpop.f32.mrf.mxu0
      %v1199 = vadd.f32 %v1077, %v1198
      %1200 = vmatmul.f32.gmra.mxu0 %v957
      %v1201 = vpop.f32.mrf.mxu0
      %v1202 = vadd.f32 %v1080, %v1201
      %1203 = vmatmul.f32.gmra.mxu0 %v960
      %v1204 = vpop.f32.mrf.mxu0
      %v1205 = vadd.f32 %v1083, %v1204
      %1206 = vmatmul.f32.gmra.mxu0 %v963
      %v1207 = vpop.f32.mrf.mxu0
      %v1208 = vadd.f32 %v1086, %v1207
      %1209 = vmatmul.f32.gmra.mxu0 %v966
      %v1210 = vpop.f32.mrf.mxu0
      %v1211 = vadd.f32 %v1089, %v1210
      %1212 = vmatmul.f32.gmra.mxu0 %v969
      %v1213 = vpop.f32.mrf.mxu0
      %v1214 = vadd.f32 %v1092, %v1213
      %1215 = vmatmul.f32.gmra.mxu0 %v972
      %v1216 = vpop.f32.mrf.mxu0
      %v1217 = vadd.f32 %v1095, %v1216
      %1218 = vmatmul.f32.gmra.mxu0 %v975
      %v1219 = vpop.f32.mrf.mxu0
      %v1220 = vadd.f32 %v1098, %v1219
      %1221 = vmatmul.f32.gmra.mxu0 %v978
      %v1222 = vpop.f32.mrf.mxu0
      %v1223 = vadd.f32 %v1101, %v1222
      %1224 = vmatmul.f32.gmra.mxu0 %v981
      %v1225 = vpop.f32.mrf.mxu0
      %v1226 = vadd.f32 %v1104, %v1225
      %1227 = vmatmul.f32.gmra.mxu0 %v984
      %v1228 = vpop.f32.mrf.mxu0
      %v1229 = vadd.f32 %v1107, %v1228
      %1230 = vmatmul.f32.gmra.mxu0 %v987
      %v1231 = vpop.f32.mrf.mxu0
      %v1232 = vadd.f32 %v1110, %v1231
      %1233 = vmatmul.f32.gmra.mxu0 %v990
      %v1234 = vpop.f32.mrf.mxu0
      %v1235 = vadd.f32 %v1113, %v1234
      %1236 = vdwg.mxu0
      %v1237 = vld [vmem:[#allocation2 + $0x27] sm:$0xff]
      %v1238 = vld [vmem:[#allocation2 + $0x2f] sm:$0xff]
      %v1239 = vld [vmem:[#allocation2 + $0x37] sm:$0xff]
      %v1240 = vld [vmem:[#allocation2 + $0x3f] sm:$0xff]
      %v1241 = vld [vmem:[#allocation2 + $0x47] sm:$0xff]
      %v1242 = vld [vmem:[#allocation2 + $0x4f] sm:$0xff]
      %v1243 = vld [vmem:[#allocation2 + $0x57] sm:$0xff]
      %v1244 = vld [vmem:[#allocation2 + $0x5f] sm:$0xff]
      %v1245 = vld [vmem:[#allocation2 + $0x67] sm:$0xff]
      %v1246 = vld [vmem:[#allocation2 + $0x6f] sm:$0xff]
      %v1247 = vld [vmem:[#allocation2 + $0x77] sm:$0xff]
      %v1248 = vld [vmem:[#allocation2 + $0x7f] sm:$0xff]
      %v1249 = vld [vmem:[#allocation2 + $0x87] sm:$0xff]
      %v1250 = vld [vmem:[#allocation2 + $0x8f] sm:$0xff]
      %v1251 = vld [vmem:[#allocation2 + $0x97] sm:$0xff]
      %v1252 = vld [vmem:[#allocation2 + $0x9f] sm:$0xff]
      %v1253 = vld [vmem:[#allocation2 + $0xa7] sm:$0xff]
      %v1254 = vld [vmem:[#allocation2 + $0xaf] sm:$0xff]
      %v1255 = vld [vmem:[#allocation2 + $0xb7] sm:$0xff]
      %v1256 = vld [vmem:[#allocation2 + $0xbf] sm:$0xff]
      %v1257 = vld [vmem:[#allocation2 + $0xc7] sm:$0xff]
      %v1258 = vld [vmem:[#allocation2 + $0xcf] sm:$0xff]
      %v1259 = vld [vmem:[#allocation2 + $0xd7] sm:$0xff]
      %v1260 = vld [vmem:[#allocation2 + $0xdf] sm:$0xff]
      %v1261 = vld [vmem:[#allocation2 + $0xe7] sm:$0xff]
      %v1262 = vld [vmem:[#allocation2 + $0xef] sm:$0xff]
      %v1263 = vld [vmem:[#allocation2 + $0xf7] sm:$0xff]
      %v1264 = vld [vmem:[#allocation2 + $0xff] sm:$0xff]
      %v1265 = vld [vmem:[#allocation2 + $0x107] sm:$0xff]
      %v1266 = vld [vmem:[#allocation2 + $0x10f] sm:$0xff]
      %v1267 = vld [vmem:[#allocation2 + $0x117] sm:$0xff]
      %v1268 = vld [vmem:[#allocation2 + $0x11f] sm:$0xff]
      %s1269 = scalar_lea.vmem %s2, 24
      %v1270 = vld [vmem:[%s1269] sm:$0xf]
      %v1272 = vsel %vm307, %v1237, 0
      %v1275 = vsel %vm307, %v1238, 0
      %v1278 = vsel %vm307, %v1239, 0
      %v1281 = vsel %vm307, %v1240, 0
      %v1284 = vsel %vm307, %v1241, 0
      %v1287 = vsel %vm307, %v1242, 0
      %v1290 = vsel %vm307, %v1243, 0
      %v1293 = vsel %vm307, %v1244, 0
      %v1296 = vsel %vm307, %v1245, 0
      %v1299 = vsel %vm307, %v1246, 0
      %v1302 = vsel %vm307, %v1247, 0
      %v1305 = vsel %vm307, %v1248, 0
      %v1308 = vsel %vm307, %v1249, 0
      %v1311 = vsel %vm307, %v1250, 0
      %v1314 = vsel %vm307, %v1251, 0
      %v1317 = vsel %vm307, %v1252, 0
      %v1320 = vsel %vm307, %v1253, 0
      %v1323 = vsel %vm307, %v1254, 0
      %v1326 = vsel %vm307, %v1255, 0
      %v1329 = vsel %vm307, %v1256, 0
      %v1332 = vsel %vm307, %v1257, 0
      %v1335 = vsel %vm307, %v1258, 0
      %v1338 = vsel %vm307, %v1259, 0
      %v1341 = vsel %vm307, %v1260, 0
      %v1344 = vsel %vm307, %v1261, 0
      %v1347 = vsel %vm307, %v1262, 0
      %v1350 = vsel %vm307, %v1263, 0
      %v1353 = vsel %vm307, %v1264, 0
      %v1356 = vsel %vm307, %v1265, 0
      %v1359 = vsel %vm307, %v1266, 0
      %v1362 = vsel %vm307, %v1267, 0
      %v1365 = vsel %vm307, %v1268, 0
      %v1368 = vsel %vm998, %v1270, 0
      %1370 = vmatpush.msra.mxu0 0.0
      %1371 = vmatpush.msra.mxu0 0.0
      %1372 = vmatpush.msra.mxu0 0.0
      %1373 = vmatpush.msra.mxu0 0.0
      %1374 = vmatpush.msra.mxu0 0.0
      %1375 = vmatpush.msra.mxu0 0.0
      %1376 = vmatpush.msra.mxu0 0.0
      %1377 = vmatpush.msra.mxu0 0.0
      %1378 = vmatpush.msra.mxu0 0.0
      %1379 = vmatpush.msra.mxu0 0.0
      %1380 = vmatpush.msra.mxu0 0.0
      %1381 = vmatpush.msra.mxu0 0.0
      %1382 = vmatpush.msra.mxu0 0.0
      %1383 = vmatpush.msra.mxu0 0.0
      %1384 = vmatpush.msra.mxu0 0.0
      %1385 = vmatpush.msra.mxu0 %v1368
      %1386 = vmatmul.f32.gmra.mxu0 %v1272
      %v1387 = vpop.f32.mrf.mxu0
      %v1388 = vadd.f32 0.0, %v1387
      %1389 = vmatmul.f32.gmra.mxu0 %v1275
      %v1390 = vpop.f32.mrf.mxu0
      %v1391 = vadd.f32 0.0, %v1390
      %1392 = vmatmul.f32.gmra.mxu0 %v1278
      %v1393 = vpop.f32.mrf.mxu0
      %v1394 = vadd.f32 0.0, %v1393
      %1395 = vmatmul.f32.gmra.mxu0 %v1281
      %v1396 = vpop.f32.mrf.mxu0
      %v1397 = vadd.f32 0.0, %v1396
      %1398 = vmatmul.f32.gmra.mxu0 %v1284
      %v1399 = vpop.f32.mrf.mxu0
      %v1400 = vadd.f32 0.0, %v1399
      %1401 = vmatmul.f32.gmra.mxu0 %v1287
      %v1402 = vpop.f32.mrf.mxu0
      %v1403 = vadd.f32 0.0, %v1402
      %1404 = vmatmul.f32.gmra.mxu0 %v1290
      %v1405 = vpop.f32.mrf.mxu0
      %v1406 = vadd.f32 0.0, %v1405
      %1407 = vmatmul.f32.gmra.mxu0 %v1293
      %v1408 = vpop.f32.mrf.mxu0
      %v1409 = vadd.f32 0.0, %v1408
      %1410 = vmatmul.f32.gmra.mxu0 %v1296
      %v1411 = vpop.f32.mrf.mxu0
      %v1412 = vadd.f32 0.0, %v1411
      %1413 = vmatmul.f32.gmra.mxu0 %v1299
      %v1414 = vpop.f32.mrf.mxu0
      %v1415 = vadd.f32 0.0, %v1414
      %1416 = vmatmul.f32.gmra.mxu0 %v1302
      %v1417 = vpop.f32.mrf.mxu0
      %v1418 = vadd.f32 0.0, %v1417
      %1419 = vmatmul.f32.gmra.mxu0 %v1305
      %v1420 = vpop.f32.mrf.mxu0
      %v1421 = vadd.f32 0.0, %v1420
      %1422 = vmatmul.f32.gmra.mxu0 %v1308
      %v1423 = vpop.f32.mrf.mxu0
      %v1424 = vadd.f32 0.0, %v1423
      %1425 = vmatmul.f32.gmra.mxu0 %v1311
      %v1426 = vpop.f32.mrf.mxu0
      %v1427 = vadd.f32 0.0, %v1426
      %1428 = vmatmul.f32.gmra.mxu0 %v1314
      %v1429 = vpop.f32.mrf.mxu0
      %v1430 = vadd.f32 0.0, %v1429
      %1431 = vmatmul.f32.gmra.mxu0 %v1317
      %v1432 = vpop.f32.mrf.mxu0
      %v1433 = vadd.f32 0.0, %v1432
      %1434 = vmatmul.f32.gmra.mxu0 %v1320
      %v1435 = vpop.f32.mrf.mxu0
      %v1436 = vadd.f32 0.0, %v1435
      %1437 = vmatmul.f32.gmra.mxu0 %v1323
      %v1438 = vpop.f32.mrf.mxu0
      %v1439 = vadd.f32 0.0, %v1438
      %1440 = vmatmul.f32.gmra.mxu0 %v1326
      %v1441 = vpop.f32.mrf.mxu0
      %v1442 = vadd.f32 0.0, %v1441
      %1443 = vmatmul.f32.gmra.mxu0 %v1329
      %v1444 = vpop.f32.mrf.mxu0
      %v1445 = vadd.f32 0.0, %v1444
      %1446 = vmatmul.f32.gmra.mxu0 %v1332
      %v1447 = vpop.f32.mrf.mxu0
      %v1448 = vadd.f32 0.0, %v1447
      %1449 = vmatmul.f32.gmra.mxu0 %v1335
      %v1450 = vpop.f32.mrf.mxu0
      %v1451 = vadd.f32 0.0, %v1450
      %1452 = vmatmul.f32.gmra.mxu0 %v1338
      %v1453 = vpop.f32.mrf.mxu0
      %v1454 = vadd.f32 0.0, %v1453
      %1455 = vmatmul.f32.gmra.mxu0 %v1341
      %v1456 = vpop.f32.mrf.mxu0
      %v1457 = vadd.f32 0.0, %v1456
      %1458 = vmatmul.f32.gmra.mxu0 %v1344
      %v1459 = vpop.f32.mrf.mxu0
      %v1460 = vadd.f32 0.0, %v1459
      %1461 = vmatmul.f32.gmra.mxu0 %v1347
      %v1462 = vpop.f32.mrf.mxu0
      %v1463 = vadd.f32 0.0, %v1462
      %1464 = vmatmul.f32.gmra.mxu0 %v1350
      %v1465 = vpop.f32.mrf.mxu0
      %v1466 = vadd.f32 0.0, %v1465
      %1467 = vmatmul.f32.gmra.mxu0 %v1353
      %v1468 = vpop.f32.mrf.mxu0
      %v1469 = vadd.f32 0.0, %v1468
      %1470 = vmatmul.f32.gmra.mxu0 %v1356
      %v1471 = vpop.f32.mrf.mxu0
      %v1472 = vadd.f32 0.0, %v1471
      %1473 = vmatmul.f32.gmra.mxu0 %v1359
      %v1474 = vpop.f32.mrf.mxu0
      %v1475 = vadd.f32 0.0, %v1474
      %1476 = vmatmul.f32.gmra.mxu0 %v1362
      %v1477 = vpop.f32.mrf.mxu0
      %v1478 = vadd.f32 0.0, %v1477
      %1479 = vmatmul.f32.gmra.mxu0 %v1365
      %v1480 = vpop.f32.mrf.mxu0
      %v1481 = vadd.f32 0.0, %v1480
      %1482 = vdwg.mxu0
      %v1483 = vadd.f32 %v1142, %v1388
      %v1484 = vadd.f32 %v1145, %v1391
      %v1485 = vadd.f32 %v1148, %v1394
      %v1486 = vadd.f32 %v1151, %v1397
      %v1487 = vadd.f32 %v1154, %v1400
      %v1488 = vadd.f32 %v1157, %v1403
      %v1489 = vadd.f32 %v1160, %v1406
      %v1490 = vadd.f32 %v1163, %v1409
      %v1491 = vadd.f32 %v1166, %v1412
      %v1492 = vadd.f32 %v1169, %v1415
      %v1493 = vadd.f32 %v1172, %v1418
      %v1494 = vadd.f32 %v1175, %v1421
      %v1495 = vadd.f32 %v1178, %v1424
      %v1496 = vadd.f32 %v1181, %v1427
      %v1497 = vadd.f32 %v1184, %v1430
      %v1498 = vadd.f32 %v1187, %v1433
      %v1499 = vadd.f32 %v1190, %v1436
      %v1500 = vadd.f32 %v1193, %v1439
      %v1501 = vadd.f32 %v1196, %v1442
      %v1502 = vadd.f32 %v1199, %v1445
      %v1503 = vadd.f32 %v1202, %v1448
      %v1504 = vadd.f32 %v1205, %v1451
      %v1505 = vadd.f32 %v1208, %v1454
      %v1506 = vadd.f32 %v1211, %v1457
      %v1507 = vadd.f32 %v1214, %v1460
      %v1508 = vadd.f32 %v1217, %v1463
      %v1509 = vadd.f32 %v1220, %v1466
      %v1510 = vadd.f32 %v1223, %v1469
      %v1511 = vadd.f32 %v1226, %v1472
      %v1512 = vadd.f32 %v1229, %v1475
      %v1513 = vadd.f32 %v1232, %v1478
      %v1514 = vadd.f32 %v1235, %v1481
      %v1515 = vsel %vm801, 1, 0
      %v1516 = vsel %vm802, 1, 0
      %v1517 = vsel %vm803, 1, 0
      %v1518 = vsel %vm804, 1, 0
      %v1519 = vsel %vm805, 1, 0
      %v1520 = vsel %vm806, 1, 0
      %v1521 = vsel %vm807, 1, 0
      %v1522 = vsel %vm808, 1, 0
      %v1523 = vsel %vm809, 1, 0
      %v1524 = vsel %vm810, 1, 0
      %v1525 = vsel %vm811, 1, 0
      %v1526 = vsel %vm812, 1, 0
      %v1527 = vsel %vm813, 1, 0
      %v1528 = vsel %vm814, 1, 0
      %v1529 = vsel %vm815, 1, 0
      %v1530 = vsel %vm816, 1, 0
      %v1531 = vsel %vm817, 1, 0
      %v1532 = vsel %vm818, 1, 0
      %v1533 = vsel %vm819, 1, 0
      %v1534 = vsel %vm820, 1, 0
      %v1535 = vsel %vm821, 1, 0
      %v1536 = vsel %vm822, 1, 0
      %v1537 = vsel %vm823, 1, 0
      %v1538 = vsel %vm824, 1, 0
      %v1539 = vsel %vm825, 1, 0
      %v1540 = vsel %vm826, 1, 0
      %v1541 = vsel %vm827, 1, 0
      %v1542 = vsel %vm828, 1, 0
      %v1543 = vsel %vm829, 1, 0
      %v1544 = vsel %vm830, 1, 0
      %v1545 = vsel %vm831, 1, 0
      %v1546 = vsel %vm832, 1, 0
      %vm1547 = vcmp.eq.s32.totalorder %v1515, 1
      %vm1548 = vcmp.eq.s32.totalorder %v1516, 1
      %vm1549 = vcmp.eq.s32.totalorder %v1517, 1
      %vm1550 = vcmp.eq.s32.totalorder %v1518, 1
      %vm1551 = vcmp.eq.s32.totalorder %v1519, 1
      %vm1552 = vcmp.eq.s32.totalorder %v1520, 1
      %vm1553 = vcmp.eq.s32.totalorder %v1521, 1
      %vm1554 = vcmp.eq.s32.totalorder %v1522, 1
      %vm1555 = vcmp.eq.s32.totalorder %v1523, 1
      %vm1556 = vcmp.eq.s32.totalorder %v1524, 1
      %vm1557 = vcmp.eq.s32.totalorder %v1525, 1
      %vm1558 = vcmp.eq.s32.totalorder %v1526, 1
      %vm1559 = vcmp.eq.s32.totalorder %v1527, 1
      %vm1560 = vcmp.eq.s32.totalorder %v1528, 1
      %vm1561 = vcmp.eq.s32.totalorder %v1529, 1
      %vm1562 = vcmp.eq.s32.totalorder %v1530, 1
      %vm1563 = vcmp.eq.s32.totalorder %v1531, 1
      %vm1564 = vcmp.eq.s32.totalorder %v1532, 1
      %vm1565 = vcmp.eq.s32.totalorder %v1533, 1
      %vm1566 = vcmp.eq.s32.totalorder %v1534, 1
      %vm1567 = vcmp.eq.s32.totalorder %v1535, 1
      %vm1568 = vcmp.eq.s32.totalorder %v1536, 1
      %vm1569 = vcmp.eq.s32.totalorder %v1537, 1
      %vm1570 = vcmp.eq.s32.totalorder %v1538, 1
      %vm1571 = vcmp.eq.s32.totalorder %v1539, 1
      %vm1572 = vcmp.eq.s32.totalorder %v1540, 1
      %vm1573 = vcmp.eq.s32.totalorder %v1541, 1
      %vm1574 = vcmp.eq.s32.totalorder %v1542, 1
      %vm1575 = vcmp.eq.s32.totalorder %v1543, 1
      %vm1576 = vcmp.eq.s32.totalorder %v1544, 1
      %vm1577 = vcmp.eq.s32.totalorder %v1545, 1
      %vm1578 = vcmp.eq.s32.totalorder %v1546, 1
      %v1579 = vsel %vm1547, %v1483, 0.0
      %v1580 = vsel %vm1548, %v1484, 0.0
      %v1581 = vsel %vm1549, %v1485, 0.0
      %v1582 = vsel %vm1550, %v1486, 0.0
      %v1583 = vsel %vm1551, %v1487, 0.0
      %v1584 = vsel %vm1552, %v1488, 0.0
      %v1585 = vsel %vm1553, %v1489, 0.0
      %v1586 = vsel %vm1554, %v1490, 0.0
      %v1587 = vsel %vm1555, %v1491, 0.0
      %v1588 = vsel %vm1556, %v1492, 0.0
      %v1589 = vsel %vm1557, %v1493, 0.0
      %v1590 = vsel %vm1558, %v1494, 0.0
      %v1591 = vsel %vm1559, %v1495, 0.0
      %v1592 = vsel %vm1560, %v1496, 0.0
      %v1593 = vsel %vm1561, %v1497, 0.0
      %v1594 = vsel %vm1562, %v1498, 0.0
      %v1595 = vsel %vm1563, %v1499, 0.0
      %v1596 = vsel %vm1564, %v1500, 0.0
      %v1597 = vsel %vm1565, %v1501, 0.0
      %v1598 = vsel %vm1566, %v1502, 0.0
      %v1599 = vsel %vm1567, %v1503, 0.0
      %v1600 = vsel %vm1568, %v1504, 0.0
      %v1601 = vsel %vm1569, %v1505, 0.0
      %v1602 = vsel %vm1570, %v1506, 0.0
      %v1603 = vsel %vm1571, %v1507, 0.0
      %v1604 = vsel %vm1572, %v1508, 0.0
      %v1605 = vsel %vm1573, %v1509, 0.0
      %v1606 = vsel %vm1574, %v1510, 0.0
      %v1607 = vsel %vm1575, %v1511, 0.0
      %v1608 = vsel %vm1576, %v1512, 0.0
      %v1609 = vsel %vm1577, %v1513, 0.0
      %v1610 = vsel %vm1578, %v1514, 0.0
      %v1611 = vld [vmem:[#allocation2 + $0x8] sm:$0xff]
      %v1612 = vld [vmem:[#allocation2 + $0x10] sm:$0xff]
      %v1613 = vld [vmem:[#allocation2 + $0x18] sm:$0xff]
      %v1614 = vld [vmem:[#allocation2 + $0x20] sm:$0xff]
      %v1615 = vld [vmem:[#allocation2 + $0x28] sm:$0xff]
      %v1616 = vld [vmem:[#allocation2 + $0x30] sm:$0xff]
      %v1617 = vld [vmem:[#allocation2 + $0x38] sm:$0xff]
      %v1618 = vld [vmem:[#allocation2 + $0x40] sm:$0xff]
      %v1619 = vld [vmem:[#allocation2 + $0x48] sm:$0xff]
      %v1620 = vld [vmem:[#allocation2 + $0x50] sm:$0xff]
      %v1621 = vld [vmem:[#allocation2 + $0x58] sm:$0xff]
      %v1622 = vld [vmem:[#allocation2 + $0x60] sm:$0xff]
      %v1623 = vld [vmem:[#allocation2 + $0x68] sm:$0xff]
      %v1624 = vld [vmem:[#allocation2 + $0x70] sm:$0xff]
      %v1625 = vld [vmem:[#allocation2 + $0x78] sm:$0xff]
      %v1626 = vld [vmem:[#allocation2 + $0x80] sm:$0xff]
      %v1627 = vld [vmem:[#allocation2 + $0x88] sm:$0xff]
      %v1628 = vld [vmem:[#allocation2 + $0x90] sm:$0xff]
      %v1629 = vld [vmem:[#allocation2 + $0x98] sm:$0xff]
      %v1630 = vld [vmem:[#allocation2 + $0xa0] sm:$0xff]
      %v1631 = vld [vmem:[#allocation2 + $0xa8] sm:$0xff]
      %v1632 = vld [vmem:[#allocation2 + $0xb0] sm:$0xff]
      %v1633 = vld [vmem:[#allocation2 + $0xb8] sm:$0xff]
      %v1634 = vld [vmem:[#allocation2 + $0xc0] sm:$0xff]
      %v1635 = vld [vmem:[#allocation2 + $0xc8] sm:$0xff]
      %v1636 = vld [vmem:[#allocation2 + $0xd0] sm:$0xff]
      %v1637 = vld [vmem:[#allocation2 + $0xd8] sm:$0xff]
      %v1638 = vld [vmem:[#allocation2 + $0xe0] sm:$0xff]
      %v1639 = vld [vmem:[#allocation2 + $0xe8] sm:$0xff]
      %v1640 = vld [vmem:[#allocation2 + $0xf0] sm:$0xff]
      %v1641 = vld [vmem:[#allocation2 + $0xf8] sm:$0xff]
      %v1642 = vld [vmem:[#allocation2 + $0x100] sm:$0xff]
      %s1643 = scalar_lea.vmem %s2, 4
      %v1644 = vld [vmem:[%s1643] sm:$0xf]
      %v1645 = vld [vmem:[#allocation2 + $0x108] sm:$0xff]
      %v1646 = vld [vmem:[#allocation2 + $0x110] sm:$0xff]
      %s1647 = scalar_lea.vmem %s2, 16
      %v1648 = vld [vmem:[%s1647] sm:$0xf]
      %v1650 = vsel %vm307, %v1613, 0
      %v1653 = vsel %vm307, %v1614, 0
      %v1656 = vsel %vm307, %v1615, 0
      %v1659 = vsel %vm307, %v1616, 0
      %v1662 = vsel %vm307, %v1617, 0
      %v1665 = vsel %vm307, %v1618, 0
      %v1668 = vsel %vm307, %v1619, 0
      %v1671 = vsel %vm307, %v1620, 0
      %v1674 = vsel %vm307, %v1621, 0
      %v1677 = vsel %vm307, %v1622, 0
      %v1680 = vsel %vm307, %v1623, 0
      %v1683 = vsel %vm307, %v1624, 0
      %v1686 = vsel %vm307, %v1625, 0
      %v1689 = vsel %vm307, %v1626, 0
      %v1692 = vsel %vm307, %v1627, 0
      %v1695 = vsel %vm307, %v1628, 0
      %v1698 = vsel %vm307, %v1629, 0
      %v1701 = vsel %vm307, %v1630, 0
      %v1704 = vsel %vm307, %v1631, 0
      %v1707 = vsel %vm307, %v1632, 0
      %v1710 = vsel %vm307, %v1633, 0
      %v1713 = vsel %vm307, %v1634, 0
      %v1716 = vsel %vm307, %v1635, 0
      %v1719 = vsel %vm307, %v1636, 0
      %v1722 = vsel %vm307, %v1637, 0
      %v1725 = vsel %vm307, %v1638, 0
      %v1728 = vsel %vm307, %v1639, 0
      %v1731 = vsel %vm307, %v1640, 0
      %v1734 = vsel %vm307, %v1641, 0
      %v1737 = vsel %vm307, %v1642, 0
      %v1740 = vsel %vm307, %v1645, 0
      %v1743 = vsel %vm307, %v1646, 0
      %v1746 = vsel %vm998, %v1648, 0
      %1748 = vmatpush.msra.mxu0 0.0
      %1749 = vmatpush.msra.mxu0 0.0
      %1750 = vmatpush.msra.mxu0 0.0
      %1751 = vmatpush.msra.mxu0 0.0
      %1752 = vmatpush.msra.mxu0 0.0
      %1753 = vmatpush.msra.mxu0 0.0
      %1754 = vmatpush.msra.mxu0 0.0
      %1755 = vmatpush.msra.mxu0 0.0
      %1756 = vmatpush.msra.mxu0 0.0
      %1757 = vmatpush.msra.mxu0 0.0
      %1758 = vmatpush.msra.mxu0 0.0
      %1759 = vmatpush.msra.mxu0 0.0
      %1760 = vmatpush.msra.mxu0 0.0
      %1761 = vmatpush.msra.mxu0 0.0
      %1762 = vmatpush.msra.mxu0 0.0
      %1763 = vmatpush.msra.mxu0 %v1746
      %1764 = vmatmul.f32.gmra.mxu0 %v1650
      %v1765 = vpop.f32.mrf.mxu0
      %v1766 = vadd.f32 0.0, %v1765
      %1767 = vmatmul.f32.gmra.mxu0 %v1653
      %v1768 = vpop.f32.mrf.mxu0
      %v1769 = vadd.f32 0.0, %v1768
      %1770 = vmatmul.f32.gmra.mxu0 %v1656
      %v1771 = vpop.f32.mrf.mxu0
      %v1772 = vadd.f32 0.0, %v1771
      %1773 = vmatmul.f32.gmra.mxu0 %v1659
      %v1774 = vpop.f32.mrf.mxu0
      %v1775 = vadd.f32 0.0, %v1774
      %1776 = vmatmul.f32.gmra.mxu0 %v1662
      %v1777 = vpop.f32.mrf.mxu0
      %v1778 = vadd.f32 0.0, %v1777
      %1779 = vmatmul.f32.gmra.mxu0 %v1665
      %v1780 = vpop.f32.mrf.mxu0
      %v1781 = vadd.f32 0.0, %v1780
      %1782 = vmatmul.f32.gmra.mxu0 %v1668
      %v1783 = vpop.f32.mrf.mxu0
      %v1784 = vadd.f32 0.0, %v1783
      %1785 = vmatmul.f32.gmra.mxu0 %v1671
      %v1786 = vpop.f32.mrf.mxu0
      %v1787 = vadd.f32 0.0, %v1786
      %1788 = vmatmul.f32.gmra.mxu0 %v1674
      %v1789 = vpop.f32.mrf.mxu0
      %v1790 = vadd.f32 0.0, %v1789
      %1791 = vmatmul.f32.gmra.mxu0 %v1677
      %v1792 = vpop.f32.mrf.mxu0
      %v1793 = vadd.f32 0.0, %v1792
      %1794 = vmatmul.f32.gmra.mxu0 %v1680
      %v1795 = vpop.f32.mrf.mxu0
      %v1796 = vadd.f32 0.0, %v1795
      %1797 = vmatmul.f32.gmra.mxu0 %v1683
      %v1798 = vpop.f32.mrf.mxu0
      %v1799 = vadd.f32 0.0, %v1798
      %1800 = vmatmul.f32.gmra.mxu0 %v1686
      %v1801 = vpop.f32.mrf.mxu0
      %v1802 = vadd.f32 0.0, %v1801
      %1803 = vmatmul.f32.gmra.mxu0 %v1689
      %v1804 = vpop.f32.mrf.mxu0
      %v1805 = vadd.f32 0.0, %v1804
      %1806 = vmatmul.f32.gmra.mxu0 %v1692
      %v1807 = vpop.f32.mrf.mxu0
      %v1808 = vadd.f32 0.0, %v1807
      %1809 = vmatmul.f32.gmra.mxu0 %v1695
      %v1810 = vpop.f32.mrf.mxu0
      %v1811 = vadd.f32 0.0, %v1810
      %1812 = vmatmul.f32.gmra.mxu0 %v1698
      %v1813 = vpop.f32.mrf.mxu0
      %v1814 = vadd.f32 0.0, %v1813
      %1815 = vmatmul.f32.gmra.mxu0 %v1701
      %v1816 = vpop.f32.mrf.mxu0
      %v1817 = vadd.f32 0.0, %v1816
      %1818 = vmatmul.f32.gmra.mxu0 %v1704
      %v1819 = vpop.f32.mrf.mxu0
      %v1820 = vadd.f32 0.0, %v1819
      %1821 = vmatmul.f32.gmra.mxu0 %v1707
      %v1822 = vpop.f32.mrf.mxu0
      %v1823 = vadd.f32 0.0, %v1822
      %1824 = vmatmul.f32.gmra.mxu0 %v1710
      %v1825 = vpop.f32.mrf.mxu0
      %v1826 = vadd.f32 0.0, %v1825
      %1827 = vmatmul.f32.gmra.mxu0 %v1713
      %v1828 = vpop.f32.mrf.mxu0
      %v1829 = vadd.f32 0.0, %v1828
      %1830 = vmatmul.f32.gmra.mxu0 %v1716
      %v1831 = vpop.f32.mrf.mxu0
      %v1832 = vadd.f32 0.0, %v1831
      %1833 = vmatmul.f32.gmra.mxu0 %v1719
      %v1834 = vpop.f32.mrf.mxu0
      %v1835 = vadd.f32 0.0, %v1834
      %1836 = vmatmul.f32.gmra.mxu0 %v1722
      %v1837 = vpop.f32.mrf.mxu0
      %v1838 = vadd.f32 0.0, %v1837
      %1839 = vmatmul.f32.gmra.mxu0 %v1725
      %v1840 = vpop.f32.mrf.mxu0
      %v1841 = vadd.f32 0.0, %v1840
      %1842 = vmatmul.f32.gmra.mxu0 %v1728
      %v1843 = vpop.f32.mrf.mxu0
      %v1844 = vadd.f32 0.0, %v1843
      %1845 = vmatmul.f32.gmra.mxu0 %v1731
      %v1846 = vpop.f32.mrf.mxu0
      %v1847 = vadd.f32 0.0, %v1846
      %1848 = vmatmul.f32.gmra.mxu0 %v1734
      %v1849 = vpop.f32.mrf.mxu0
      %v1850 = vadd.f32 0.0, %v1849
      %1851 = vmatmul.f32.gmra.mxu0 %v1737
      %v1852 = vpop.f32.mrf.mxu0
      %v1853 = vadd.f32 0.0, %v1852
      %1854 = vmatmul.f32.gmra.mxu0 %v1740
      %v1855 = vpop.f32.mrf.mxu0
      %v1856 = vadd.f32 0.0, %v1855
      %1857 = vmatmul.f32.gmra.mxu0 %v1743
      %v1858 = vpop.f32.mrf.mxu0
      %v1859 = vadd.f32 0.0, %v1858
      %1860 = vdwg.mxu0
      %v1862 = vsel %vm307, %v1611, 0
      %v1865 = vsel %vm307, %v1612, 0
      %v1868 = vsel %vm998, %v1644, 0
      %1870 = vmatpush.msra.mxu0 0.0
      %1871 = vmatpush.msra.mxu0 0.0
      %1872 = vmatpush.msra.mxu0 0.0
      %1873 = vmatpush.msra.mxu0 0.0
      %1874 = vmatpush.msra.mxu0 0.0
      %1875 = vmatpush.msra.mxu0 0.0
      %1876 = vmatpush.msra.mxu0 0.0
      %1877 = vmatpush.msra.mxu0 0.0
      %1878 = vmatpush.msra.mxu0 0.0
      %1879 = vmatpush.msra.mxu0 0.0
      %1880 = vmatpush.msra.mxu0 0.0
      %1881 = vmatpush.msra.mxu0 0.0
      %1882 = vmatpush.msra.mxu0 0.0
      %1883 = vmatpush.msra.mxu0 0.0
      %1884 = vmatpush.msra.mxu0 0.0
      %1885 = vmatpush.msra.mxu0 %v1868
      %1886 = vmatmul.f32.gmra.mxu0 %v1862
      %v1887 = vpop.f32.mrf.mxu0
      %v1888 = vadd.f32 %v1766, %v1887
      %1889 = vmatmul.f32.gmra.mxu0 %v1865
      %v1890 = vpop.f32.mrf.mxu0
      %v1891 = vadd.f32 %v1769, %v1890
      %1892 = vmatmul.f32.gmra.mxu0 %v1650
      %v1893 = vpop.f32.mrf.mxu0
      %v1894 = vadd.f32 %v1772, %v1893
      %1895 = vmatmul.f32.gmra.mxu0 %v1653
      %v1896 = vpop.f32.mrf.mxu0
      %v1897 = vadd.f32 %v1775, %v1896
      %1898 = vmatmul.f32.gmra.mxu0 %v1656
      %v1899 = vpop.f32.mrf.mxu0
      %v1900 = vadd.f32 %v1778, %v1899
      %1901 = vmatmul.f32.gmra.mxu0 %v1659
      %v1902 = vpop.f32.mrf.mxu0
      %v1903 = vadd.f32 %v1781, %v1902
      %1904 = vmatmul.f32.gmra.mxu0 %v1662
      %v1905 = vpop.f32.mrf.mxu0
      %v1906 = vadd.f32 %v1784, %v1905
      %1907 = vmatmul.f32.gmra.mxu0 %v1665
      %v1908 = vpop.f32.mrf.mxu0
      %v1909 = vadd.f32 %v1787, %v1908
      %1910 = vmatmul.f32.gmra.mxu0 %v1668
      %v1911 = vpop.f32.mrf.mxu0
      %v1912 = vadd.f32 %v1790, %v1911
      %1913 = vmatmul.f32.gmra.mxu0 %v1671
      %v1914 = vpop.f32.mrf.mxu0
      %v1915 = vadd.f32 %v1793, %v1914
      %1916 = vmatmul.f32.gmra.mxu0 %v1674
      %v1917 = vpop.f32.mrf.mxu0
      %v1918 = vadd.f32 %v1796, %v1917
      %1919 = vmatmul.f32.gmra.mxu0 %v1677
      %v1920 = vpop.f32.mrf.mxu0
      %v1921 = vadd.f32 %v1799, %v1920
      %1922 = vmatmul.f32.gmra.mxu0 %v1680
      %v1923 = vpop.f32.mrf.mxu0
      %v1924 = vadd.f32 %v1802, %v1923
      %1925 = vmatmul.f32.gmra.mxu0 %v1683
      %v1926 = vpop.f32.mrf.mxu0
      %v1927 = vadd.f32 %v1805, %v1926
      %1928 = vmatmul.f32.gmra.mxu0 %v1686
      %v1929 = vpop.f32.mrf.mxu0
      %v1930 = vadd.f32 %v1808, %v1929
      %1931 = vmatmul.f32.gmra.mxu0 %v1689
      %v1932 = vpop.f32.mrf.mxu0
      %v1933 = vadd.f32 %v1811, %v1932
      %1934 = vmatmul.f32.gmra.mxu0 %v1692
      %v1935 = vpop.f32.mrf.mxu0
      %v1936 = vadd.f32 %v1814, %v1935
      %1937 = vmatmul.f32.gmra.mxu0 %v1695
      %v1938 = vpop.f32.mrf.mxu0
      %v1939 = vadd.f32 %v1817, %v1938
      %1940 = vmatmul.f32.gmra.mxu0 %v1698
      %v1941 = vpop.f32.mrf.mxu0
      %v1942 = vadd.f32 %v1820, %v1941
      %1943 = vmatmul.f32.gmra.mxu0 %v1701
      %v1944 = vpop.f32.mrf.mxu0
      %v1945 = vadd.f32 %v1823, %v1944
      %1946 = vmatmul.f32.gmra.mxu0 %v1704
      %v1947 = vpop.f32.mrf.mxu0
      %v1948 = vadd.f32 %v1826, %v1947
      %1949 = vmatmul.f32.gmra.mxu0 %v1707
      %v1950 = vpop.f32.mrf.mxu0
      %v1951 = vadd.f32 %v1829, %v1950
      %1952 = vmatmul.f32.gmra.mxu0 %v1710
      %v1953 = vpop.f32.mrf.mxu0
      %v1954 = vadd.f32 %v1832, %v1953
      %1955 = vmatmul.f32.gmra.mxu0 %v1713
      %v1956 = vpop.f32.mrf.mxu0
      %v1957 = vadd.f32 %v1835, %v1956
      %1958 = vmatmul.f32.gmra.mxu0 %v1716
      %v1959 = vpop.f32.mrf.mxu0
      %v1960 = vadd.f32 %v1838, %v1959
      %1961 = vmatmul.f32.gmra.mxu0 %v1719
      %v1962 = vpop.f32.mrf.mxu0
      %v1963 = vadd.f32 %v1841, %v1962
      %1964 = vmatmul.f32.gmra.mxu0 %v1722
      %v1965 = vpop.f32.mrf.mxu0
      %v1966 = vadd.f32 %v1844, %v1965
      %1967 = vmatmul.f32.gmra.mxu0 %v1725
      %v1968 = vpop.f32.mrf.mxu0
      %v1969 = vadd.f32 %v1847, %v1968
      %1970 = vmatmul.f32.gmra.mxu0 %v1728
      %v1971 = vpop.f32.mrf.mxu0
      %v1972 = vadd.f32 %v1850, %v1971
      %1973 = vmatmul.f32.gmra.mxu0 %v1731
      %v1974 = vpop.f32.mrf.mxu0
      %v1975 = vadd.f32 %v1853, %v1974
      %1976 = vmatmul.f32.gmra.mxu0 %v1734
      %v1977 = vpop.f32.mrf.mxu0
      %v1978 = vadd.f32 %v1856, %v1977
      %1979 = vmatmul.f32.gmra.mxu0 %v1737
      %v1980 = vpop.f32.mrf.mxu0
      %v1981 = vadd.f32 %v1859, %v1980
      %1982 = vdwg.mxu0
      %v1983 = vld [vmem:[#allocation2 + $0x28] sm:$0xff]
      %v1984 = vld [vmem:[#allocation2 + $0x30] sm:$0xff]
      %v1985 = vld [vmem:[#allocation2 + $0x38] sm:$0xff]
      %v1986 = vld [vmem:[#allocation2 + $0x40] sm:$0xff]
      %v1987 = vld [vmem:[#allocation2 + $0x48] sm:$0xff]
      %v1988 = vld [vmem:[#allocation2 + $0x50] sm:$0xff]
      %v1989 = vld [vmem:[#allocation2 + $0x58] sm:$0xff]
      %v1990 = vld [vmem:[#allocation2 + $0x60] sm:$0xff]
      %v1991 = vld [vmem:[#allocation2 + $0x68] sm:$0xff]
      %v1992 = vld [vmem:[#allocation2 + $0x70] sm:$0xff]
      %v1993 = vld [vmem:[#allocation2 + $0x78] sm:$0xff]
      %v1994 = vld [vmem:[#allocation2 + $0x80] sm:$0xff]
      %v1995 = vld [vmem:[#allocation2 + $0x88] sm:$0xff]
      %v1996 = vld [vmem:[#allocation2 + $0x90] sm:$0xff]
      %v1997 = vld [vmem:[#allocation2 + $0x98] sm:$0xff]
      %v1998 = vld [vmem:[#allocation2 + $0xa0] sm:$0xff]
      %v1999 = vld [vmem:[#allocation2 + $0xa8] sm:$0xff]
      %v2000 = vld [vmem:[#allocation2 + $0xb0] sm:$0xff]
      %v2001 = vld [vmem:[#allocation2 + $0xb8] sm:$0xff]
      %v2002 = vld [vmem:[#allocation2 + $0xc0] sm:$0xff]
      %v2003 = vld [vmem:[#allocation2 + $0xc8] sm:$0xff]
      %v2004 = vld [vmem:[#allocation2 + $0xd0] sm:$0xff]
      %v2005 = vld [vmem:[#allocation2 + $0xd8] sm:$0xff]
      %v2006 = vld [vmem:[#allocation2 + $0xe0] sm:$0xff]
      %v2007 = vld [vmem:[#allocation2 + $0xe8] sm:$0xff]
      %v2008 = vld [vmem:[#allocation2 + $0xf0] sm:$0xff]
      %v2009 = vld [vmem:[#allocation2 + $0xf8] sm:$0xff]
      %v2010 = vld [vmem:[#allocation2 + $0x100] sm:$0xff]
      %v2011 = vld [vmem:[#allocation2 + $0x108] sm:$0xff]
      %v2012 = vld [vmem:[#allocation2 + $0x110] sm:$0xff]
      %v2013 = vld [vmem:[#allocation2 + $0x118] sm:$0xff]
      %v2014 = vld [vmem:[#allocation2 + $0x120] sm:$0xff]
      %s2015 = scalar_lea.vmem %s2, 28
      %v2016 = vld [vmem:[%s2015] sm:$0xf]
      %v2018 = vsel %vm307, %v1983, 0
      %v2021 = vsel %vm307, %v1984, 0
      %v2024 = vsel %vm307, %v1985, 0
      %v2027 = vsel %vm307, %v1986, 0
      %v2030 = vsel %vm307, %v1987, 0
      %v2033 = vsel %vm307, %v1988, 0
      %v2036 = vsel %vm307, %v1989, 0
      %v2039 = vsel %vm307, %v1990, 0
      %v2042 = vsel %vm307, %v1991, 0
      %v2045 = vsel %vm307, %v1992, 0
      %v2048 = vsel %vm307, %v1993, 0
      %v2051 = vsel %vm307, %v1994, 0
      %v2054 = vsel %vm307, %v1995, 0
      %v2057 = vsel %vm307, %v1996, 0
      %v2060 = vsel %vm307, %v1997, 0
      %v2063 = vsel %vm307, %v1998, 0
      %v2066 = vsel %vm307, %v1999, 0
      %v2069 = vsel %vm307, %v2000, 0
      %v2072 = vsel %vm307, %v2001, 0
      %v2075 = vsel %vm307, %v2002, 0
      %v2078 = vsel %vm307, %v2003, 0
      %v2081 = vsel %vm307, %v2004, 0
      %v2084 = vsel %vm307, %v2005, 0
      %v2087 = vsel %vm307, %v2006, 0
      %v2090 = vsel %vm307, %v2007, 0
      %v2093 = vsel %vm307, %v2008, 0
      %v2096 = vsel %vm307, %v2009, 0
      %v2099 = vsel %vm307, %v2010, 0
      %v2102 = vsel %vm307, %v2011, 0
      %v2105 = vsel %vm307, %v2012, 0
      %v2108 = vsel %vm307, %v2013, 0
      %v2111 = vsel %vm307, %v2014, 0
      %v2114 = vsel %vm998, %v2016, 0
      %2116 = vmatpush.msra.mxu0 0.0
      %2117 = vmatpush.msra.mxu0 0.0
      %2118 = vmatpush.msra.mxu0 0.0
      %2119 = vmatpush.msra.mxu0 0.0
      %2120 = vmatpush.msra.mxu0 0.0
      %2121 = vmatpush.msra.mxu0 0.0
      %2122 = vmatpush.msra.mxu0 0.0
      %2123 = vmatpush.msra.mxu0 0.0
      %2124 = vmatpush.msra.mxu0 0.0
      %2125 = vmatpush.msra.mxu0 0.0
      %2126 = vmatpush.msra.mxu0 0.0
      %2127 = vmatpush.msra.mxu0 0.0
      %2128 = vmatpush.msra.mxu0 0.0
      %2129 = vmatpush.msra.mxu0 0.0
      %2130 = vmatpush.msra.mxu0 0.0
      %2131 = vmatpush.msra.mxu0 %v2114
      %2132 = vmatmul.f32.gmra.mxu0 %v2018
      %v2133 = vpop.f32.mrf.mxu0
      %v2134 = vadd.f32 0.0, %v2133
      %2135 = vmatmul.f32.gmra.mxu0 %v2021
      %v2136 = vpop.f32.mrf.mxu0
      %v2137 = vadd.f32 0.0, %v2136
      %2138 = vmatmul.f32.gmra.mxu0 %v2024
      %v2139 = vpop.f32.mrf.mxu0
      %v2140 = vadd.f32 0.0, %v2139
      %2141 = vmatmul.f32.gmra.mxu0 %v2027
      %v2142 = vpop.f32.mrf.mxu0
      %v2143 = vadd.f32 0.0, %v2142
      %2144 = vmatmul.f32.gmra.mxu0 %v2030
      %v2145 = vpop.f32.mrf.mxu0
      %v2146 = vadd.f32 0.0, %v2145
      %2147 = vmatmul.f32.gmra.mxu0 %v2033
      %v2148 = vpop.f32.mrf.mxu0
      %v2149 = vadd.f32 0.0, %v2148
      %2150 = vmatmul.f32.gmra.mxu0 %v2036
      %v2151 = vpop.f32.mrf.mxu0
      %v2152 = vadd.f32 0.0, %v2151
      %2153 = vmatmul.f32.gmra.mxu0 %v2039
      %v2154 = vpop.f32.mrf.mxu0
      %v2155 = vadd.f32 0.0, %v2154
      %2156 = vmatmul.f32.gmra.mxu0 %v2042
      %v2157 = vpop.f32.mrf.mxu0
      %v2158 = vadd.f32 0.0, %v2157
      %2159 = vmatmul.f32.gmra.mxu0 %v2045
      %v2160 = vpop.f32.mrf.mxu0
      %v2161 = vadd.f32 0.0, %v2160
      %2162 = vmatmul.f32.gmra.mxu0 %v2048
      %v2163 = vpop.f32.mrf.mxu0
      %v2164 = vadd.f32 0.0, %v2163
      %2165 = vmatmul.f32.gmra.mxu0 %v2051
      %v2166 = vpop.f32.mrf.mxu0
      %v2167 = vadd.f32 0.0, %v2166
      %2168 = vmatmul.f32.gmra.mxu0 %v2054
      %v2169 = vpop.f32.mrf.mxu0
      %v2170 = vadd.f32 0.0, %v2169
      %2171 = vmatmul.f32.gmra.mxu0 %v2057
      %v2172 = vpop.f32.mrf.mxu0
      %v2173 = vadd.f32 0.0, %v2172
      %2174 = vmatmul.f32.gmra.mxu0 %v2060
      %v2175 = vpop.f32.mrf.mxu0
      %v2176 = vadd.f32 0.0, %v2175
      %2177 = vmatmul.f32.gmra.mxu0 %v2063
      %v2178 = vpop.f32.mrf.mxu0
      %v2179 = vadd.f32 0.0, %v2178
      %2180 = vmatmul.f32.gmra.mxu0 %v2066
      %v2181 = vpop.f32.mrf.mxu0
      %v2182 = vadd.f32 0.0, %v2181
      %2183 = vmatmul.f32.gmra.mxu0 %v2069
      %v2184 = vpop.f32.mrf.mxu0
      %v2185 = vadd.f32 0.0, %v2184
      %2186 = vmatmul.f32.gmra.mxu0 %v2072
      %v2187 = vpop.f32.mrf.mxu0
      %v2188 = vadd.f32 0.0, %v2187
      %2189 = vmatmul.f32.gmra.mxu0 %v2075
      %v2190 = vpop.f32.mrf.mxu0
      %v2191 = vadd.f32 0.0, %v2190
      %2192 = vmatmul.f32.gmra.mxu0 %v2078
      %v2193 = vpop.f32.mrf.mxu0
      %v2194 = vadd.f32 0.0, %v2193
      %2195 = vmatmul.f32.gmra.mxu0 %v2081
      %v2196 = vpop.f32.mrf.mxu0
      %v2197 = vadd.f32 0.0, %v2196
      %2198 = vmatmul.f32.gmra.mxu0 %v2084
      %v2199 = vpop.f32.mrf.mxu0
      %v2200 = vadd.f32 0.0, %v2199
      %2201 = vmatmul.f32.gmra.mxu0 %v2087
      %v2202 = vpop.f32.mrf.mxu0
      %v2203 = vadd.f32 0.0, %v2202
      %2204 = vmatmul.f32.gmra.mxu0 %v2090
      %v2205 = vpop.f32.mrf.mxu0
      %v2206 = vadd.f32 0.0, %v2205
      %2207 = vmatmul.f32.gmra.mxu0 %v2093
      %v2208 = vpop.f32.mrf.mxu0
      %v2209 = vadd.f32 0.0, %v2208
      %2210 = vmatmul.f32.gmra.mxu0 %v2096
      %v2211 = vpop.f32.mrf.mxu0
      %v2212 = vadd.f32 0.0, %v2211
      %2213 = vmatmul.f32.gmra.mxu0 %v2099
      %v2214 = vpop.f32.mrf.mxu0
      %v2215 = vadd.f32 0.0, %v2214
      %2216 = vmatmul.f32.gmra.mxu0 %v2102
      %v2217 = vpop.f32.mrf.mxu0
      %v2218 = vadd.f32 0.0, %v2217
      %2219 = vmatmul.f32.gmra.mxu0 %v2105
      %v2220 = vpop.f32.mrf.mxu0
      %v2221 = vadd.f32 0.0, %v2220
      %2222 = vmatmul.f32.gmra.mxu0 %v2108
      %v2223 = vpop.f32.mrf.mxu0
      %v2224 = vadd.f32 0.0, %v2223
      %2225 = vmatmul.f32.gmra.mxu0 %v2111
      %v2226 = vpop.f32.mrf.mxu0
      %v2227 = vadd.f32 0.0, %v2226
      %2228 = vdwg.mxu0
      %v2229 = vadd.f32 %v1888, %v2134
      %v2230 = vadd.f32 %v1891, %v2137
      %v2231 = vadd.f32 %v1894, %v2140
      %v2232 = vadd.f32 %v1897, %v2143
      %v2233 = vadd.f32 %v1900, %v2146
      %v2234 = vadd.f32 %v1903, %v2149
      %v2235 = vadd.f32 %v1906, %v2152
      %v2236 = vadd.f32 %v1909, %v2155
      %v2237 = vadd.f32 %v1912, %v2158
      %v2238 = vadd.f32 %v1915, %v2161
      %v2239 = vadd.f32 %v1918, %v2164
      %v2240 = vadd.f32 %v1921, %v2167
      %v2241 = vadd.f32 %v1924, %v2170
      %v2242 = vadd.f32 %v1927, %v2173
      %v2243 = vadd.f32 %v1930, %v2176
      %v2244 = vadd.f32 %v1933, %v2179
      %v2245 = vadd.f32 %v1936, %v2182
      %v2246 = vadd.f32 %v1939, %v2185
      %v2247 = vadd.f32 %v1942, %v2188
      %v2248 = vadd.f32 %v1945, %v2191
      %v2249 = vadd.f32 %v1948, %v2194
      %v2250 = vadd.f32 %v1951, %v2197
      %v2251 = vadd.f32 %v1954, %v2200
      %v2252 = vadd.f32 %v1957, %v2203
      %v2253 = vadd.f32 %v1960, %v2206
      %v2254 = vadd.f32 %v1963, %v2209
      %v2255 = vadd.f32 %v1966, %v2212
      %v2256 = vadd.f32 %v1969, %v2215
      %v2257 = vadd.f32 %v1972, %v2218
      %v2258 = vadd.f32 %v1975, %v2221
      %v2259 = vadd.f32 %v1978, %v2224
      %v2260 = vadd.f32 %v1981, %v2227
      %v2261 = vadd.f32 %v1579, %v2229
      %v2262 = vadd.f32 %v1580, %v2230
      %v2263 = vadd.f32 %v1581, %v2231
      %v2264 = vadd.f32 %v1582, %v2232
      %v2265 = vadd.f32 %v1583, %v2233
      %v2266 = vadd.f32 %v1584, %v2234
      %v2267 = vadd.f32 %v1585, %v2235
      %v2268 = vadd.f32 %v1586, %v2236
      %v2269 = vadd.f32 %v1587, %v2237
      %v2270 = vadd.f32 %v1588, %v2238
      %v2271 = vadd.f32 %v1589, %v2239
      %v2272 = vadd.f32 %v1590, %v2240
      %v2273 = vadd.f32 %v1591, %v2241
      %v2274 = vadd.f32 %v1592, %v2242
      %v2275 = vadd.f32 %v1593, %v2243
      %v2276 = vadd.f32 %v1594, %v2244
      %v2277 = vadd.f32 %v1595, %v2245
      %v2278 = vadd.f32 %v1596, %v2246
      %v2279 = vadd.f32 %v1597, %v2247
      %v2280 = vadd.f32 %v1598, %v2248
      %v2281 = vadd.f32 %v1599, %v2249
      %v2282 = vadd.f32 %v1600, %v2250
      %v2283 = vadd.f32 %v1601, %v2251
      %v2284 = vadd.f32 %v1602, %v2252
      %v2285 = vadd.f32 %v1603, %v2253
      %v2286 = vadd.f32 %v1604, %v2254
      %v2287 = vadd.f32 %v1605, %v2255
      %v2288 = vadd.f32 %v1606, %v2256
      %v2289 = vadd.f32 %v1607, %v2257
      %v2290 = vadd.f32 %v1608, %v2258
      %v2291 = vadd.f32 %v1609, %v2259
      %v2292 = vadd.f32 %v1610, %v2260
      %v2293 = vld [vmem:[#allocation2 + $0x9] sm:$0xff]
      %v2294 = vld [vmem:[#allocation2 + $0x11] sm:$0xff]
      %v2295 = vld [vmem:[#allocation2 + $0x19] sm:$0xff]
      %v2296 = vld [vmem:[#allocation2 + $0x21] sm:$0xff]
      %v2297 = vld [vmem:[#allocation2 + $0x29] sm:$0xff]
      %v2298 = vld [vmem:[#allocation2 + $0x31] sm:$0xff]
      %v2299 = vld [vmem:[#allocation2 + $0x39] sm:$0xff]
      %v2300 = vld [vmem:[#allocation2 + $0x41] sm:$0xff]
      %v2301 = vld [vmem:[#allocation2 + $0x49] sm:$0xff]
      %v2302 = vld [vmem:[#allocation2 + $0x51] sm:$0xff]
      %v2303 = vld [vmem:[#allocation2 + $0x59] sm:$0xff]
      %v2304 = vld [vmem:[#allocation2 + $0x61] sm:$0xff]
      %v2305 = vld [vmem:[#allocation2 + $0x69] sm:$0xff]
      %v2306 = vld [vmem:[#allocation2 + $0x71] sm:$0xff]
      %v2307 = vld [vmem:[#allocation2 + $0x79] sm:$0xff]
      %v2308 = vld [vmem:[#allocation2 + $0x81] sm:$0xff]
      %v2309 = vld [vmem:[#allocation2 + $0x89] sm:$0xff]
      %v2310 = vld [vmem:[#allocation2 + $0x91] sm:$0xff]
      %v2311 = vld [vmem:[#allocation2 + $0x99] sm:$0xff]
      %v2312 = vld [vmem:[#allocation2 + $0xa1] sm:$0xff]
      %v2313 = vld [vmem:[#allocation2 + $0xa9] sm:$0xff]
      %v2314 = vld [vmem:[#allocation2 + $0xb1] sm:$0xff]
      %v2315 = vld [vmem:[#allocation2 + $0xb9] sm:$0xff]
      %v2316 = vld [vmem:[#allocation2 + $0xc1] sm:$0xff]
      %v2317 = vld [vmem:[#allocation2 + $0xc9] sm:$0xff]
      %v2318 = vld [vmem:[#allocation2 + $0xd1] sm:$0xff]
      %v2319 = vld [vmem:[#allocation2 + $0xd9] sm:$0xff]
      %v2320 = vld [vmem:[#allocation2 + $0xe1] sm:$0xff]
      %v2321 = vld [vmem:[#allocation2 + $0xe9] sm:$0xff]
      %v2322 = vld [vmem:[#allocation2 + $0xf1] sm:$0xff]
      %v2323 = vld [vmem:[#allocation2 + $0xf9] sm:$0xff]
      %v2324 = vld [vmem:[#allocation2 + $0x101] sm:$0xff]
      %s2325 = scalar_lea.vmem %s2, 8
      %v2326 = vld [vmem:[%s2325] sm:$0xf]
      %v2327 = vld [vmem:[#allocation2 + $0x109] sm:$0xff]
      %v2328 = vld [vmem:[#allocation2 + $0x111] sm:$0xff]
      %s2329 = scalar_lea.vmem %s2, 20
      %v2330 = vld [vmem:[%s2329] sm:$0xf]
      %v2332 = vsel %vm307, %v2295, 0
      %v2335 = vsel %vm307, %v2296, 0
      %v2338 = vsel %vm307, %v2297, 0
      %v2341 = vsel %vm307, %v2298, 0
      %v2344 = vsel %vm307, %v2299, 0
      %v2347 = vsel %vm307, %v2300, 0
      %v2350 = vsel %vm307, %v2301, 0
      %v2353 = vsel %vm307, %v2302, 0
      %v2356 = vsel %vm307, %v2303, 0
      %v2359 = vsel %vm307, %v2304, 0
      %v2362 = vsel %vm307, %v2305, 0
      %v2365 = vsel %vm307, %v2306, 0
      %v2368 = vsel %vm307, %v2307, 0
      %v2371 = vsel %vm307, %v2308, 0
      %v2374 = vsel %vm307, %v2309, 0
      %v2377 = vsel %vm307, %v2310, 0
      %v2380 = vsel %vm307, %v2311, 0
      %v2383 = vsel %vm307, %v2312, 0
      %v2386 = vsel %vm307, %v2313, 0
      %v2389 = vsel %vm307, %v2314, 0
      %v2392 = vsel %vm307, %v2315, 0
      %v2395 = vsel %vm307, %v2316, 0
      %v2398 = vsel %vm307, %v2317, 0
      %v2401 = vsel %vm307, %v2318, 0
      %v2404 = vsel %vm307, %v2319, 0
      %v2407 = vsel %vm307, %v2320, 0
      %v2410 = vsel %vm307, %v2321, 0
      %v2413 = vsel %vm307, %v2322, 0
      %v2416 = vsel %vm307, %v2323, 0
      %v2419 = vsel %vm307, %v2324, 0
      %v2422 = vsel %vm307, %v2327, 0
      %v2425 = vsel %vm307, %v2328, 0
      %v2428 = vsel %vm998, %v2330, 0
      %2430 = vmatpush.msra.mxu0 0.0
      %2431 = vmatpush.msra.mxu0 0.0
      %2432 = vmatpush.msra.mxu0 0.0
      %2433 = vmatpush.msra.mxu0 0.0
      %2434 = vmatpush.msra.mxu0 0.0
      %2435 = vmatpush.msra.mxu0 0.0
      %2436 = vmatpush.msra.mxu0 0.0
      %2437 = vmatpush.msra.mxu0 0.0
      %2438 = vmatpush.msra.mxu0 0.0
      %2439 = vmatpush.msra.mxu0 0.0
      %2440 = vmatpush.msra.mxu0 0.0
      %2441 = vmatpush.msra.mxu0 0.0
      %2442 = vmatpush.msra.mxu0 0.0
      %2443 = vmatpush.msra.mxu0 0.0
      %2444 = vmatpush.msra.mxu0 0.0
      %2445 = vmatpush.msra.mxu0 %v2428
      %2446 = vmatmul.f32.gmra.mxu0 %v2332
      %v2447 = vpop.f32.mrf.mxu0
      %v2448 = vadd.f32 0.0, %v2447
      %2449 = vmatmul.f32.gmra.mxu0 %v2335
      %v2450 = vpop.f32.mrf.mxu0
      %v2451 = vadd.f32 0.0, %v2450
      %2452 = vmatmul.f32.gmra.mxu0 %v2338
      %v2453 = vpop.f32.mrf.mxu0
      %v2454 = vadd.f32 0.0, %v2453
      %2455 = vmatmul.f32.gmra.mxu0 %v2341
      %v2456 = vpop.f32.mrf.mxu0
      %v2457 = vadd.f32 0.0, %v2456
      %2458 = vmatmul.f32.gmra.mxu0 %v2344
      %v2459 = vpop.f32.mrf.mxu0
      %v2460 = vadd.f32 0.0, %v2459
      %2461 = vmatmul.f32.gmra.mxu0 %v2347
      %v2462 = vpop.f32.mrf.mxu0
      %v2463 = vadd.f32 0.0, %v2462
      %2464 = vmatmul.f32.gmra.mxu0 %v2350
      %v2465 = vpop.f32.mrf.mxu0
      %v2466 = vadd.f32 0.0, %v2465
      %2467 = vmatmul.f32.gmra.mxu0 %v2353
      %v2468 = vpop.f32.mrf.mxu0
      %v2469 = vadd.f32 0.0, %v2468
      %2470 = vmatmul.f32.gmra.mxu0 %v2356
      %v2471 = vpop.f32.mrf.mxu0
      %v2472 = vadd.f32 0.0, %v2471
      %2473 = vmatmul.f32.gmra.mxu0 %v2359
      %v2474 = vpop.f32.mrf.mxu0
      %v2475 = vadd.f32 0.0, %v2474
      %2476 = vmatmul.f32.gmra.mxu0 %v2362
      %v2477 = vpop.f32.mrf.mxu0
      %v2478 = vadd.f32 0.0, %v2477
      %2479 = vmatmul.f32.gmra.mxu0 %v2365
      %v2480 = vpop.f32.mrf.mxu0
      %v2481 = vadd.f32 0.0, %v2480
      %2482 = vmatmul.f32.gmra.mxu0 %v2368
      %v2483 = vpop.f32.mrf.mxu0
      %v2484 = vadd.f32 0.0, %v2483
      %2485 = vmatmul.f32.gmra.mxu0 %v2371
      %v2486 = vpop.f32.mrf.mxu0
      %v2487 = vadd.f32 0.0, %v2486
      %2488 = vmatmul.f32.gmra.mxu0 %v2374
      %v2489 = vpop.f32.mrf.mxu0
      %v2490 = vadd.f32 0.0, %v2489
      %2491 = vmatmul.f32.gmra.mxu0 %v2377
      %v2492 = vpop.f32.mrf.mxu0
      %v2493 = vadd.f32 0.0, %v2492
      %2494 = vmatmul.f32.gmra.mxu0 %v2380
      %v2495 = vpop.f32.mrf.mxu0
      %v2496 = vadd.f32 0.0, %v2495
      %2497 = vmatmul.f32.gmra.mxu0 %v2383
      %v2498 = vpop.f32.mrf.mxu0
      %v2499 = vadd.f32 0.0, %v2498
      %2500 = vmatmul.f32.gmra.mxu0 %v2386
      %v2501 = vpop.f32.mrf.mxu0
      %v2502 = vadd.f32 0.0, %v2501
      %2503 = vmatmul.f32.gmra.mxu0 %v2389
      %v2504 = vpop.f32.mrf.mxu0
      %v2505 = vadd.f32 0.0, %v2504
      %2506 = vmatmul.f32.gmra.mxu0 %v2392
      %v2507 = vpop.f32.mrf.mxu0
      %v2508 = vadd.f32 0.0, %v2507
      %2509 = vmatmul.f32.gmra.mxu0 %v2395
      %v2510 = vpop.f32.mrf.mxu0
      %v2511 = vadd.f32 0.0, %v2510
      %2512 = vmatmul.f32.gmra.mxu0 %v2398
      %v2513 = vpop.f32.mrf.mxu0
      %v2514 = vadd.f32 0.0, %v2513
      %2515 = vmatmul.f32.gmra.mxu0 %v2401
      %v2516 = vpop.f32.mrf.mxu0
      %v2517 = vadd.f32 0.0, %v2516
      %2518 = vmatmul.f32.gmra.mxu0 %v2404
      %v2519 = vpop.f32.mrf.mxu0
      %v2520 = vadd.f32 0.0, %v2519
      %2521 = vmatmul.f32.gmra.mxu0 %v2407
      %v2522 = vpop.f32.mrf.mxu0
      %v2523 = vadd.f32 0.0, %v2522
      %2524 = vmatmul.f32.gmra.mxu0 %v2410
      %v2525 = vpop.f32.mrf.mxu0
      %v2526 = vadd.f32 0.0, %v2525
      %2527 = vmatmul.f32.gmra.mxu0 %v2413
      %v2528 = vpop.f32.mrf.mxu0
      %v2529 = vadd.f32 0.0, %v2528
      %2530 = vmatmul.f32.gmra.mxu0 %v2416
      %v2531 = vpop.f32.mrf.mxu0
      %v2532 = vadd.f32 0.0, %v2531
      %2533 = vmatmul.f32.gmra.mxu0 %v2419
      %v2534 = vpop.f32.mrf.mxu0
      %v2535 = vadd.f32 0.0, %v2534
      %2536 = vmatmul.f32.gmra.mxu0 %v2422
      %v2537 = vpop.f32.mrf.mxu0
      %v2538 = vadd.f32 0.0, %v2537
      %2539 = vmatmul.f32.gmra.mxu0 %v2425
      %v2540 = vpop.f32.mrf.mxu0
      %v2541 = vadd.f32 0.0, %v2540
      %2542 = vdwg.mxu0
      %v2544 = vsel %vm307, %v2293, 0
      %v2547 = vsel %vm307, %v2294, 0
      %v2550 = vsel %vm998, %v2326, 0
      %2552 = vmatpush.msra.mxu0 0.0
      %2553 = vmatpush.msra.mxu0 0.0
      %2554 = vmatpush.msra.mxu0 0.0
      %2555 = vmatpush.msra.mxu0 0.0
      %2556 = vmatpush.msra.mxu0 0.0
      %2557 = vmatpush.msra.mxu0 0.0
      %2558 = vmatpush.msra.mxu0 0.0
      %2559 = vmatpush.msra.mxu0 0.0
      %2560 = vmatpush.msra.mxu0 0.0
      %2561 = vmatpush.msra.mxu0 0.0
      %2562 = vmatpush.msra.mxu0 0.0
      %2563 = vmatpush.msra.mxu0 0.0
      %2564 = vmatpush.msra.mxu0 0.0
      %2565 = vmatpush.msra.mxu0 0.0
      %2566 = vmatpush.msra.mxu0 0.0
      %2567 = vmatpush.msra.mxu0 %v2550
      %2568 = vmatmul.f32.gmra.mxu0 %v2544
      %v2569 = vpop.f32.mrf.mxu0
      %v2570 = vadd.f32 %v2448, %v2569
      %2571 = vmatmul.f32.gmra.mxu0 %v2547
      %v2572 = vpop.f32.mrf.mxu0
      %v2573 = vadd.f32 %v2451, %v2572
      %2574 = vmatmul.f32.gmra.mxu0 %v2332
      %v2575 = vpop.f32.mrf.mxu0
      %v2576 = vadd.f32 %v2454, %v2575
      %2577 = vmatmul.f32.gmra.mxu0 %v2335
      %v2578 = vpop.f32.mrf.mxu0
      %v2579 = vadd.f32 %v2457, %v2578
      %2580 = vmatmul.f32.gmra.mxu0 %v2338
      %v2581 = vpop.f32.mrf.mxu0
      %v2582 = vadd.f32 %v2460, %v2581
      %2583 = vmatmul.f32.gmra.mxu0 %v2341
      %v2584 = vpop.f32.mrf.mxu0
      %v2585 = vadd.f32 %v2463, %v2584
      %2586 = vmatmul.f32.gmra.mxu0 %v2344
      %v2587 = vpop.f32.mrf.mxu0
      %v2588 = vadd.f32 %v2466, %v2587
      %2589 = vmatmul.f32.gmra.mxu0 %v2347
      %v2590 = vpop.f32.mrf.mxu0
      %v2591 = vadd.f32 %v2469, %v2590
      %2592 = vmatmul.f32.gmra.mxu0 %v2350
      %v2593 = vpop.f32.mrf.mxu0
      %v2594 = vadd.f32 %v2472, %v2593
      %2595 = vmatmul.f32.gmra.mxu0 %v2353
      %v2596 = vpop.f32.mrf.mxu0
      %v2597 = vadd.f32 %v2475, %v2596
      %2598 = vmatmul.f32.gmra.mxu0 %v2356
      %v2599 = vpop.f32.mrf.mxu0
      %v2600 = vadd.f32 %v2478, %v2599
      %2601 = vmatmul.f32.gmra.mxu0 %v2359
      %v2602 = vpop.f32.mrf.mxu0
      %v2603 = vadd.f32 %v2481, %v2602
      %2604 = vmatmul.f32.gmra.mxu0 %v2362
      %v2605 = vpop.f32.mrf.mxu0
      %v2606 = vadd.f32 %v2484, %v2605
      %2607 = vmatmul.f32.gmra.mxu0 %v2365
      %v2608 = vpop.f32.mrf.mxu0
      %v2609 = vadd.f32 %v2487, %v2608
      %2610 = vmatmul.f32.gmra.mxu0 %v2368
      %v2611 = vpop.f32.mrf.mxu0
      %v2612 = vadd.f32 %v2490, %v2611
      %2613 = vmatmul.f32.gmra.mxu0 %v2371
      %v2614 = vpop.f32.mrf.mxu0
      %v2615 = vadd.f32 %v2493, %v2614
      %2616 = vmatmul.f32.gmra.mxu0 %v2374
      %v2617 = vpop.f32.mrf.mxu0
      %v2618 = vadd.f32 %v2496, %v2617
      %2619 = vmatmul.f32.gmra.mxu0 %v2377
      %v2620 = vpop.f32.mrf.mxu0
      %v2621 = vadd.f32 %v2499, %v2620
      %2622 = vmatmul.f32.gmra.mxu0 %v2380
      %v2623 = vpop.f32.mrf.mxu0
      %v2624 = vadd.f32 %v2502, %v2623
      %2625 = vmatmul.f32.gmra.mxu0 %v2383
      %v2626 = vpop.f32.mrf.mxu0
      %v2627 = vadd.f32 %v2505, %v2626
      %2628 = vmatmul.f32.gmra.mxu0 %v2386
      %v2629 = vpop.f32.mrf.mxu0
      %v2630 = vadd.f32 %v2508, %v2629
      %2631 = vmatmul.f32.gmra.mxu0 %v2389
      %v2632 = vpop.f32.mrf.mxu0
      %v2633 = vadd.f32 %v2511, %v2632
      %2634 = vmatmul.f32.gmra.mxu0 %v2392
      %v2635 = vpop.f32.mrf.mxu0
      %v2636 = vadd.f32 %v2514, %v2635
      %2637 = vmatmul.f32.gmra.mxu0 %v2395
      %v2638 = vpop.f32.mrf.mxu0
      %v2639 = vadd.f32 %v2517, %v2638
      %2640 = vmatmul.f32.gmra.mxu0 %v2398
      %v2641 = vpop.f32.mrf.mxu0
      %v2642 = vadd.f32 %v2520, %v2641
      %2643 = vmatmul.f32.gmra.mxu0 %v2401
      %v2644 = vpop.f32.mrf.mxu0
      %v2645 = vadd.f32 %v2523, %v2644
      %2646 = vmatmul.f32.gmra.mxu0 %v2404
      %v2647 = vpop.f32.mrf.mxu0
      %v2648 = vadd.f32 %v2526, %v2647
      %2649 = vmatmul.f32.gmra.mxu0 %v2407
      %v2650 = vpop.f32.mrf.mxu0
      %v2651 = vadd.f32 %v2529, %v2650
      %2652 = vmatmul.f32.gmra.mxu0 %v2410
      %v2653 = vpop.f32.mrf.mxu0
      %v2654 = vadd.f32 %v2532, %v2653
      %2655 = vmatmul.f32.gmra.mxu0 %v2413
      %v2656 = vpop.f32.mrf.mxu0
      %v2657 = vadd.f32 %v2535, %v2656
      %2658 = vmatmul.f32.gmra.mxu0 %v2416
      %v2659 = vpop.f32.mrf.mxu0
      %v2660 = vadd.f32 %v2538, %v2659
      %2661 = vmatmul.f32.gmra.mxu0 %v2419
      %v2662 = vpop.f32.mrf.mxu0
      %v2663 = vadd.f32 %v2541, %v2662
      %2664 = vdwg.mxu0
      %v2665 = vld [vmem:[#allocation2 + $0x29] sm:$0xff]
      %v2666 = vld [vmem:[#allocation2 + $0x31] sm:$0xff]
      %v2667 = vld [vmem:[#allocation2 + $0x39] sm:$0xff]
      %v2668 = vld [vmem:[#allocation2 + $0x41] sm:$0xff]
      %v2669 = vld [vmem:[#allocation2 + $0x49] sm:$0xff]
      %v2670 = vld [vmem:[#allocation2 + $0x51] sm:$0xff]
      %v2671 = vld [vmem:[#allocation2 + $0x59] sm:$0xff]
      %v2672 = vld [vmem:[#allocation2 + $0x61] sm:$0xff]
      %v2673 = vld [vmem:[#allocation2 + $0x69] sm:$0xff]
      %v2674 = vld [vmem:[#allocation2 + $0x71] sm:$0xff]
      %v2675 = vld [vmem:[#allocation2 + $0x79] sm:$0xff]
      %v2676 = vld [vmem:[#allocation2 + $0x81] sm:$0xff]
      %v2677 = vld [vmem:[#allocation2 + $0x89] sm:$0xff]
      %v2678 = vld [vmem:[#allocation2 + $0x91] sm:$0xff]
      %v2679 = vld [vmem:[#allocation2 + $0x99] sm:$0xff]
      %v2680 = vld [vmem:[#allocation2 + $0xa1] sm:$0xff]
      %v2681 = vld [vmem:[#allocation2 + $0xa9] sm:$0xff]
      %v2682 = vld [vmem:[#allocation2 + $0xb1] sm:$0xff]
      %v2683 = vld [vmem:[#allocation2 + $0xb9] sm:$0xff]
      %v2684 = vld [vmem:[#allocation2 + $0xc1] sm:$0xff]
      %v2685 = vld [vmem:[#allocation2 + $0xc9] sm:$0xff]
      %v2686 = vld [vmem:[#allocation2 + $0xd1] sm:$0xff]
      %v2687 = vld [vmem:[#allocation2 + $0xd9] sm:$0xff]
      %v2688 = vld [vmem:[#allocation2 + $0xe1] sm:$0xff]
      %v2689 = vld [vmem:[#allocation2 + $0xe9] sm:$0xff]
      %v2690 = vld [vmem:[#allocation2 + $0xf1] sm:$0xff]
      %v2691 = vld [vmem:[#allocation2 + $0xf9] sm:$0xff]
      %v2692 = vld [vmem:[#allocation2 + $0x101] sm:$0xff]
      %v2693 = vld [vmem:[#allocation2 + $0x109] sm:$0xff]
      %v2694 = vld [vmem:[#allocation2 + $0x111] sm:$0xff]
      %v2695 = vld [vmem:[#allocation2 + $0x119] sm:$0xff]
      %v2696 = vld [vmem:[#allocation2 + $0x121] sm:$0xff]
      %s2697 = scalar_lea.vmem %s2, 32
      %v2698 = vld [vmem:[%s2697] sm:$0xf]
      %v2700 = vsel %vm307, %v2665, 0
      %v2703 = vsel %vm307, %v2666, 0
      %v2706 = vsel %vm307, %v2667, 0
      %v2709 = vsel %vm307, %v2668, 0
      %v2712 = vsel %vm307, %v2669, 0
      %v2715 = vsel %vm307, %v2670, 0
      %v2718 = vsel %vm307, %v2671, 0
      %v2721 = vsel %vm307, %v2672, 0
      %v2724 = vsel %vm307, %v2673, 0
      %v2727 = vsel %vm307, %v2674, 0
      %v2730 = vsel %vm307, %v2675, 0
      %v2733 = vsel %vm307, %v2676, 0
      %v2736 = vsel %vm307, %v2677, 0
      %v2739 = vsel %vm307, %v2678, 0
      %v2742 = vsel %vm307, %v2679, 0
      %v2745 = vsel %vm307, %v2680, 0
      %v2748 = vsel %vm307, %v2681, 0
      %v2751 = vsel %vm307, %v2682, 0
      %v2754 = vsel %vm307, %v2683, 0
      %v2757 = vsel %vm307, %v2684, 0
      %v2760 = vsel %vm307, %v2685, 0
      %v2763 = vsel %vm307, %v2686, 0
      %v2766 = vsel %vm307, %v2687, 0
      %v2769 = vsel %vm307, %v2688, 0
      %v2772 = vsel %vm307, %v2689, 0
      %v2775 = vsel %vm307, %v2690, 0
      %v2778 = vsel %vm307, %v2691, 0
      %v2781 = vsel %vm307, %v2692, 0
      %v2784 = vsel %vm307, %v2693, 0
      %v2787 = vsel %vm307, %v2694, 0
      %v2790 = vsel %vm307, %v2695, 0
      %v2793 = vsel %vm307, %v2696, 0
      %v2796 = vsel %vm998, %v2698, 0
      %2798 = vmatpush.msra.mxu0 0.0
      %2799 = vmatpush.msra.mxu0 0.0
      %2800 = vmatpush.msra.mxu0 0.0
      %2801 = vmatpush.msra.mxu0 0.0
      %2802 = vmatpush.msra.mxu0 0.0
      %2803 = vmatpush.msra.mxu0 0.0
      %2804 = vmatpush.msra.mxu0 0.0
      %2805 = vmatpush.msra.mxu0 0.0
      %2806 = vmatpush.msra.mxu0 0.0
      %2807 = vmatpush.msra.mxu0 0.0
      %2808 = vmatpush.msra.mxu0 0.0
      %2809 = vmatpush.msra.mxu0 0.0
      %2810 = vmatpush.msra.mxu0 0.0
      %2811 = vmatpush.msra.mxu0 0.0
      %2812 = vmatpush.msra.mxu0 0.0
      %2813 = vmatpush.msra.mxu0 %v2796
      %2814 = vmatmul.f32.gmra.mxu0 %v2700
      %v2815 = vpop.f32.mrf.mxu0
      %v2816 = vadd.f32 0.0, %v2815
      %2817 = vmatmul.f32.gmra.mxu0 %v2703
      %v2818 = vpop.f32.mrf.mxu0
      %v2819 = vadd.f32 0.0, %v2818
      %2820 = vmatmul.f32.gmra.mxu0 %v2706
      %v2821 = vpop.f32.mrf.mxu0
      %v2822 = vadd.f32 0.0, %v2821
      %2823 = vmatmul.f32.gmra.mxu0 %v2709
      %v2824 = vpop.f32.mrf.mxu0
      %v2825 = vadd.f32 0.0, %v2824
      %2826 = vmatmul.f32.gmra.mxu0 %v2712
      %v2827 = vpop.f32.mrf.mxu0
      %v2828 = vadd.f32 0.0, %v2827
      %2829 = vmatmul.f32.gmra.mxu0 %v2715
      %v2830 = vpop.f32.mrf.mxu0
      %v2831 = vadd.f32 0.0, %v2830
      %2832 = vmatmul.f32.gmra.mxu0 %v2718
      %v2833 = vpop.f32.mrf.mxu0
      %v2834 = vadd.f32 0.0, %v2833
      %2835 = vmatmul.f32.gmra.mxu0 %v2721
      %v2836 = vpop.f32.mrf.mxu0
      %v2837 = vadd.f32 0.0, %v2836
      %2838 = vmatmul.f32.gmra.mxu0 %v2724
      %v2839 = vpop.f32.mrf.mxu0
      %v2840 = vadd.f32 0.0, %v2839
      %2841 = vmatmul.f32.gmra.mxu0 %v2727
      %v2842 = vpop.f32.mrf.mxu0
      %v2843 = vadd.f32 0.0, %v2842
      %2844 = vmatmul.f32.gmra.mxu0 %v2730
      %v2845 = vpop.f32.mrf.mxu0
      %v2846 = vadd.f32 0.0, %v2845
      %2847 = vmatmul.f32.gmra.mxu0 %v2733
      %v2848 = vpop.f32.mrf.mxu0
      %v2849 = vadd.f32 0.0, %v2848
      %2850 = vmatmul.f32.gmra.mxu0 %v2736
      %v2851 = vpop.f32.mrf.mxu0
      %v2852 = vadd.f32 0.0, %v2851
      %2853 = vmatmul.f32.gmra.mxu0 %v2739
      %v2854 = vpop.f32.mrf.mxu0
      %v2855 = vadd.f32 0.0, %v2854
      %2856 = vmatmul.f32.gmra.mxu0 %v2742
      %v2857 = vpop.f32.mrf.mxu0
      %v2858 = vadd.f32 0.0, %v2857
      %2859 = vmatmul.f32.gmra.mxu0 %v2745
      %v2860 = vpop.f32.mrf.mxu0
      %v2861 = vadd.f32 0.0, %v2860
      %2862 = vmatmul.f32.gmra.mxu0 %v2748
      %v2863 = vpop.f32.mrf.mxu0
      %v2864 = vadd.f32 0.0, %v2863
      %2865 = vmatmul.f32.gmra.mxu0 %v2751
      %v2866 = vpop.f32.mrf.mxu0
      %v2867 = vadd.f32 0.0, %v2866
      %2868 = vmatmul.f32.gmra.mxu0 %v2754
      %v2869 = vpop.f32.mrf.mxu0
      %v2870 = vadd.f32 0.0, %v2869
      %2871 = vmatmul.f32.gmra.mxu0 %v2757
      %v2872 = vpop.f32.mrf.mxu0
      %v2873 = vadd.f32 0.0, %v2872
      %2874 = vmatmul.f32.gmra.mxu0 %v2760
      %v2875 = vpop.f32.mrf.mxu0
      %v2876 = vadd.f32 0.0, %v2875
      %2877 = vmatmul.f32.gmra.mxu0 %v2763
      %v2878 = vpop.f32.mrf.mxu0
      %v2879 = vadd.f32 0.0, %v2878
      %2880 = vmatmul.f32.gmra.mxu0 %v2766
      %v2881 = vpop.f32.mrf.mxu0
      %v2882 = vadd.f32 0.0, %v2881
      %2883 = vmatmul.f32.gmra.mxu0 %v2769
      %v2884 = vpop.f32.mrf.mxu0
      %v2885 = vadd.f32 0.0, %v2884
      %2886 = vmatmul.f32.gmra.mxu0 %v2772
      %v2887 = vpop.f32.mrf.mxu0
      %v2888 = vadd.f32 0.0, %v2887
      %2889 = vmatmul.f32.gmra.mxu0 %v2775
      %v2890 = vpop.f32.mrf.mxu0
      %v2891 = vadd.f32 0.0, %v2890
      %2892 = vmatmul.f32.gmra.mxu0 %v2778
      %v2893 = vpop.f32.mrf.mxu0
      %v2894 = vadd.f32 0.0, %v2893
      %2895 = vmatmul.f32.gmra.mxu0 %v2781
      %v2896 = vpop.f32.mrf.mxu0
      %v2897 = vadd.f32 0.0, %v2896
      %2898 = vmatmul.f32.gmra.mxu0 %v2784
      %v2899 = vpop.f32.mrf.mxu0
      %v2900 = vadd.f32 0.0, %v2899
      %2901 = vmatmul.f32.gmra.mxu0 %v2787
      %v2902 = vpop.f32.mrf.mxu0
      %v2903 = vadd.f32 0.0, %v2902
      %2904 = vmatmul.f32.gmra.mxu0 %v2790
      %v2905 = vpop.f32.mrf.mxu0
      %v2906 = vadd.f32 0.0, %v2905
      %2907 = vmatmul.f32.gmra.mxu0 %v2793
      %v2908 = vpop.f32.mrf.mxu0
      %v2909 = vadd.f32 0.0, %v2908
      %2910 = vdwg.mxu0
      %v2911 = vadd.f32 %v2570, %v2816
      %v2912 = vadd.f32 %v2573, %v2819
      %v2913 = vadd.f32 %v2576, %v2822
      %v2914 = vadd.f32 %v2579, %v2825
      %v2915 = vadd.f32 %v2582, %v2828
      %v2916 = vadd.f32 %v2585, %v2831
      %v2917 = vadd.f32 %v2588, %v2834
      %v2918 = vadd.f32 %v2591, %v2837
      %v2919 = vadd.f32 %v2594, %v2840
      %v2920 = vadd.f32 %v2597, %v2843
      %v2921 = vadd.f32 %v2600, %v2846
      %v2922 = vadd.f32 %v2603, %v2849
      %v2923 = vadd.f32 %v2606, %v2852
      %v2924 = vadd.f32 %v2609, %v2855
      %v2925 = vadd.f32 %v2612, %v2858
      %v2926 = vadd.f32 %v2615, %v2861
      %v2927 = vadd.f32 %v2618, %v2864
      %v2928 = vadd.f32 %v2621, %v2867
      %v2929 = vadd.f32 %v2624, %v2870
      %v2930 = vadd.f32 %v2627, %v2873
      %v2931 = vadd.f32 %v2630, %v2876
      %v2932 = vadd.f32 %v2633, %v2879
      %v2933 = vadd.f32 %v2636, %v2882
      %v2934 = vadd.f32 %v2639, %v2885
      %v2935 = vadd.f32 %v2642, %v2888
      %v2936 = vadd.f32 %v2645, %v2891
      %v2937 = vadd.f32 %v2648, %v2894
      %v2938 = vadd.f32 %v2651, %v2897
      %v2939 = vadd.f32 %v2654, %v2900
      %v2940 = vadd.f32 %v2657, %v2903
      %v2941 = vadd.f32 %v2660, %v2906
      %v2942 = vadd.f32 %v2663, %v2909
      %v2943 = vsel %vm833, 1, 0
      %v2944 = vsel %vm834, 1, 0
      %v2945 = vsel %vm835, 1, 0
      %v2946 = vsel %vm836, 1, 0
      %v2947 = vsel %vm837, 1, 0
      %v2948 = vsel %vm838, 1, 0
      %v2949 = vsel %vm839, 1, 0
      %v2950 = vsel %vm840, 1, 0
      %v2951 = vsel %vm841, 1, 0
      %v2952 = vsel %vm842, 1, 0
      %v2953 = vsel %vm843, 1, 0
      %v2954 = vsel %vm844, 1, 0
      %v2955 = vsel %vm845, 1, 0
      %v2956 = vsel %vm846, 1, 0
      %v2957 = vsel %vm847, 1, 0
      %v2958 = vsel %vm848, 1, 0
      %v2959 = vsel %vm849, 1, 0
      %v2960 = vsel %vm850, 1, 0
      %v2961 = vsel %vm851, 1, 0
      %v2962 = vsel %vm852, 1, 0
      %v2963 = vsel %vm853, 1, 0
      %v2964 = vsel %vm854, 1, 0
      %v2965 = vsel %vm855, 1, 0
      %v2966 = vsel %vm856, 1, 0
      %v2967 = vsel %vm857, 1, 0
      %v2968 = vsel %vm858, 1, 0
      %v2969 = vsel %vm859, 1, 0
      %v2970 = vsel %vm860, 1, 0
      %v2971 = vsel %vm861, 1, 0
      %v2972 = vsel %vm862, 1, 0
      %v2973 = vsel %vm863, 1, 0
      %v2974 = vsel %vm864, 1, 0
      %vm2975 = vcmp.eq.s32.totalorder %v2943, 1
      %vm2976 = vcmp.eq.s32.totalorder %v2944, 1
      %vm2977 = vcmp.eq.s32.totalorder %v2945, 1
      %vm2978 = vcmp.eq.s32.totalorder %v2946, 1
      %vm2979 = vcmp.eq.s32.totalorder %v2947, 1
      %vm2980 = vcmp.eq.s32.totalorder %v2948, 1
      %vm2981 = vcmp.eq.s32.totalorder %v2949, 1
      %vm2982 = vcmp.eq.s32.totalorder %v2950, 1
      %vm2983 = vcmp.eq.s32.totalorder %v2951, 1
      %vm2984 = vcmp.eq.s32.totalorder %v2952, 1
      %vm2985 = vcmp.eq.s32.totalorder %v2953, 1
      %vm2986 = vcmp.eq.s32.totalorder %v2954, 1
      %vm2987 = vcmp.eq.s32.totalorder %v2955, 1
      %vm2988 = vcmp.eq.s32.totalorder %v2956, 1
      %vm2989 = vcmp.eq.s32.totalorder %v2957, 1
      %vm2990 = vcmp.eq.s32.totalorder %v2958, 1
      %vm2991 = vcmp.eq.s32.totalorder %v2959, 1
      %vm2992 = vcmp.eq.s32.totalorder %v2960, 1
      %vm2993 = vcmp.eq.s32.totalorder %v2961, 1
      %vm2994 = vcmp.eq.s32.totalorder %v2962, 1
      %vm2995 = vcmp.eq.s32.totalorder %v2963, 1
      %vm2996 = vcmp.eq.s32.totalorder %v2964, 1
      %vm2997 = vcmp.eq.s32.totalorder %v2965, 1
      %vm2998 = vcmp.eq.s32.totalorder %v2966, 1
      %vm2999 = vcmp.eq.s32.totalorder %v2967, 1
      %vm3000 = vcmp.eq.s32.totalorder %v2968, 1
      %vm3001 = vcmp.eq.s32.totalorder %v2969, 1
      %vm3002 = vcmp.eq.s32.totalorder %v2970, 1
      %vm3003 = vcmp.eq.s32.totalorder %v2971, 1
      %vm3004 = vcmp.eq.s32.totalorder %v2972, 1
      %vm3005 = vcmp.eq.s32.totalorder %v2973, 1
      %vm3006 = vcmp.eq.s32.totalorder %v2974, 1
      %v3007 = vsel %vm2975, %v2911, 0.0
      %v3008 = vsel %vm2976, %v2912, 0.0
      %v3009 = vsel %vm2977, %v2913, 0.0
      %v3010 = vsel %vm2978, %v2914, 0.0
      %v3011 = vsel %vm2979, %v2915, 0.0
      %v3012 = vsel %vm2980, %v2916, 0.0
      %v3013 = vsel %vm2981, %v2917, 0.0
      %v3014 = vsel %vm2982, %v2918, 0.0
      %v3015 = vsel %vm2983, %v2919, 0.0
      %v3016 = vsel %vm2984, %v2920, 0.0
      %v3017 = vsel %vm2985, %v2921, 0.0
      %v3018 = vsel %vm2986, %v2922, 0.0
      %v3019 = vsel %vm2987, %v2923, 0.0
      %v3020 = vsel %vm2988, %v2924, 0.0
      %v3021 = vsel %vm2989, %v2925, 0.0
      %v3022 = vsel %vm2990, %v2926, 0.0
      %v3023 = vsel %vm2991, %v2927, 0.0
      %v3024 = vsel %vm2992, %v2928, 0.0
      %v3025 = vsel %vm2993, %v2929, 0.0
      %v3026 = vsel %vm2994, %v2930, 0.0
      %v3027 = vsel %vm2995, %v2931, 0.0
      %v3028 = vsel %vm2996, %v2932, 0.0
      %v3029 = vsel %vm2997, %v2933, 0.0
      %v3030 = vsel %vm2998, %v2934, 0.0
      %v3031 = vsel %vm2999, %v2935, 0.0
      %v3032 = vsel %vm3000, %v2936, 0.0
      %v3033 = vsel %vm3001, %v2937, 0.0
      %v3034 = vsel %vm3002, %v2938, 0.0
      %v3035 = vsel %vm3003, %v2939, 0.0
      %v3036 = vsel %vm3004, %v2940, 0.0
      %v3037 = vsel %vm3005, %v2941, 0.0
      %v3038 = vsel %vm3006, %v2942, 0.0
      %v3039 = vadd.f32 %v2261, %v3007
      %v3040 = vadd.f32 %v2262, %v3008
      %v3041 = vadd.f32 %v2263, %v3009
      %v3042 = vadd.f32 %v2264, %v3010
      %v3043 = vadd.f32 %v2265, %v3011
      %v3044 = vadd.f32 %v2266, %v3012
      %v3045 = vadd.f32 %v2267, %v3013
      %v3046 = vadd.f32 %v2268, %v3014
      %v3047 = vadd.f32 %v2269, %v3015
      %v3048 = vadd.f32 %v2270, %v3016
      %v3049 = vadd.f32 %v2271, %v3017
      %v3050 = vadd.f32 %v2272, %v3018
      %v3051 = vadd.f32 %v2273, %v3019
      %v3052 = vadd.f32 %v2274, %v3020
      %v3053 = vadd.f32 %v2275, %v3021
      %v3054 = vadd.f32 %v2276, %v3022
      %v3055 = vadd.f32 %v2277, %v3023
      %v3056 = vadd.f32 %v2278, %v3024
      %v3057 = vadd.f32 %v2279, %v3025
      %v3058 = vadd.f32 %v2280, %v3026
      %v3059 = vadd.f32 %v2281, %v3027
      %v3060 = vadd.f32 %v2282, %v3028
      %v3061 = vadd.f32 %v2283, %v3029
      %v3062 = vadd.f32 %v2284, %v3030
      %v3063 = vadd.f32 %v2285, %v3031
      %v3064 = vadd.f32 %v2286, %v3032
      %v3065 = vadd.f32 %v2287, %v3033
      %v3066 = vadd.f32 %v2288, %v3034
      %v3067 = vadd.f32 %v2289, %v3035
      %v3068 = vadd.f32 %v2290, %v3036
      %v3069 = vadd.f32 %v2291, %v3037
      %v3070 = vadd.f32 %v2292, %v3038
      %v3071 = vld [vmem:[%s3] sm:$0x1]
      %v3073 = vperm.slane %v3071, 0
      %v3075 = vadd.f32 %v3039, %v3073
      %v3076 = vadd.f32 %v3040, %v3073
      %v3077 = vadd.f32 %v3041, %v3073
      %v3078 = vadd.f32 %v3042, %v3073
      %v3079 = vadd.f32 %v3043, %v3073
      %v3080 = vadd.f32 %v3044, %v3073
      %v3081 = vadd.f32 %v3045, %v3073
      %v3082 = vadd.f32 %v3046, %v3073
      %v3083 = vadd.f32 %v3047, %v3073
      %v3084 = vadd.f32 %v3048, %v3073
      %v3085 = vadd.f32 %v3049, %v3073
      %v3086 = vadd.f32 %v3050, %v3073
      %v3087 = vadd.f32 %v3051, %v3073
      %v3088 = vadd.f32 %v3052, %v3073
      %v3089 = vadd.f32 %v3053, %v3073
      %v3090 = vadd.f32 %v3054, %v3073
      %v3091 = vadd.f32 %v3055, %v3073
      %v3092 = vadd.f32 %v3056, %v3073
      %v3093 = vadd.f32 %v3057, %v3073
      %v3094 = vadd.f32 %v3058, %v3073
      %v3095 = vadd.f32 %v3059, %v3073
      %v3096 = vadd.f32 %v3060, %v3073
      %v3097 = vadd.f32 %v3061, %v3073
      %v3098 = vadd.f32 %v3062, %v3073
      %v3099 = vadd.f32 %v3063, %v3073
      %v3100 = vadd.f32 %v3064, %v3073
      %v3101 = vadd.f32 %v3065, %v3073
      %v3102 = vadd.f32 %v3066, %v3073
      %v3103 = vadd.f32 %v3067, %v3073
      %v3104 = vadd.f32 %v3068, %v3073
      %v3105 = vadd.f32 %v3069, %v3073
      %v3106 = vadd.f32 %v3070, %v3073
      %vm3107 = vcmp.gt.f32.partialorder %v3075, 0.0
      %vm3108 = vcmp.gt.f32.partialorder %v3076, 0.0
      %vm3109 = vcmp.gt.f32.partialorder %v3077, 0.0
      %vm3110 = vcmp.gt.f32.partialorder %v3078, 0.0
      %vm3111 = vcmp.gt.f32.partialorder %v3079, 0.0
      %vm3112 = vcmp.gt.f32.partialorder %v3080, 0.0
      %vm3113 = vcmp.gt.f32.partialorder %v3081, 0.0
      %vm3114 = vcmp.gt.f32.partialorder %v3082, 0.0
      %vm3115 = vcmp.gt.f32.partialorder %v3083, 0.0
      %vm3116 = vcmp.gt.f32.partialorder %v3084, 0.0
      %vm3117 = vcmp.gt.f32.partialorder %v3085, 0.0
      %vm3118 = vcmp.gt.f32.partialorder %v3086, 0.0
      %vm3119 = vcmp.gt.f32.partialorder %v3087, 0.0
      %vm3120 = vcmp.gt.f32.partialorder %v3088, 0.0
      %vm3121 = vcmp.gt.f32.partialorder %v3089, 0.0
      %vm3122 = vcmp.gt.f32.partialorder %v3090, 0.0
      %vm3123 = vcmp.gt.f32.partialorder %v3091, 0.0
      %vm3124 = vcmp.gt.f32.partialorder %v3092, 0.0
      %vm3125 = vcmp.gt.f32.partialorder %v3093, 0.0
      %vm3126 = vcmp.gt.f32.partialorder %v3094, 0.0
      %vm3127 = vcmp.gt.f32.partialorder %v3095, 0.0
      %vm3128 = vcmp.gt.f32.partialorder %v3096, 0.0
      %vm3129 = vcmp.gt.f32.partialorder %v3097, 0.0
      %vm3130 = vcmp.gt.f32.partialorder %v3098, 0.0
      %vm3131 = vcmp.gt.f32.partialorder %v3099, 0.0
      %vm3132 = vcmp.gt.f32.partialorder %v3100, 0.0
      %vm3133 = vcmp.gt.f32.partialorder %v3101, 0.0
      %vm3134 = vcmp.gt.f32.partialorder %v3102, 0.0
      %vm3135 = vcmp.gt.f32.partialorder %v3103, 0.0
      %vm3136 = vcmp.gt.f32.partialorder %v3104, 0.0
      %vm3137 = vcmp.gt.f32.partialorder %v3105, 0.0
      %vm3138 = vcmp.gt.f32.partialorder %v3106, 0.0
      %v3139 = vmul.f32 %v3075, 0.2
      %v3140 = vmul.f32 %v3076, 0.2
      %v3141 = vmul.f32 %v3077, 0.2
      %v3142 = vmul.f32 %v3078, 0.2
      %v3143 = vmul.f32 %v3079, 0.2
      %v3144 = vmul.f32 %v3080, 0.2
      %v3145 = vmul.f32 %v3081, 0.2
      %v3146 = vmul.f32 %v3082, 0.2
      %v3147 = vmul.f32 %v3083, 0.2
      %v3148 = vmul.f32 %v3084, 0.2
      %v3149 = vmul.f32 %v3085, 0.2
      %v3150 = vmul.f32 %v3086, 0.2
      %v3151 = vmul.f32 %v3087, 0.2
      %v3152 = vmul.f32 %v3088, 0.2
      %v3153 = vmul.f32 %v3089, 0.2
      %v3154 = vmul.f32 %v3090, 0.2
      %v3155 = vmul.f32 %v3091, 0.2
      %v3156 = vmul.f32 %v3092, 0.2
      %v3157 = vmul.f32 %v3093, 0.2
      %v3158 = vmul.f32 %v3094, 0.2
      %v3159 = vmul.f32 %v3095, 0.2
      %v3160 = vmul.f32 %v3096, 0.2
      %v3161 = vmul.f32 %v3097, 0.2
      %v3162 = vmul.f32 %v3098, 0.2
      %v3163 = vmul.f32 %v3099, 0.2
      %v3164 = vmul.f32 %v3100, 0.2
      %v3165 = vmul.f32 %v3101, 0.2
      %v3166 = vmul.f32 %v3102, 0.2
      %v3167 = vmul.f32 %v3103, 0.2
      %v3168 = vmul.f32 %v3104, 0.2
      %v3169 = vmul.f32 %v3105, 0.2
      %v3170 = vmul.f32 %v3106, 0.2
      %v3171 = vsel %vm3107, %v3075, %v3139
      %v3172 = vsel %vm3108, %v3076, %v3140
      %v3173 = vsel %vm3109, %v3077, %v3141
      %v3174 = vsel %vm3110, %v3078, %v3142
      %v3175 = vsel %vm3111, %v3079, %v3143
      %v3176 = vsel %vm3112, %v3080, %v3144
      %v3177 = vsel %vm3113, %v3081, %v3145
      %v3178 = vsel %vm3114, %v3082, %v3146
      %v3179 = vsel %vm3115, %v3083, %v3147
      %v3180 = vsel %vm3116, %v3084, %v3148
      %v3181 = vsel %vm3117, %v3085, %v3149
      %v3182 = vsel %vm3118, %v3086, %v3150
      %v3183 = vsel %vm3119, %v3087, %v3151
      %v3184 = vsel %vm3120, %v3088, %v3152
      %v3185 = vsel %vm3121, %v3089, %v3153
      %v3186 = vsel %vm3122, %v3090, %v3154
      %v3187 = vsel %vm3123, %v3091, %v3155
      %v3188 = vsel %vm3124, %v3092, %v3156
      %v3189 = vsel %vm3125, %v3093, %v3157
      %v3190 = vsel %vm3126, %v3094, %v3158
      %v3191 = vsel %vm3127, %v3095, %v3159
      %v3192 = vsel %vm3128, %v3096, %v3160
      %v3193 = vsel %vm3129, %v3097, %v3161
      %v3194 = vsel %vm3130, %v3098, %v3162
      %v3195 = vsel %vm3131, %v3099, %v3163
      %v3196 = vsel %vm3132, %v3100, %v3164
      %v3197 = vsel %vm3133, %v3101, %v3165
      %v3198 = vsel %vm3134, %v3102, %v3166
      %v3199 = vsel %vm3135, %v3103, %v3167
      %v3200 = vsel %vm3136, %v3104, %v3168
      %v3201 = vsel %vm3137, %v3105, %v3169
      %v3202 = vsel %vm3138, %v3106, %v3170
      %3203 = vst.msk [vmem:[#allocation3 + $0x18] sm:$0xff] %vm307, %v3171
      %3204 = vst.msk [vmem:[#allocation3 + $0x20] sm:$0xff] %vm307, %v3172
      %3205 = vst.msk [vmem:[#allocation3 + $0x28] sm:$0xff] %vm307, %v3173
      %3206 = vst.msk [vmem:[#allocation3 + $0x30] sm:$0xff] %vm307, %v3174
      %3207 = vst.msk [vmem:[#allocation3 + $0x38] sm:$0xff] %vm307, %v3175
      %3208 = vst.msk [vmem:[#allocation3 + $0x40] sm:$0xff] %vm307, %v3176
      %3209 = vst.msk [vmem:[#allocation3 + $0x48] sm:$0xff] %vm307, %v3177
      %3210 = vst.msk [vmem:[#allocation3 + $0x50] sm:$0xff] %vm307, %v3178
      %3211 = vst.msk [vmem:[#allocation3 + $0x58] sm:$0xff] %vm307, %v3179
      %3212 = vst.msk [vmem:[#allocation3 + $0x60] sm:$0xff] %vm307, %v3180
      %3213 = vst.msk [vmem:[#allocation3 + $0x68] sm:$0xff] %vm307, %v3181
      %3214 = vst.msk [vmem:[#allocation3 + $0x70] sm:$0xff] %vm307, %v3182
      %3215 = vst.msk [vmem:[#allocation3 + $0x78] sm:$0xff] %vm307, %v3183
      %3216 = vst.msk [vmem:[#allocation3 + $0x80] sm:$0xff] %vm307, %v3184
      %3217 = vst.msk [vmem:[#allocation3 + $0x88] sm:$0xff] %vm307, %v3185
      %3218 = vst.msk [vmem:[#allocation3 + $0x90] sm:$0xff] %vm307, %v3186
      %3219 = vst.msk [vmem:[#allocation3 + $0x98] sm:$0xff] %vm307, %v3187
      %3220 = vst.msk [vmem:[#allocation3 + $0xa0] sm:$0xff] %vm307, %v3188
      %3221 = vst.msk [vmem:[#allocation3 + $0xa8] sm:$0xff] %vm307, %v3189
      %3222 = vst.msk [vmem:[#allocation3 + $0xb0] sm:$0xff] %vm307, %v3190
      %3223 = vst.msk [vmem:[#allocation3 + $0xb8] sm:$0xff] %vm307, %v3191
      %3224 = vst.msk [vmem:[#allocation3 + $0xc0] sm:$0xff] %vm307, %v3192
      %3225 = vst.msk [vmem:[#allocation3 + $0xc8] sm:$0xff] %vm307, %v3193
      %3226 = vst.msk [vmem:[#allocation3 + $0xd0] sm:$0xff] %vm307, %v3194
      %3227 = vst.msk [vmem:[#allocation3 + $0xd8] sm:$0xff] %vm307, %v3195
      %3228 = vst.msk [vmem:[#allocation3 + $0xe0] sm:$0xff] %vm307, %v3196
      %3229 = vst.msk [vmem:[#allocation3 + $0xe8] sm:$0xff] %vm307, %v3197
      %3230 = vst.msk [vmem:[#allocation3 + $0xf0] sm:$0xff] %vm307, %v3198
      %3231 = vst.msk [vmem:[#allocation3 + $0xf8] sm:$0xff] %vm307, %v3199
      %3232 = vst.msk [vmem:[#allocation3 + $0x100] sm:$0xff] %vm307, %v3200
      %3233 = vst.msk [vmem:[#allocation3 + $0x108] sm:$0xff] %vm307, %v3201
      %3234 = vst.msk [vmem:[#allocation3 + $0x110] sm:$0xff] %vm307, %v3202
      %v3235 = vld [vmem:[#allocation3 + $0x7] sm:$0xff]
      %v3236 = vld [vmem:[#allocation3 + $0xf] sm:$0xff]
      %v3237 = vld [vmem:[#allocation3 + $0x17] sm:$0xff]
      %v3238 = vld [vmem:[#allocation3 + $0x1f] sm:$0xff]
      %v3239 = vld [vmem:[#allocation3 + $0x27] sm:$0xff]
      %v3240 = vld [vmem:[#allocation3 + $0x2f] sm:$0xff]
      %v3241 = vld [vmem:[#allocation3 + $0x37] sm:$0xff]
      %v3242 = vld [vmem:[#allocation3 + $0x3f] sm:$0xff]
      %v3243 = vld [vmem:[#allocation3 + $0x47] sm:$0xff]
      %v3244 = vld [vmem:[#allocation3 + $0x4f] sm:$0xff]
      %v3245 = vld [vmem:[#allocation3 + $0x57] sm:$0xff]
      %v3246 = vld [vmem:[#allocation3 + $0x5f] sm:$0xff]
      %v3247 = vld [vmem:[#allocation3 + $0x67] sm:$0xff]
      %v3248 = vld [vmem:[#allocation3 + $0x6f] sm:$0xff]
      %v3249 = vld [vmem:[#allocation3 + $0x77] sm:$0xff]
      %v3250 = vld [vmem:[#allocation3 + $0x7f] sm:$0xff]
      %v3251 = vld [vmem:[#allocation3 + $0x87] sm:$0xff]
      %v3252 = vld [vmem:[#allocation3 + $0x8f] sm:$0xff]
      %v3253 = vld [vmem:[#allocation3 + $0x97] sm:$0xff]
      %v3254 = vld [vmem:[#allocation3 + $0x9f] sm:$0xff]
      %v3255 = vld [vmem:[#allocation3 + $0xa7] sm:$0xff]
      %v3256 = vld [vmem:[#allocation3 + $0xaf] sm:$0xff]
      %v3257 = vld [vmem:[#allocation3 + $0xb7] sm:$0xff]
      %v3258 = vld [vmem:[#allocation3 + $0xbf] sm:$0xff]
      %v3259 = vld [vmem:[#allocation3 + $0xc7] sm:$0xff]
      %v3260 = vld [vmem:[#allocation3 + $0xcf] sm:$0xff]
      %v3261 = vld [vmem:[#allocation3 + $0xd7] sm:$0xff]
      %v3262 = vld [vmem:[#allocation3 + $0xdf] sm:$0xff]
      %v3263 = vld [vmem:[#allocation3 + $0xe7] sm:$0xff]
      %v3264 = vld [vmem:[#allocation3 + $0xef] sm:$0xff]
      %v3265 = vld [vmem:[#allocation3 + $0xf7] sm:$0xff]
      %v3266 = vld [vmem:[#allocation3 + $0xff] sm:$0xff]
      %v3267 = vld [vmem:[%s4] sm:$0xf]
      %v3268 = vld [vmem:[#allocation3 + $0x107] sm:$0xff]
      %v3269 = vld [vmem:[#allocation3 + $0x10f] sm:$0xff]
      %s3270 = scalar_lea.vmem %s4, 12
      %v3271 = vld [vmem:[%s3270] sm:$0xf]
      %v3273 = vsel %vm307, %v3237, 0
      %v3276 = vsel %vm307, %v3238, 0
      %v3279 = vsel %vm307, %v3239, 0
      %v3282 = vsel %vm307, %v3240, 0
      %v3285 = vsel %vm307, %v3241, 0
      %v3288 = vsel %vm307, %v3242, 0
      %v3291 = vsel %vm307, %v3243, 0
      %v3294 = vsel %vm307, %v3244, 0
      %v3297 = vsel %vm307, %v3245, 0
      %v3300 = vsel %vm307, %v3246, 0
      %v3303 = vsel %vm307, %v3247, 0
      %v3306 = vsel %vm307, %v3248, 0
      %v3309 = vsel %vm307, %v3249, 0
      %v3312 = vsel %vm307, %v3250, 0
      %v3315 = vsel %vm307, %v3251, 0
      %v3318 = vsel %vm307, %v3252, 0
      %v3321 = vsel %vm307, %v3253, 0
      %v3324 = vsel %vm307, %v3254, 0
      %v3327 = vsel %vm307, %v3255, 0
      %v3330 = vsel %vm307, %v3256, 0
      %v3333 = vsel %vm307, %v3257, 0
      %v3336 = vsel %vm307, %v3258, 0
      %v3339 = vsel %vm307, %v3259, 0
      %v3342 = vsel %vm307, %v3260, 0
      %v3345 = vsel %vm307, %v3261, 0
      %v3348 = vsel %vm307, %v3262, 0
      %v3351 = vsel %vm307, %v3263, 0
      %v3354 = vsel %vm307, %v3264, 0
      %v3357 = vsel %vm307, %v3265, 0
      %v3360 = vsel %vm307, %v3266, 0
      %v3363 = vsel %vm307, %v3268, 0
      %v3366 = vsel %vm307, %v3269, 0
      %v3369 = vsel %vm998, %v3271, 0
      %3371 = vmatpush.msra.mxu0 0.0
      %3372 = vmatpush.msra.mxu0 0.0
      %3373 = vmatpush.msra.mxu0 0.0
      %3374 = vmatpush.msra.mxu0 0.0
      %3375 = vmatpush.msra.mxu0 0.0
      %3376 = vmatpush.msra.mxu0 0.0
      %3377 = vmatpush.msra.mxu0 0.0
      %3378 = vmatpush.msra.mxu0 0.0
      %3379 = vmatpush.msra.mxu0 0.0
      %3380 = vmatpush.msra.mxu0 0.0
      %3381 = vmatpush.msra.mxu0 0.0
      %3382 = vmatpush.msra.mxu0 0.0
      %3383 = vmatpush.msra.mxu0 0.0
      %3384 = vmatpush.msra.mxu0 0.0
      %3385 = vmatpush.msra.mxu0 0.0
      %3386 = vmatpush.msra.mxu0 %v3369
      %3387 = vmatmul.f32.gmra.mxu0 %v3273
      %v3388 = vpop.f32.mrf.mxu0
      %v3389 = vadd.f32 0.0, %v3388
      %3390 = vmatmul.f32.gmra.mxu0 %v3276
      %v3391 = vpop.f32.mrf.mxu0
      %v3392 = vadd.f32 0.0, %v3391
      %3393 = vmatmul.f32.gmra.mxu0 %v3279
      %v3394 = vpop.f32.mrf.mxu0
      %v3395 = vadd.f32 0.0, %v3394
      %3396 = vmatmul.f32.gmra.mxu0 %v3282
      %v3397 = vpop.f32.mrf.mxu0
      %v3398 = vadd.f32 0.0, %v3397
      %3399 = vmatmul.f32.gmra.mxu0 %v3285
      %v3400 = vpop.f32.mrf.mxu0
      %v3401 = vadd.f32 0.0, %v3400
      %3402 = vmatmul.f32.gmra.mxu0 %v3288
      %v3403 = vpop.f32.mrf.mxu0
      %v3404 = vadd.f32 0.0, %v3403
      %3405 = vmatmul.f32.gmra.mxu0 %v3291
      %v3406 = vpop.f32.mrf.mxu0
      %v3407 = vadd.f32 0.0, %v3406
      %3408 = vmatmul.f32.gmra.mxu0 %v3294
      %v3409 = vpop.f32.mrf.mxu0
      %v3410 = vadd.f32 0.0, %v3409
      %3411 = vmatmul.f32.gmra.mxu0 %v3297
      %v3412 = vpop.f32.mrf.mxu0
      %v3413 = vadd.f32 0.0, %v3412
      %3414 = vmatmul.f32.gmra.mxu0 %v3300
      %v3415 = vpop.f32.mrf.mxu0
      %v3416 = vadd.f32 0.0, %v3415
      %3417 = vmatmul.f32.gmra.mxu0 %v3303
      %v3418 = vpop.f32.mrf.mxu0
      %v3419 = vadd.f32 0.0, %v3418
      %3420 = vmatmul.f32.gmra.mxu0 %v3306
      %v3421 = vpop.f32.mrf.mxu0
      %v3422 = vadd.f32 0.0, %v3421
      %3423 = vmatmul.f32.gmra.mxu0 %v3309
      %v3424 = vpop.f32.mrf.mxu0
      %v3425 = vadd.f32 0.0, %v3424
      %3426 = vmatmul.f32.gmra.mxu0 %v3312
      %v3427 = vpop.f32.mrf.mxu0
      %v3428 = vadd.f32 0.0, %v3427
      %3429 = vmatmul.f32.gmra.mxu0 %v3315
      %v3430 = vpop.f32.mrf.mxu0
      %v3431 = vadd.f32 0.0, %v3430
      %3432 = vmatmul.f32.gmra.mxu0 %v3318
      %v3433 = vpop.f32.mrf.mxu0
      %v3434 = vadd.f32 0.0, %v3433
      %3435 = vmatmul.f32.gmra.mxu0 %v3321
      %v3436 = vpop.f32.mrf.mxu0
      %v3437 = vadd.f32 0.0, %v3436
      %3438 = vmatmul.f32.gmra.mxu0 %v3324
      %v3439 = vpop.f32.mrf.mxu0
      %v3440 = vadd.f32 0.0, %v3439
      %3441 = vmatmul.f32.gmra.mxu0 %v3327
      %v3442 = vpop.f32.mrf.mxu0
      %v3443 = vadd.f32 0.0, %v3442
      %3444 = vmatmul.f32.gmra.mxu0 %v3330
      %v3445 = vpop.f32.mrf.mxu0
      %v3446 = vadd.f32 0.0, %v3445
      %3447 = vmatmul.f32.gmra.mxu0 %v3333
      %v3448 = vpop.f32.mrf.mxu0
      %v3449 = vadd.f32 0.0, %v3448
      %3450 = vmatmul.f32.gmra.mxu0 %v3336
      %v3451 = vpop.f32.mrf.mxu0
      %v3452 = vadd.f32 0.0, %v3451
      %3453 = vmatmul.f32.gmra.mxu0 %v3339
      %v3454 = vpop.f32.mrf.mxu0
      %v3455 = vadd.f32 0.0, %v3454
      %3456 = vmatmul.f32.gmra.mxu0 %v3342
      %v3457 = vpop.f32.mrf.mxu0
      %v3458 = vadd.f32 0.0, %v3457
      %3459 = vmatmul.f32.gmra.mxu0 %v3345
      %v3460 = vpop.f32.mrf.mxu0
      %v3461 = vadd.f32 0.0, %v3460
      %3462 = vmatmul.f32.gmra.mxu0 %v3348
      %v3463 = vpop.f32.mrf.mxu0
      %v3464 = vadd.f32 0.0, %v3463
      %3465 = vmatmul.f32.gmra.mxu0 %v3351
      %v3466 = vpop.f32.mrf.mxu0
      %v3467 = vadd.f32 0.0, %v3466
      %3468 = vmatmul.f32.gmra.mxu0 %v3354
      %v3469 = vpop.f32.mrf.mxu0
      %v3470 = vadd.f32 0.0, %v3469
      %3471 = vmatmul.f32.gmra.mxu0 %v3357
      %v3472 = vpop.f32.mrf.mxu0
      %v3473 = vadd.f32 0.0, %v3472
      %3474 = vmatmul.f32.gmra.mxu0 %v3360
      %v3475 = vpop.f32.mrf.mxu0
      %v3476 = vadd.f32 0.0, %v3475
      %3477 = vmatmul.f32.gmra.mxu0 %v3363
      %v3478 = vpop.f32.mrf.mxu0
      %v3479 = vadd.f32 0.0, %v3478
      %3480 = vmatmul.f32.gmra.mxu0 %v3366
      %v3481 = vpop.f32.mrf.mxu0
      %v3482 = vadd.f32 0.0, %v3481
      %3483 = vdwg.mxu0
      %v3485 = vsel %vm307, %v3235, 0
      %v3488 = vsel %vm307, %v3236, 0
      %v3491 = vsel %vm998, %v3267, 0
      %3493 = vmatpush.msra.mxu0 0.0
      %3494 = vmatpush.msra.mxu0 0.0
      %3495 = vmatpush.msra.mxu0 0.0
      %3496 = vmatpush.msra.mxu0 0.0
      %3497 = vmatpush.msra.mxu0 0.0
      %3498 = vmatpush.msra.mxu0 0.0
      %3499 = vmatpush.msra.mxu0 0.0
      %3500 = vmatpush.msra.mxu0 0.0
      %3501 = vmatpush.msra.mxu0 0.0
      %3502 = vmatpush.msra.mxu0 0.0
      %3503 = vmatpush.msra.mxu0 0.0
      %3504 = vmatpush.msra.mxu0 0.0
      %3505 = vmatpush.msra.mxu0 0.0
      %3506 = vmatpush.msra.mxu0 0.0
      %3507 = vmatpush.msra.mxu0 0.0
      %3508 = vmatpush.msra.mxu0 %v3491
      %3509 = vmatmul.f32.gmra.mxu0 %v3485
      %v3510 = vpop.f32.mrf.mxu0
      %v3511 = vadd.f32 %v3389, %v3510
      %3512 = vmatmul.f32.gmra.mxu0 %v3488
      %v3513 = vpop.f32.mrf.mxu0
      %v3514 = vadd.f32 %v3392, %v3513
      %3515 = vmatmul.f32.gmra.mxu0 %v3273
      %v3516 = vpop.f32.mrf.mxu0
      %v3517 = vadd.f32 %v3395, %v3516
      %3518 = vmatmul.f32.gmra.mxu0 %v3276
      %v3519 = vpop.f32.mrf.mxu0
      %v3520 = vadd.f32 %v3398, %v3519
      %3521 = vmatmul.f32.gmra.mxu0 %v3279
      %v3522 = vpop.f32.mrf.mxu0
      %v3523 = vadd.f32 %v3401, %v3522
      %3524 = vmatmul.f32.gmra.mxu0 %v3282
      %v3525 = vpop.f32.mrf.mxu0
      %v3526 = vadd.f32 %v3404, %v3525
      %3527 = vmatmul.f32.gmra.mxu0 %v3285
      %v3528 = vpop.f32.mrf.mxu0
      %v3529 = vadd.f32 %v3407, %v3528
      %3530 = vmatmul.f32.gmra.mxu0 %v3288
      %v3531 = vpop.f32.mrf.mxu0
      %v3532 = vadd.f32 %v3410, %v3531
      %3533 = vmatmul.f32.gmra.mxu0 %v3291
      %v3534 = vpop.f32.mrf.mxu0
      %v3535 = vadd.f32 %v3413, %v3534
      %3536 = vmatmul.f32.gmra.mxu0 %v3294
      %v3537 = vpop.f32.mrf.mxu0
      %v3538 = vadd.f32 %v3416, %v3537
      %3539 = vmatmul.f32.gmra.mxu0 %v3297
      %v3540 = vpop.f32.mrf.mxu0
      %v3541 = vadd.f32 %v3419, %v3540
      %3542 = vmatmul.f32.gmra.mxu0 %v3300
      %v3543 = vpop.f32.mrf.mxu0
      %v3544 = vadd.f32 %v3422, %v3543
      %3545 = vmatmul.f32.gmra.mxu0 %v3303
      %v3546 = vpop.f32.mrf.mxu0
      %v3547 = vadd.f32 %v3425, %v3546
      %3548 = vmatmul.f32.gmra.mxu0 %v3306
      %v3549 = vpop.f32.mrf.mxu0
      %v3550 = vadd.f32 %v3428, %v3549
      %3551 = vmatmul.f32.gmra.mxu0 %v3309
      %v3552 = vpop.f32.mrf.mxu0
      %v3553 = vadd.f32 %v3431, %v3552
      %3554 = vmatmul.f32.gmra.mxu0 %v3312
      %v3555 = vpop.f32.mrf.mxu0
      %v3556 = vadd.f32 %v3434, %v3555
      %3557 = vmatmul.f32.gmra.mxu0 %v3315
      %v3558 = vpop.f32.mrf.mxu0
      %v3559 = vadd.f32 %v3437, %v3558
      %3560 = vmatmul.f32.gmra.mxu0 %v3318
      %v3561 = vpop.f32.mrf.mxu0
      %v3562 = vadd.f32 %v3440, %v3561
      %3563 = vmatmul.f32.gmra.mxu0 %v3321
      %v3564 = vpop.f32.mrf.mxu0
      %v3565 = vadd.f32 %v3443, %v3564
      %3566 = vmatmul.f32.gmra.mxu0 %v3324
      %v3567 = vpop.f32.mrf.mxu0
      %v3568 = vadd.f32 %v3446, %v3567
      %3569 = vmatmul.f32.gmra.mxu0 %v3327
      %v3570 = vpop.f32.mrf.mxu0
      %v3571 = vadd.f32 %v3449, %v3570
      %3572 = vmatmul.f32.gmra.mxu0 %v3330
      %v3573 = vpop.f32.mrf.mxu0
      %v3574 = vadd.f32 %v3452, %v3573
      %3575 = vmatmul.f32.gmra.mxu0 %v3333
      %v3576 = vpop.f32.mrf.mxu0
      %v3577 = vadd.f32 %v3455, %v3576
      %3578 = vmatmul.f32.gmra.mxu0 %v3336
      %v3579 = vpop.f32.mrf.mxu0
      %v3580 = vadd.f32 %v3458, %v3579
      %3581 = vmatmul.f32.gmra.mxu0 %v3339
      %v3582 = vpop.f32.mrf.mxu0
      %v3583 = vadd.f32 %v3461, %v3582
      %3584 = vmatmul.f32.gmra.mxu0 %v3342
      %v3585 = vpop.f32.mrf.mxu0
      %v3586 = vadd.f32 %v3464, %v3585
      %3587 = vmatmul.f32.gmra.mxu0 %v3345
      %v3588 = vpop.f32.mrf.mxu0
      %v3589 = vadd.f32 %v3467, %v3588
      %3590 = vmatmul.f32.gmra.mxu0 %v3348
      %v3591 = vpop.f32.mrf.mxu0
      %v3592 = vadd.f32 %v3470, %v3591
      %3593 = vmatmul.f32.gmra.mxu0 %v3351
      %v3594 = vpop.f32.mrf.mxu0
      %v3595 = vadd.f32 %v3473, %v3594
      %3596 = vmatmul.f32.gmra.mxu0 %v3354
      %v3597 = vpop.f32.mrf.mxu0
      %v3598 = vadd.f32 %v3476, %v3597
      %3599 = vmatmul.f32.gmra.mxu0 %v3357
      %v3600 = vpop.f32.mrf.mxu0
      %v3601 = vadd.f32 %v3479, %v3600
      %3602 = vmatmul.f32.gmra.mxu0 %v3360
      %v3603 = vpop.f32.mrf.mxu0
      %v3604 = vadd.f32 %v3482, %v3603
      %3605 = vdwg.mxu0
      %v3606 = vld [vmem:[#allocation3 + $0x27] sm:$0xff]
      %v3607 = vld [vmem:[#allocation3 + $0x2f] sm:$0xff]
      %v3608 = vld [vmem:[#allocation3 + $0x37] sm:$0xff]
      %v3609 = vld [vmem:[#allocation3 + $0x3f] sm:$0xff]
      %v3610 = vld [vmem:[#allocation3 + $0x47] sm:$0xff]
      %v3611 = vld [vmem:[#allocation3 + $0x4f] sm:$0xff]
      %v3612 = vld [vmem:[#allocation3 + $0x57] sm:$0xff]
      %v3613 = vld [vmem:[#allocation3 + $0x5f] sm:$0xff]
      %v3614 = vld [vmem:[#allocation3 + $0x67] sm:$0xff]
      %v3615 = vld [vmem:[#allocation3 + $0x6f] sm:$0xff]
      %v3616 = vld [vmem:[#allocation3 + $0x77] sm:$0xff]
      %v3617 = vld [vmem:[#allocation3 + $0x7f] sm:$0xff]
      %v3618 = vld [vmem:[#allocation3 + $0x87] sm:$0xff]
      %v3619 = vld [vmem:[#allocation3 + $0x8f] sm:$0xff]
      %v3620 = vld [vmem:[#allocation3 + $0x97] sm:$0xff]
      %v3621 = vld [vmem:[#allocation3 + $0x9f] sm:$0xff]
      %v3622 = vld [vmem:[#allocation3 + $0xa7] sm:$0xff]
      %v3623 = vld [vmem:[#allocation3 + $0xaf] sm:$0xff]
      %v3624 = vld [vmem:[#allocation3 + $0xb7] sm:$0xff]
      %v3625 = vld [vmem:[#allocation3 + $0xbf] sm:$0xff]
      %v3626 = vld [vmem:[#allocation3 + $0xc7] sm:$0xff]
      %v3627 = vld [vmem:[#allocation3 + $0xcf] sm:$0xff]
      %v3628 = vld [vmem:[#allocation3 + $0xd7] sm:$0xff]
      %v3629 = vld [vmem:[#allocation3 + $0xdf] sm:$0xff]
      %v3630 = vld [vmem:[#allocation3 + $0xe7] sm:$0xff]
      %v3631 = vld [vmem:[#allocation3 + $0xef] sm:$0xff]
      %v3632 = vld [vmem:[#allocation3 + $0xf7] sm:$0xff]
      %v3633 = vld [vmem:[#allocation3 + $0xff] sm:$0xff]
      %v3634 = vld [vmem:[#allocation3 + $0x107] sm:$0xff]
      %v3635 = vld [vmem:[#allocation3 + $0x10f] sm:$0xff]
      %v3636 = vld [vmem:[#allocation3 + $0x117] sm:$0xff]
      %v3637 = vld [vmem:[#allocation3 + $0x11f] sm:$0xff]
      %s3638 = scalar_lea.vmem %s4, 24
      %v3639 = vld [vmem:[%s3638] sm:$0xf]
      %v3641 = vsel %vm307, %v3606, 0
      %v3644 = vsel %vm307, %v3607, 0
      %v3647 = vsel %vm307, %v3608, 0
      %v3650 = vsel %vm307, %v3609, 0
      %v3653 = vsel %vm307, %v3610, 0
      %v3656 = vsel %vm307, %v3611, 0
      %v3659 = vsel %vm307, %v3612, 0
      %v3662 = vsel %vm307, %v3613, 0
      %v3665 = vsel %vm307, %v3614, 0
      %v3668 = vsel %vm307, %v3615, 0
      %v3671 = vsel %vm307, %v3616, 0
      %v3674 = vsel %vm307, %v3617, 0
      %v3677 = vsel %vm307, %v3618, 0
      %v3680 = vsel %vm307, %v3619, 0
      %v3683 = vsel %vm307, %v3620, 0
      %v3686 = vsel %vm307, %v3621, 0
      %v3689 = vsel %vm307, %v3622, 0
      %v3692 = vsel %vm307, %v3623, 0
      %v3695 = vsel %vm307, %v3624, 0
      %v3698 = vsel %vm307, %v3625, 0
      %v3701 = vsel %vm307, %v3626, 0
      %v3704 = vsel %vm307, %v3627, 0
      %v3707 = vsel %vm307, %v3628, 0
      %v3710 = vsel %vm307, %v3629, 0
      %v3713 = vsel %vm307, %v3630, 0
      %v3716 = vsel %vm307, %v3631, 0
      %v3719 = vsel %vm307, %v3632, 0
      %v3722 = vsel %vm307, %v3633, 0
      %v3725 = vsel %vm307, %v3634, 0
      %v3728 = vsel %vm307, %v3635, 0
      %v3731 = vsel %vm307, %v3636, 0
      %v3734 = vsel %vm307, %v3637, 0
      %v3737 = vsel %vm998, %v3639, 0
      %3739 = vmatpush.msra.mxu0 0.0
      %3740 = vmatpush.msra.mxu0 0.0
      %3741 = vmatpush.msra.mxu0 0.0
      %3742 = vmatpush.msra.mxu0 0.0
      %3743 = vmatpush.msra.mxu0 0.0
      %3744 = vmatpush.msra.mxu0 0.0
      %3745 = vmatpush.msra.mxu0 0.0
      %3746 = vmatpush.msra.mxu0 0.0
      %3747 = vmatpush.msra.mxu0 0.0
      %3748 = vmatpush.msra.mxu0 0.0
      %3749 = vmatpush.msra.mxu0 0.0
      %3750 = vmatpush.msra.mxu0 0.0
      %3751 = vmatpush.msra.mxu0 0.0
      %3752 = vmatpush.msra.mxu0 0.0
      %3753 = vmatpush.msra.mxu0 0.0
      %3754 = vmatpush.msra.mxu0 %v3737
      %3755 = vmatmul.f32.gmra.mxu0 %v3641
      %v3756 = vpop.f32.mrf.mxu0
      %v3757 = vadd.f32 0.0, %v3756
      %3758 = vmatmul.f32.gmra.mxu0 %v3644
      %v3759 = vpop.f32.mrf.mxu0
      %v3760 = vadd.f32 0.0, %v3759
      %3761 = vmatmul.f32.gmra.mxu0 %v3647
      %v3762 = vpop.f32.mrf.mxu0
      %v3763 = vadd.f32 0.0, %v3762
      %3764 = vmatmul.f32.gmra.mxu0 %v3650
      %v3765 = vpop.f32.mrf.mxu0
      %v3766 = vadd.f32 0.0, %v3765
      %3767 = vmatmul.f32.gmra.mxu0 %v3653
      %v3768 = vpop.f32.mrf.mxu0
      %v3769 = vadd.f32 0.0, %v3768
      %3770 = vmatmul.f32.gmra.mxu0 %v3656
      %v3771 = vpop.f32.mrf.mxu0
      %v3772 = vadd.f32 0.0, %v3771
      %3773 = vmatmul.f32.gmra.mxu0 %v3659
      %v3774 = vpop.f32.mrf.mxu0
      %v3775 = vadd.f32 0.0, %v3774
      %3776 = vmatmul.f32.gmra.mxu0 %v3662
      %v3777 = vpop.f32.mrf.mxu0
      %v3778 = vadd.f32 0.0, %v3777
      %3779 = vmatmul.f32.gmra.mxu0 %v3665
      %v3780 = vpop.f32.mrf.mxu0
      %v3781 = vadd.f32 0.0, %v3780
      %3782 = vmatmul.f32.gmra.mxu0 %v3668
      %v3783 = vpop.f32.mrf.mxu0
      %v3784 = vadd.f32 0.0, %v3783
      %3785 = vmatmul.f32.gmra.mxu0 %v3671
      %v3786 = vpop.f32.mrf.mxu0
      %v3787 = vadd.f32 0.0, %v3786
      %3788 = vmatmul.f32.gmra.mxu0 %v3674
      %v3789 = vpop.f32.mrf.mxu0
      %v3790 = vadd.f32 0.0, %v3789
      %3791 = vmatmul.f32.gmra.mxu0 %v3677
      %v3792 = vpop.f32.mrf.mxu0
      %v3793 = vadd.f32 0.0, %v3792
      %3794 = vmatmul.f32.gmra.mxu0 %v3680
      %v3795 = vpop.f32.mrf.mxu0
      %v3796 = vadd.f32 0.0, %v3795
      %3797 = vmatmul.f32.gmra.mxu0 %v3683
      %v3798 = vpop.f32.mrf.mxu0
      %v3799 = vadd.f32 0.0, %v3798
      %3800 = vmatmul.f32.gmra.mxu0 %v3686
      %v3801 = vpop.f32.mrf.mxu0
      %v3802 = vadd.f32 0.0, %v3801
      %3803 = vmatmul.f32.gmra.mxu0 %v3689
      %v3804 = vpop.f32.mrf.mxu0
      %v3805 = vadd.f32 0.0, %v3804
      %3806 = vmatmul.f32.gmra.mxu0 %v3692
      %v3807 = vpop.f32.mrf.mxu0
      %v3808 = vadd.f32 0.0, %v3807
      %3809 = vmatmul.f32.gmra.mxu0 %v3695
      %v3810 = vpop.f32.mrf.mxu0
      %v3811 = vadd.f32 0.0, %v3810
      %3812 = vmatmul.f32.gmra.mxu0 %v3698
      %v3813 = vpop.f32.mrf.mxu0
      %v3814 = vadd.f32 0.0, %v3813
      %3815 = vmatmul.f32.gmra.mxu0 %v3701
      %v3816 = vpop.f32.mrf.mxu0
      %v3817 = vadd.f32 0.0, %v3816
      %3818 = vmatmul.f32.gmra.mxu0 %v3704
      %v3819 = vpop.f32.mrf.mxu0
      %v3820 = vadd.f32 0.0, %v3819
      %3821 = vmatmul.f32.gmra.mxu0 %v3707
      %v3822 = vpop.f32.mrf.mxu0
      %v3823 = vadd.f32 0.0, %v3822
      %3824 = vmatmul.f32.gmra.mxu0 %v3710
      %v3825 = vpop.f32.mrf.mxu0
      %v3826 = vadd.f32 0.0, %v3825
      %3827 = vmatmul.f32.gmra.mxu0 %v3713
      %v3828 = vpop.f32.mrf.mxu0
      %v3829 = vadd.f32 0.0, %v3828
      %3830 = vmatmul.f32.gmra.mxu0 %v3716
      %v3831 = vpop.f32.mrf.mxu0
      %v3832 = vadd.f32 0.0, %v3831
      %3833 = vmatmul.f32.gmra.mxu0 %v3719
      %v3834 = vpop.f32.mrf.mxu0
      %v3835 = vadd.f32 0.0, %v3834
      %3836 = vmatmul.f32.gmra.mxu0 %v3722
      %v3837 = vpop.f32.mrf.mxu0
      %v3838 = vadd.f32 0.0, %v3837
      %3839 = vmatmul.f32.gmra.mxu0 %v3725
      %v3840 = vpop.f32.mrf.mxu0
      %v3841 = vadd.f32 0.0, %v3840
      %3842 = vmatmul.f32.gmra.mxu0 %v3728
      %v3843 = vpop.f32.mrf.mxu0
      %v3844 = vadd.f32 0.0, %v3843
      %3845 = vmatmul.f32.gmra.mxu0 %v3731
      %v3846 = vpop.f32.mrf.mxu0
      %v3847 = vadd.f32 0.0, %v3846
      %3848 = vmatmul.f32.gmra.mxu0 %v3734
      %v3849 = vpop.f32.mrf.mxu0
      %v3850 = vadd.f32 0.0, %v3849
      %3851 = vdwg.mxu0
      %v3852 = vadd.f32 %v3511, %v3757
      %v3853 = vadd.f32 %v3514, %v3760
      %v3854 = vadd.f32 %v3517, %v3763
      %v3855 = vadd.f32 %v3520, %v3766
      %v3856 = vadd.f32 %v3523, %v3769
      %v3857 = vadd.f32 %v3526, %v3772
      %v3858 = vadd.f32 %v3529, %v3775
      %v3859 = vadd.f32 %v3532, %v3778
      %v3860 = vadd.f32 %v3535, %v3781
      %v3861 = vadd.f32 %v3538, %v3784
      %v3862 = vadd.f32 %v3541, %v3787
      %v3863 = vadd.f32 %v3544, %v3790
      %v3864 = vadd.f32 %v3547, %v3793
      %v3865 = vadd.f32 %v3550, %v3796
      %v3866 = vadd.f32 %v3553, %v3799
      %v3867 = vadd.f32 %v3556, %v3802
      %v3868 = vadd.f32 %v3559, %v3805
      %v3869 = vadd.f32 %v3562, %v3808
      %v3870 = vadd.f32 %v3565, %v3811
      %v3871 = vadd.f32 %v3568, %v3814
      %v3872 = vadd.f32 %v3571, %v3817
      %v3873 = vadd.f32 %v3574, %v3820
      %v3874 = vadd.f32 %v3577, %v3823
      %v3875 = vadd.f32 %v3580, %v3826
      %v3876 = vadd.f32 %v3583, %v3829
      %v3877 = vadd.f32 %v3586, %v3832
      %v3878 = vadd.f32 %v3589, %v3835
      %v3879 = vadd.f32 %v3592, %v3838
      %v3880 = vadd.f32 %v3595, %v3841
      %v3881 = vadd.f32 %v3598, %v3844
      %v3882 = vadd.f32 %v3601, %v3847
      %v3883 = vadd.f32 %v3604, %v3850
      %v3884 = vsel %vm1547, %v3852, 0.0
      %v3885 = vsel %vm1548, %v3853, 0.0
      %v3886 = vsel %vm1549, %v3854, 0.0
      %v3887 = vsel %vm1550, %v3855, 0.0
      %v3888 = vsel %vm1551, %v3856, 0.0
      %v3889 = vsel %vm1552, %v3857, 0.0
      %v3890 = vsel %vm1553, %v3858, 0.0
      %v3891 = vsel %vm1554, %v3859, 0.0
      %v3892 = vsel %vm1555, %v3860, 0.0
      %v3893 = vsel %vm1556, %v3861, 0.0
      %v3894 = vsel %vm1557, %v3862, 0.0
      %v3895 = vsel %vm1558, %v3863, 0.0
      %v3896 = vsel %vm1559, %v3864, 0.0
      %v3897 = vsel %vm1560, %v3865, 0.0
      %v3898 = vsel %vm1561, %v3866, 0.0
      %v3899 = vsel %vm1562, %v3867, 0.0
      %v3900 = vsel %vm1563, %v3868, 0.0
      %v3901 = vsel %vm1564, %v3869, 0.0
      %v3902 = vsel %vm1565, %v3870, 0.0
      %v3903 = vsel %vm1566, %v3871, 0.0
      %v3904 = vsel %vm1567, %v3872, 0.0
      %v3905 = vsel %vm1568, %v3873, 0.0
      %v3906 = vsel %vm1569, %v3874, 0.0
      %v3907 = vsel %vm1570, %v3875, 0.0
      %v3908 = vsel %vm1571, %v3876, 0.0
      %v3909 = vsel %vm1572, %v3877, 0.0
      %v3910 = vsel %vm1573, %v3878, 0.0
      %v3911 = vsel %vm1574, %v3879, 0.0
      %v3912 = vsel %vm1575, %v3880, 0.0
      %v3913 = vsel %vm1576, %v3881, 0.0
      %v3914 = vsel %vm1577, %v3882, 0.0
      %v3915 = vsel %vm1578, %v3883, 0.0
      %v3916 = vld [vmem:[#allocation3 + $0x8] sm:$0xff]
      %v3917 = vld [vmem:[#allocation3 + $0x10] sm:$0xff]
      %v3918 = vld [vmem:[#allocation3 + $0x18] sm:$0xff]
      %v3919 = vld [vmem:[#allocation3 + $0x20] sm:$0xff]
      %v3920 = vld [vmem:[#allocation3 + $0x28] sm:$0xff]
      %v3921 = vld [vmem:[#allocation3 + $0x30] sm:$0xff]
      %v3922 = vld [vmem:[#allocation3 + $0x38] sm:$0xff]
      %v3923 = vld [vmem:[#allocation3 + $0x40] sm:$0xff]
      %v3924 = vld [vmem:[#allocation3 + $0x48] sm:$0xff]
      %v3925 = vld [vmem:[#allocation3 + $0x50] sm:$0xff]
      %v3926 = vld [vmem:[#allocation3 + $0x58] sm:$0xff]
      %v3927 = vld [vmem:[#allocation3 + $0x60] sm:$0xff]
      %v3928 = vld [vmem:[#allocation3 + $0x68] sm:$0xff]
      %v3929 = vld [vmem:[#allocation3 + $0x70] sm:$0xff]
      %v3930 = vld [vmem:[#allocation3 + $0x78] sm:$0xff]
      %v3931 = vld [vmem:[#allocation3 + $0x80] sm:$0xff]
      %v3932 = vld [vmem:[#allocation3 + $0x88] sm:$0xff]
      %v3933 = vld [vmem:[#allocation3 + $0x90] sm:$0xff]
      %v3934 = vld [vmem:[#allocation3 + $0x98] sm:$0xff]
      %v3935 = vld [vmem:[#allocation3 + $0xa0] sm:$0xff]
      %v3936 = vld [vmem:[#allocation3 + $0xa8] sm:$0xff]
      %v3937 = vld [vmem:[#allocation3 + $0xb0] sm:$0xff]
      %v3938 = vld [vmem:[#allocation3 + $0xb8] sm:$0xff]
      %v3939 = vld [vmem:[#allocation3 + $0xc0] sm:$0xff]
      %v3940 = vld [vmem:[#allocation3 + $0xc8] sm:$0xff]
      %v3941 = vld [vmem:[#allocation3 + $0xd0] sm:$0xff]
      %v3942 = vld [vmem:[#allocation3 + $0xd8] sm:$0xff]
      %v3943 = vld [vmem:[#allocation3 + $0xe0] sm:$0xff]
      %v3944 = vld [vmem:[#allocation3 + $0xe8] sm:$0xff]
      %v3945 = vld [vmem:[#allocation3 + $0xf0] sm:$0xff]
      %v3946 = vld [vmem:[#allocation3 + $0xf8] sm:$0xff]
      %v3947 = vld [vmem:[#allocation3 + $0x100] sm:$0xff]
      %s3948 = scalar_lea.vmem %s4, 4
      %v3949 = vld [vmem:[%s3948] sm:$0xf]
      %v3950 = vld [vmem:[#allocation3 + $0x108] sm:$0xff]
      %v3951 = vld [vmem:[#allocation3 + $0x110] sm:$0xff]
      %s3952 = scalar_lea.vmem %s4, 16
      %v3953 = vld [vmem:[%s3952] sm:$0xf]
      %v3955 = vsel %vm307, %v3918, 0
      %v3958 = vsel %vm307, %v3919, 0
      %v3961 = vsel %vm307, %v3920, 0
      %v3964 = vsel %vm307, %v3921, 0
      %v3967 = vsel %vm307, %v3922, 0
      %v3970 = vsel %vm307, %v3923, 0
      %v3973 = vsel %vm307, %v3924, 0
      %v3976 = vsel %vm307, %v3925, 0
      %v3979 = vsel %vm307, %v3926, 0
      %v3982 = vsel %vm307, %v3927, 0
      %v3985 = vsel %vm307, %v3928, 0
      %v3988 = vsel %vm307, %v3929, 0
      %v3991 = vsel %vm307, %v3930, 0
      %v3994 = vsel %vm307, %v3931, 0
      %v3997 = vsel %vm307, %v3932, 0
      %v4000 = vsel %vm307, %v3933, 0
      %v4003 = vsel %vm307, %v3934, 0
      %v4006 = vsel %vm307, %v3935, 0
      %v4009 = vsel %vm307, %v3936, 0
      %v4012 = vsel %vm307, %v3937, 0
      %v4015 = vsel %vm307, %v3938, 0
      %v4018 = vsel %vm307, %v3939, 0
      %v4021 = vsel %vm307, %v3940, 0
      %v4024 = vsel %vm307, %v3941, 0
      %v4027 = vsel %vm307, %v3942, 0
      %v4030 = vsel %vm307, %v3943, 0
      %v4033 = vsel %vm307, %v3944, 0
      %v4036 = vsel %vm307, %v3945, 0
      %v4039 = vsel %vm307, %v3946, 0
      %v4042 = vsel %vm307, %v3947, 0
      %v4045 = vsel %vm307, %v3950, 0
      %v4048 = vsel %vm307, %v3951, 0
      %v4051 = vsel %vm998, %v3953, 0
      %4053 = vmatpush.msra.mxu0 0.0
      %4054 = vmatpush.msra.mxu0 0.0
      %4055 = vmatpush.msra.mxu0 0.0
      %4056 = vmatpush.msra.mxu0 0.0
      %4057 = vmatpush.msra.mxu0 0.0
      %4058 = vmatpush.msra.mxu0 0.0
      %4059 = vmatpush.msra.mxu0 0.0
      %4060 = vmatpush.msra.mxu0 0.0
      %4061 = vmatpush.msra.mxu0 0.0
      %4062 = vmatpush.msra.mxu0 0.0
      %4063 = vmatpush.msra.mxu0 0.0
      %4064 = vmatpush.msra.mxu0 0.0
      %4065 = vmatpush.msra.mxu0 0.0
      %4066 = vmatpush.msra.mxu0 0.0
      %4067 = vmatpush.msra.mxu0 0.0
      %4068 = vmatpush.msra.mxu0 %v4051
      %4069 = vmatmul.f32.gmra.mxu0 %v3955
      %v4070 = vpop.f32.mrf.mxu0
      %v4071 = vadd.f32 0.0, %v4070
      %4072 = vmatmul.f32.gmra.mxu0 %v3958
      %v4073 = vpop.f32.mrf.mxu0
      %v4074 = vadd.f32 0.0, %v4073
      %4075 = vmatmul.f32.gmra.mxu0 %v3961
      %v4076 = vpop.f32.mrf.mxu0
      %v4077 = vadd.f32 0.0, %v4076
      %4078 = vmatmul.f32.gmra.mxu0 %v3964
      %v4079 = vpop.f32.mrf.mxu0
      %v4080 = vadd.f32 0.0, %v4079
      %4081 = vmatmul.f32.gmra.mxu0 %v3967
      %v4082 = vpop.f32.mrf.mxu0
      %v4083 = vadd.f32 0.0, %v4082
      %4084 = vmatmul.f32.gmra.mxu0 %v3970
      %v4085 = vpop.f32.mrf.mxu0
      %v4086 = vadd.f32 0.0, %v4085
      %4087 = vmatmul.f32.gmra.mxu0 %v3973
      %v4088 = vpop.f32.mrf.mxu0
      %v4089 = vadd.f32 0.0, %v4088
      %4090 = vmatmul.f32.gmra.mxu0 %v3976
      %v4091 = vpop.f32.mrf.mxu0
      %v4092 = vadd.f32 0.0, %v4091
      %4093 = vmatmul.f32.gmra.mxu0 %v3979
      %v4094 = vpop.f32.mrf.mxu0
      %v4095 = vadd.f32 0.0, %v4094
      %4096 = vmatmul.f32.gmra.mxu0 %v3982
      %v4097 = vpop.f32.mrf.mxu0
      %v4098 = vadd.f32 0.0, %v4097
      %4099 = vmatmul.f32.gmra.mxu0 %v3985
      %v4100 = vpop.f32.mrf.mxu0
      %v4101 = vadd.f32 0.0, %v4100
      %4102 = vmatmul.f32.gmra.mxu0 %v3988
      %v4103 = vpop.f32.mrf.mxu0
      %v4104 = vadd.f32 0.0, %v4103
      %4105 = vmatmul.f32.gmra.mxu0 %v3991
      %v4106 = vpop.f32.mrf.mxu0
      %v4107 = vadd.f32 0.0, %v4106
      %4108 = vmatmul.f32.gmra.mxu0 %v3994
      %v4109 = vpop.f32.mrf.mxu0
      %v4110 = vadd.f32 0.0, %v4109
      %4111 = vmatmul.f32.gmra.mxu0 %v3997
      %v4112 = vpop.f32.mrf.mxu0
      %v4113 = vadd.f32 0.0, %v4112
      %4114 = vmatmul.f32.gmra.mxu0 %v4000
      %v4115 = vpop.f32.mrf.mxu0
      %v4116 = vadd.f32 0.0, %v4115
      %4117 = vmatmul.f32.gmra.mxu0 %v4003
      %v4118 = vpop.f32.mrf.mxu0
      %v4119 = vadd.f32 0.0, %v4118
      %4120 = vmatmul.f32.gmra.mxu0 %v4006
      %v4121 = vpop.f32.mrf.mxu0
      %v4122 = vadd.f32 0.0, %v4121
      %4123 = vmatmul.f32.gmra.mxu0 %v4009
      %v4124 = vpop.f32.mrf.mxu0
      %v4125 = vadd.f32 0.0, %v4124
      %4126 = vmatmul.f32.gmra.mxu0 %v4012
      %v4127 = vpop.f32.mrf.mxu0
      %v4128 = vadd.f32 0.0, %v4127
      %4129 = vmatmul.f32.gmra.mxu0 %v4015
      %v4130 = vpop.f32.mrf.mxu0
      %v4131 = vadd.f32 0.0, %v4130
      %4132 = vmatmul.f32.gmra.mxu0 %v4018
      %v4133 = vpop.f32.mrf.mxu0
      %v4134 = vadd.f32 0.0, %v4133
      %4135 = vmatmul.f32.gmra.mxu0 %v4021
      %v4136 = vpop.f32.mrf.mxu0
      %v4137 = vadd.f32 0.0, %v4136
      %4138 = vmatmul.f32.gmra.mxu0 %v4024
      %v4139 = vpop.f32.mrf.mxu0
      %v4140 = vadd.f32 0.0, %v4139
      %4141 = vmatmul.f32.gmra.mxu0 %v4027
      %v4142 = vpop.f32.mrf.mxu0
      %v4143 = vadd.f32 0.0, %v4142
      %4144 = vmatmul.f32.gmra.mxu0 %v4030
      %v4145 = vpop.f32.mrf.mxu0
      %v4146 = vadd.f32 0.0, %v4145
      %4147 = vmatmul.f32.gmra.mxu0 %v4033
      %v4148 = vpop.f32.mrf.mxu0
      %v4149 = vadd.f32 0.0, %v4148
      %4150 = vmatmul.f32.gmra.mxu0 %v4036
      %v4151 = vpop.f32.mrf.mxu0
      %v4152 = vadd.f32 0.0, %v4151
      %4153 = vmatmul.f32.gmra.mxu0 %v4039
      %v4154 = vpop.f32.mrf.mxu0
      %v4155 = vadd.f32 0.0, %v4154
      %4156 = vmatmul.f32.gmra.mxu0 %v4042
      %v4157 = vpop.f32.mrf.mxu0
      %v4158 = vadd.f32 0.0, %v4157
      %4159 = vmatmul.f32.gmra.mxu0 %v4045
      %v4160 = vpop.f32.mrf.mxu0
      %v4161 = vadd.f32 0.0, %v4160
      %4162 = vmatmul.f32.gmra.mxu0 %v4048
      %v4163 = vpop.f32.mrf.mxu0
      %v4164 = vadd.f32 0.0, %v4163
      %4165 = vdwg.mxu0
      %v4167 = vsel %vm307, %v3916, 0
      %v4170 = vsel %vm307, %v3917, 0
      %v4173 = vsel %vm998, %v3949, 0
      %4175 = vmatpush.msra.mxu0 0.0
      %4176 = vmatpush.msra.mxu0 0.0
      %4177 = vmatpush.msra.mxu0 0.0
      %4178 = vmatpush.msra.mxu0 0.0
      %4179 = vmatpush.msra.mxu0 0.0
      %4180 = vmatpush.msra.mxu0 0.0
      %4181 = vmatpush.msra.mxu0 0.0
      %4182 = vmatpush.msra.mxu0 0.0
      %4183 = vmatpush.msra.mxu0 0.0
      %4184 = vmatpush.msra.mxu0 0.0
      %4185 = vmatpush.msra.mxu0 0.0
      %4186 = vmatpush.msra.mxu0 0.0
      %4187 = vmatpush.msra.mxu0 0.0
      %4188 = vmatpush.msra.mxu0 0.0
      %4189 = vmatpush.msra.mxu0 0.0
      %4190 = vmatpush.msra.mxu0 %v4173
      %4191 = vmatmul.f32.gmra.mxu0 %v4167
      %v4192 = vpop.f32.mrf.mxu0
      %v4193 = vadd.f32 %v4071, %v4192
      %4194 = vmatmul.f32.gmra.mxu0 %v4170
      %v4195 = vpop.f32.mrf.mxu0
      %v4196 = vadd.f32 %v4074, %v4195
      %4197 = vmatmul.f32.gmra.mxu0 %v3955
      %v4198 = vpop.f32.mrf.mxu0
      %v4199 = vadd.f32 %v4077, %v4198
      %4200 = vmatmul.f32.gmra.mxu0 %v3958
      %v4201 = vpop.f32.mrf.mxu0
      %v4202 = vadd.f32 %v4080, %v4201
      %4203 = vmatmul.f32.gmra.mxu0 %v3961
      %v4204 = vpop.f32.mrf.mxu0
      %v4205 = vadd.f32 %v4083, %v4204
      %4206 = vmatmul.f32.gmra.mxu0 %v3964
      %v4207 = vpop.f32.mrf.mxu0
      %v4208 = vadd.f32 %v4086, %v4207
      %4209 = vmatmul.f32.gmra.mxu0 %v3967
      %v4210 = vpop.f32.mrf.mxu0
      %v4211 = vadd.f32 %v4089, %v4210
      %4212 = vmatmul.f32.gmra.mxu0 %v3970
      %v4213 = vpop.f32.mrf.mxu0
      %v4214 = vadd.f32 %v4092, %v4213
      %4215 = vmatmul.f32.gmra.mxu0 %v3973
      %v4216 = vpop.f32.mrf.mxu0
      %v4217 = vadd.f32 %v4095, %v4216
      %4218 = vmatmul.f32.gmra.mxu0 %v3976
      %v4219 = vpop.f32.mrf.mxu0
      %v4220 = vadd.f32 %v4098, %v4219
      %4221 = vmatmul.f32.gmra.mxu0 %v3979
      %v4222 = vpop.f32.mrf.mxu0
      %v4223 = vadd.f32 %v4101, %v4222
      %4224 = vmatmul.f32.gmra.mxu0 %v3982
      %v4225 = vpop.f32.mrf.mxu0
      %v4226 = vadd.f32 %v4104, %v4225
      %4227 = vmatmul.f32.gmra.mxu0 %v3985
      %v4228 = vpop.f32.mrf.mxu0
      %v4229 = vadd.f32 %v4107, %v4228
      %4230 = vmatmul.f32.gmra.mxu0 %v3988
      %v4231 = vpop.f32.mrf.mxu0
      %v4232 = vadd.f32 %v4110, %v4231
      %4233 = vmatmul.f32.gmra.mxu0 %v3991
      %v4234 = vpop.f32.mrf.mxu0
      %v4235 = vadd.f32 %v4113, %v4234
      %4236 = vmatmul.f32.gmra.mxu0 %v3994
      %v4237 = vpop.f32.mrf.mxu0
      %v4238 = vadd.f32 %v4116, %v4237
      %4239 = vmatmul.f32.gmra.mxu0 %v3997
      %v4240 = vpop.f32.mrf.mxu0
      %v4241 = vadd.f32 %v4119, %v4240
      %4242 = vmatmul.f32.gmra.mxu0 %v4000
      %v4243 = vpop.f32.mrf.mxu0
      %v4244 = vadd.f32 %v4122, %v4243
      %4245 = vmatmul.f32.gmra.mxu0 %v4003
      %v4246 = vpop.f32.mrf.mxu0
      %v4247 = vadd.f32 %v4125, %v4246
      %4248 = vmatmul.f32.gmra.mxu0 %v4006
      %v4249 = vpop.f32.mrf.mxu0
      %v4250 = vadd.f32 %v4128, %v4249
      %4251 = vmatmul.f32.gmra.mxu0 %v4009
      %v4252 = vpop.f32.mrf.mxu0
      %v4253 = vadd.f32 %v4131, %v4252
      %4254 = vmatmul.f32.gmra.mxu0 %v4012
      %v4255 = vpop.f32.mrf.mxu0
      %v4256 = vadd.f32 %v4134, %v4255
      %4257 = vmatmul.f32.gmra.mxu0 %v4015
      %v4258 = vpop.f32.mrf.mxu0
      %v4259 = vadd.f32 %v4137, %v4258
      %4260 = vmatmul.f32.gmra.mxu0 %v4018
      %v4261 = vpop.f32.mrf.mxu0
      %v4262 = vadd.f32 %v4140, %v4261
      %4263 = vmatmul.f32.gmra.mxu0 %v4021
      %v4264 = vpop.f32.mrf.mxu0
      %v4265 = vadd.f32 %v4143, %v4264
      %4266 = vmatmul.f32.gmra.mxu0 %v4024
      %v4267 = vpop.f32.mrf.mxu0
      %v4268 = vadd.f32 %v4146, %v4267
      %4269 = vmatmul.f32.gmra.mxu0 %v4027
      %v4270 = vpop.f32.mrf.mxu0
      %v4271 = vadd.f32 %v4149, %v4270
      %4272 = vmatmul.f32.gmra.mxu0 %v4030
      %v4273 = vpop.f32.mrf.mxu0
      %v4274 = vadd.f32 %v4152, %v4273
      %4275 = vmatmul.f32.gmra.mxu0 %v4033
      %v4276 = vpop.f32.mrf.mxu0
      %v4277 = vadd.f32 %v4155, %v4276
      %4278 = vmatmul.f32.gmra.mxu0 %v4036
      %v4279 = vpop.f32.mrf.mxu0
      %v4280 = vadd.f32 %v4158, %v4279
      %4281 = vmatmul.f32.gmra.mxu0 %v4039
      %v4282 = vpop.f32.mrf.mxu0
      %v4283 = vadd.f32 %v4161, %v4282
      %4284 = vmatmul.f32.gmra.mxu0 %v4042
      %v4285 = vpop.f32.mrf.mxu0
      %v4286 = vadd.f32 %v4164, %v4285
      %4287 = vdwg.mxu0
      %v4288 = vld [vmem:[#allocation3 + $0x28] sm:$0xff]
      %v4289 = vld [vmem:[#allocation3 + $0x30] sm:$0xff]
      %v4290 = vld [vmem:[#allocation3 + $0x38] sm:$0xff]
      %v4291 = vld [vmem:[#allocation3 + $0x40] sm:$0xff]
      %v4292 = vld [vmem:[#allocation3 + $0x48] sm:$0xff]
      %v4293 = vld [vmem:[#allocation3 + $0x50] sm:$0xff]
      %v4294 = vld [vmem:[#allocation3 + $0x58] sm:$0xff]
      %v4295 = vld [vmem:[#allocation3 + $0x60] sm:$0xff]
      %v4296 = vld [vmem:[#allocation3 + $0x68] sm:$0xff]
      %v4297 = vld [vmem:[#allocation3 + $0x70] sm:$0xff]
      %v4298 = vld [vmem:[#allocation3 + $0x78] sm:$0xff]
      %v4299 = vld [vmem:[#allocation3 + $0x80] sm:$0xff]
      %v4300 = vld [vmem:[#allocation3 + $0x88] sm:$0xff]
      %v4301 = vld [vmem:[#allocation3 + $0x90] sm:$0xff]
      %v4302 = vld [vmem:[#allocation3 + $0x98] sm:$0xff]
      %v4303 = vld [vmem:[#allocation3 + $0xa0] sm:$0xff]
      %v4304 = vld [vmem:[#allocation3 + $0xa8] sm:$0xff]
      %v4305 = vld [vmem:[#allocation3 + $0xb0] sm:$0xff]
      %v4306 = vld [vmem:[#allocation3 + $0xb8] sm:$0xff]
      %v4307 = vld [vmem:[#allocation3 + $0xc0] sm:$0xff]
      %v4308 = vld [vmem:[#allocation3 + $0xc8] sm:$0xff]
      %v4309 = vld [vmem:[#allocation3 + $0xd0] sm:$0xff]
      %v4310 = vld [vmem:[#allocation3 + $0xd8] sm:$0xff]
      %v4311 = vld [vmem:[#allocation3 + $0xe0] sm:$0xff]
      %v4312 = vld [vmem:[#allocation3 + $0xe8] sm:$0xff]
      %v4313 = vld [vmem:[#allocation3 + $0xf0] sm:$0xff]
      %v4314 = vld [vmem:[#allocation3 + $0xf8] sm:$0xff]
      %v4315 = vld [vmem:[#allocation3 + $0x100] sm:$0xff]
      %v4316 = vld [vmem:[#allocation3 + $0x108] sm:$0xff]
      %v4317 = vld [vmem:[#allocation3 + $0x110] sm:$0xff]
      %v4318 = vld [vmem:[#allocation3 + $0x118] sm:$0xff]
      %v4319 = vld [vmem:[#allocation3 + $0x120] sm:$0xff]
      %s4320 = scalar_lea.vmem %s4, 28
      %v4321 = vld [vmem:[%s4320] sm:$0xf]
      %v4323 = vsel %vm307, %v4288, 0
      %v4326 = vsel %vm307, %v4289, 0
      %v4329 = vsel %vm307, %v4290, 0
      %v4332 = vsel %vm307, %v4291, 0
      %v4335 = vsel %vm307, %v4292, 0
      %v4338 = vsel %vm307, %v4293, 0
      %v4341 = vsel %vm307, %v4294, 0
      %v4344 = vsel %vm307, %v4295, 0
      %v4347 = vsel %vm307, %v4296, 0
      %v4350 = vsel %vm307, %v4297, 0
      %v4353 = vsel %vm307, %v4298, 0
      %v4356 = vsel %vm307, %v4299, 0
      %v4359 = vsel %vm307, %v4300, 0
      %v4362 = vsel %vm307, %v4301, 0
      %v4365 = vsel %vm307, %v4302, 0
      %v4368 = vsel %vm307, %v4303, 0
      %v4371 = vsel %vm307, %v4304, 0
      %v4374 = vsel %vm307, %v4305, 0
      %v4377 = vsel %vm307, %v4306, 0
      %v4380 = vsel %vm307, %v4307, 0
      %v4383 = vsel %vm307, %v4308, 0
      %v4386 = vsel %vm307, %v4309, 0
      %v4389 = vsel %vm307, %v4310, 0
      %v4392 = vsel %vm307, %v4311, 0
      %v4395 = vsel %vm307, %v4312, 0
      %v4398 = vsel %vm307, %v4313, 0
      %v4401 = vsel %vm307, %v4314, 0
      %v4404 = vsel %vm307, %v4315, 0
      %v4407 = vsel %vm307, %v4316, 0
      %v4410 = vsel %vm307, %v4317, 0
      %v4413 = vsel %vm307, %v4318, 0
      %v4416 = vsel %vm307, %v4319, 0
      %v4419 = vsel %vm998, %v4321, 0
      %4421 = vmatpush.msra.mxu0 0.0
      %4422 = vmatpush.msra.mxu0 0.0
      %4423 = vmatpush.msra.mxu0 0.0
      %4424 = vmatpush.msra.mxu0 0.0
      %4425 = vmatpush.msra.mxu0 0.0
      %4426 = vmatpush.msra.mxu0 0.0
      %4427 = vmatpush.msra.mxu0 0.0
      %4428 = vmatpush.msra.mxu0 0.0
      %4429 = vmatpush.msra.mxu0 0.0
      %4430 = vmatpush.msra.mxu0 0.0
      %4431 = vmatpush.msra.mxu0 0.0
      %4432 = vmatpush.msra.mxu0 0.0
      %4433 = vmatpush.msra.mxu0 0.0
      %4434 = vmatpush.msra.mxu0 0.0
      %4435 = vmatpush.msra.mxu0 0.0
      %4436 = vmatpush.msra.mxu0 %v4419
      %4437 = vmatmul.f32.gmra.mxu0 %v4323
      %v4438 = vpop.f32.mrf.mxu0
      %v4439 = vadd.f32 0.0, %v4438
      %4440 = vmatmul.f32.gmra.mxu0 %v4326
      %v4441 = vpop.f32.mrf.mxu0
      %v4442 = vadd.f32 0.0, %v4441
      %4443 = vmatmul.f32.gmra.mxu0 %v4329
      %v4444 = vpop.f32.mrf.mxu0
      %v4445 = vadd.f32 0.0, %v4444
      %4446 = vmatmul.f32.gmra.mxu0 %v4332
      %v4447 = vpop.f32.mrf.mxu0
      %v4448 = vadd.f32 0.0, %v4447
      %4449 = vmatmul.f32.gmra.mxu0 %v4335
      %v4450 = vpop.f32.mrf.mxu0
      %v4451 = vadd.f32 0.0, %v4450
      %4452 = vmatmul.f32.gmra.mxu0 %v4338
      %v4453 = vpop.f32.mrf.mxu0
      %v4454 = vadd.f32 0.0, %v4453
      %4455 = vmatmul.f32.gmra.mxu0 %v4341
      %v4456 = vpop.f32.mrf.mxu0
      %v4457 = vadd.f32 0.0, %v4456
      %4458 = vmatmul.f32.gmra.mxu0 %v4344
      %v4459 = vpop.f32.mrf.mxu0
      %v4460 = vadd.f32 0.0, %v4459
      %4461 = vmatmul.f32.gmra.mxu0 %v4347
      %v4462 = vpop.f32.mrf.mxu0
      %v4463 = vadd.f32 0.0, %v4462
      %4464 = vmatmul.f32.gmra.mxu0 %v4350
      %v4465 = vpop.f32.mrf.mxu0
      %v4466 = vadd.f32 0.0, %v4465
      %4467 = vmatmul.f32.gmra.mxu0 %v4353
      %v4468 = vpop.f32.mrf.mxu0
      %v4469 = vadd.f32 0.0, %v4468
      %4470 = vmatmul.f32.gmra.mxu0 %v4356
      %v4471 = vpop.f32.mrf.mxu0
      %v4472 = vadd.f32 0.0, %v4471
      %4473 = vmatmul.f32.gmra.mxu0 %v4359
      %v4474 = vpop.f32.mrf.mxu0
      %v4475 = vadd.f32 0.0, %v4474
      %4476 = vmatmul.f32.gmra.mxu0 %v4362
      %v4477 = vpop.f32.mrf.mxu0
      %v4478 = vadd.f32 0.0, %v4477
      %4479 = vmatmul.f32.gmra.mxu0 %v4365
      %v4480 = vpop.f32.mrf.mxu0
      %v4481 = vadd.f32 0.0, %v4480
      %4482 = vmatmul.f32.gmra.mxu0 %v4368
      %v4483 = vpop.f32.mrf.mxu0
      %v4484 = vadd.f32 0.0, %v4483
      %4485 = vmatmul.f32.gmra.mxu0 %v4371
      %v4486 = vpop.f32.mrf.mxu0
      %v4487 = vadd.f32 0.0, %v4486
      %4488 = vmatmul.f32.gmra.mxu0 %v4374
      %v4489 = vpop.f32.mrf.mxu0
      %v4490 = vadd.f32 0.0, %v4489
      %4491 = vmatmul.f32.gmra.mxu0 %v4377
      %v4492 = vpop.f32.mrf.mxu0
      %v4493 = vadd.f32 0.0, %v4492
      %4494 = vmatmul.f32.gmra.mxu0 %v4380
      %v4495 = vpop.f32.mrf.mxu0
      %v4496 = vadd.f32 0.0, %v4495
      %4497 = vmatmul.f32.gmra.mxu0 %v4383
      %v4498 = vpop.f32.mrf.mxu0
      %v4499 = vadd.f32 0.0, %v4498
      %4500 = vmatmul.f32.gmra.mxu0 %v4386
      %v4501 = vpop.f32.mrf.mxu0
      %v4502 = vadd.f32 0.0, %v4501
      %4503 = vmatmul.f32.gmra.mxu0 %v4389
      %v4504 = vpop.f32.mrf.mxu0
      %v4505 = vadd.f32 0.0, %v4504
      %4506 = vmatmul.f32.gmra.mxu0 %v4392
      %v4507 = vpop.f32.mrf.mxu0
      %v4508 = vadd.f32 0.0, %v4507
      %4509 = vmatmul.f32.gmra.mxu0 %v4395
      %v4510 = vpop.f32.mrf.mxu0
      %v4511 = vadd.f32 0.0, %v4510
      %4512 = vmatmul.f32.gmra.mxu0 %v4398
      %v4513 = vpop.f32.mrf.mxu0
      %v4514 = vadd.f32 0.0, %v4513
      %4515 = vmatmul.f32.gmra.mxu0 %v4401
      %v4516 = vpop.f32.mrf.mxu0
      %v4517 = vadd.f32 0.0, %v4516
      %4518 = vmatmul.f32.gmra.mxu0 %v4404
      %v4519 = vpop.f32.mrf.mxu0
      %v4520 = vadd.f32 0.0, %v4519
      %4521 = vmatmul.f32.gmra.mxu0 %v4407
      %v4522 = vpop.f32.mrf.mxu0
      %v4523 = vadd.f32 0.0, %v4522
      %4524 = vmatmul.f32.gmra.mxu0 %v4410
      %v4525 = vpop.f32.mrf.mxu0
      %v4526 = vadd.f32 0.0, %v4525
      %4527 = vmatmul.f32.gmra.mxu0 %v4413
      %v4528 = vpop.f32.mrf.mxu0
      %v4529 = vadd.f32 0.0, %v4528
      %4530 = vmatmul.f32.gmra.mxu0 %v4416
      %v4531 = vpop.f32.mrf.mxu0
      %v4532 = vadd.f32 0.0, %v4531
      %4533 = vdwg.mxu0
      %v4534 = vadd.f32 %v4193, %v4439
      %v4535 = vadd.f32 %v4196, %v4442
      %v4536 = vadd.f32 %v4199, %v4445
      %v4537 = vadd.f32 %v4202, %v4448
      %v4538 = vadd.f32 %v4205, %v4451
      %v4539 = vadd.f32 %v4208, %v4454
      %v4540 = vadd.f32 %v4211, %v4457
      %v4541 = vadd.f32 %v4214, %v4460
      %v4542 = vadd.f32 %v4217, %v4463
      %v4543 = vadd.f32 %v4220, %v4466
      %v4544 = vadd.f32 %v4223, %v4469
      %v4545 = vadd.f32 %v4226, %v4472
      %v4546 = vadd.f32 %v4229, %v4475
      %v4547 = vadd.f32 %v4232, %v4478
      %v4548 = vadd.f32 %v4235, %v4481
      %v4549 = vadd.f32 %v4238, %v4484
      %v4550 = vadd.f32 %v4241, %v4487
      %v4551 = vadd.f32 %v4244, %v4490
      %v4552 = vadd.f32 %v4247, %v4493
      %v4553 = vadd.f32 %v4250, %v4496
      %v4554 = vadd.f32 %v4253, %v4499
      %v4555 = vadd.f32 %v4256, %v4502
      %v4556 = vadd.f32 %v4259, %v4505
      %v4557 = vadd.f32 %v4262, %v4508
      %v4558 = vadd.f32 %v4265, %v4511
      %v4559 = vadd.f32 %v4268, %v4514
      %v4560 = vadd.f32 %v4271, %v4517
      %v4561 = vadd.f32 %v4274, %v4520
      %v4562 = vadd.f32 %v4277, %v4523
      %v4563 = vadd.f32 %v4280, %v4526
      %v4564 = vadd.f32 %v4283, %v4529
      %v4565 = vadd.f32 %v4286, %v4532
      %v4566 = vadd.f32 %v3884, %v4534
      %v4567 = vadd.f32 %v3885, %v4535
      %v4568 = vadd.f32 %v3886, %v4536
      %v4569 = vadd.f32 %v3887, %v4537
      %v4570 = vadd.f32 %v3888, %v4538
      %v4571 = vadd.f32 %v3889, %v4539
      %v4572 = vadd.f32 %v3890, %v4540
      %v4573 = vadd.f32 %v3891, %v4541
      %v4574 = vadd.f32 %v3892, %v4542
      %v4575 = vadd.f32 %v3893, %v4543
      %v4576 = vadd.f32 %v3894, %v4544
      %v4577 = vadd.f32 %v3895, %v4545
      %v4578 = vadd.f32 %v3896, %v4546
      %v4579 = vadd.f32 %v3897, %v4547
      %v4580 = vadd.f32 %v3898, %v4548
      %v4581 = vadd.f32 %v3899, %v4549
      %v4582 = vadd.f32 %v3900, %v4550
      %v4583 = vadd.f32 %v3901, %v4551
      %v4584 = vadd.f32 %v3902, %v4552
      %v4585 = vadd.f32 %v3903, %v4553
      %v4586 = vadd.f32 %v3904, %v4554
      %v4587 = vadd.f32 %v3905, %v4555
      %v4588 = vadd.f32 %v3906, %v4556
      %v4589 = vadd.f32 %v3907, %v4557
      %v4590 = vadd.f32 %v3908, %v4558
      %v4591 = vadd.f32 %v3909, %v4559
      %v4592 = vadd.f32 %v3910, %v4560
      %v4593 = vadd.f32 %v3911, %v4561
      %v4594 = vadd.f32 %v3912, %v4562
      %v4595 = vadd.f32 %v3913, %v4563
      %v4596 = vadd.f32 %v3914, %v4564
      %v4597 = vadd.f32 %v3915, %v4565
      %v4598 = vld [vmem:[#allocation3 + $0x9] sm:$0xff]
      %v4599 = vld [vmem:[#allocation3 + $0x11] sm:$0xff]
      %v4600 = vld [vmem:[#allocation3 + $0x19] sm:$0xff]
      %v4601 = vld [vmem:[#allocation3 + $0x21] sm:$0xff]
      %v4602 = vld [vmem:[#allocation3 + $0x29] sm:$0xff]
      %v4603 = vld [vmem:[#allocation3 + $0x31] sm:$0xff]
      %v4604 = vld [vmem:[#allocation3 + $0x39] sm:$0xff]
      %v4605 = vld [vmem:[#allocation3 + $0x41] sm:$0xff]
      %v4606 = vld [vmem:[#allocation3 + $0x49] sm:$0xff]
      %v4607 = vld [vmem:[#allocation3 + $0x51] sm:$0xff]
      %v4608 = vld [vmem:[#allocation3 + $0x59] sm:$0xff]
      %v4609 = vld [vmem:[#allocation3 + $0x61] sm:$0xff]
      %v4610 = vld [vmem:[#allocation3 + $0x69] sm:$0xff]
      %v4611 = vld [vmem:[#allocation3 + $0x71] sm:$0xff]
      %v4612 = vld [vmem:[#allocation3 + $0x79] sm:$0xff]
      %v4613 = vld [vmem:[#allocation3 + $0x81] sm:$0xff]
      %v4614 = vld [vmem:[#allocation3 + $0x89] sm:$0xff]
      %v4615 = vld [vmem:[#allocation3 + $0x91] sm:$0xff]
      %v4616 = vld [vmem:[#allocation3 + $0x99] sm:$0xff]
      %v4617 = vld [vmem:[#allocation3 + $0xa1] sm:$0xff]
      %v4618 = vld [vmem:[#allocation3 + $0xa9] sm:$0xff]
      %v4619 = vld [vmem:[#allocation3 + $0xb1] sm:$0xff]
      %v4620 = vld [vmem:[#allocation3 + $0xb9] sm:$0xff]
      %v4621 = vld [vmem:[#allocation3 + $0xc1] sm:$0xff]
      %v4622 = vld [vmem:[#allocation3 + $0xc9] sm:$0xff]
      %v4623 = vld [vmem:[#allocation3 + $0xd1] sm:$0xff]
      %v4624 = vld [vmem:[#allocation3 + $0xd9] sm:$0xff]
      %v4625 = vld [vmem:[#allocation3 + $0xe1] sm:$0xff]
      %v4626 = vld [vmem:[#allocation3 + $0xe9] sm:$0xff]
      %v4627 = vld [vmem:[#allocation3 + $0xf1] sm:$0xff]
      %v4628 = vld [vmem:[#allocation3 + $0xf9] sm:$0xff]
      %v4629 = vld [vmem:[#allocation3 + $0x101] sm:$0xff]
      %s4630 = scalar_lea.vmem %s4, 8
      %v4631 = vld [vmem:[%s4630] sm:$0xf]
      %v4632 = vld [vmem:[#allocation3 + $0x109] sm:$0xff]
      %v4633 = vld [vmem:[#allocation3 + $0x111] sm:$0xff]
      %s4634 = scalar_lea.vmem %s4, 20
      %v4635 = vld [vmem:[%s4634] sm:$0xf]
      %v4637 = vsel %vm307, %v4600, 0
      %v4640 = vsel %vm307, %v4601, 0
      %v4643 = vsel %vm307, %v4602, 0
      %v4646 = vsel %vm307, %v4603, 0
      %v4649 = vsel %vm307, %v4604, 0
      %v4652 = vsel %vm307, %v4605, 0
      %v4655 = vsel %vm307, %v4606, 0
      %v4658 = vsel %vm307, %v4607, 0
      %v4661 = vsel %vm307, %v4608, 0
      %v4664 = vsel %vm307, %v4609, 0
      %v4667 = vsel %vm307, %v4610, 0
      %v4670 = vsel %vm307, %v4611, 0
      %v4673 = vsel %vm307, %v4612, 0
      %v4676 = vsel %vm307, %v4613, 0
      %v4679 = vsel %vm307, %v4614, 0
      %v4682 = vsel %vm307, %v4615, 0
      %v4685 = vsel %vm307, %v4616, 0
      %v4688 = vsel %vm307, %v4617, 0
      %v4691 = vsel %vm307, %v4618, 0
      %v4694 = vsel %vm307, %v4619, 0
      %v4697 = vsel %vm307, %v4620, 0
      %v4700 = vsel %vm307, %v4621, 0
      %v4703 = vsel %vm307, %v4622, 0
      %v4706 = vsel %vm307, %v4623, 0
      %v4709 = vsel %vm307, %v4624, 0
      %v4712 = vsel %vm307, %v4625, 0
      %v4715 = vsel %vm307, %v4626, 0
      %v4718 = vsel %vm307, %v4627, 0
      %v4721 = vsel %vm307, %v4628, 0
      %v4724 = vsel %vm307, %v4629, 0
      %v4727 = vsel %vm307, %v4632, 0
      %v4730 = vsel %vm307, %v4633, 0
      %v4733 = vsel %vm998, %v4635, 0
      %4735 = vmatpush.msra.mxu0 0.0
      %4736 = vmatpush.msra.mxu0 0.0
      %4737 = vmatpush.msra.mxu0 0.0
      %4738 = vmatpush.msra.mxu0 0.0
      %4739 = vmatpush.msra.mxu0 0.0
      %4740 = vmatpush.msra.mxu0 0.0
      %4741 = vmatpush.msra.mxu0 0.0
      %4742 = vmatpush.msra.mxu0 0.0
      %4743 = vmatpush.msra.mxu0 0.0
      %4744 = vmatpush.msra.mxu0 0.0
      %4745 = vmatpush.msra.mxu0 0.0
      %4746 = vmatpush.msra.mxu0 0.0
      %4747 = vmatpush.msra.mxu0 0.0
      %4748 = vmatpush.msra.mxu0 0.0
      %4749 = vmatpush.msra.mxu0 0.0
      %4750 = vmatpush.msra.mxu0 %v4733
      %4751 = vmatmul.f32.gmra.mxu0 %v4637
      %v4752 = vpop.f32.mrf.mxu0
      %v4753 = vadd.f32 0.0, %v4752
      %4754 = vmatmul.f32.gmra.mxu0 %v4640
      %v4755 = vpop.f32.mrf.mxu0
      %v4756 = vadd.f32 0.0, %v4755
      %4757 = vmatmul.f32.gmra.mxu0 %v4643
      %v4758 = vpop.f32.mrf.mxu0
      %v4759 = vadd.f32 0.0, %v4758
      %4760 = vmatmul.f32.gmra.mxu0 %v4646
      %v4761 = vpop.f32.mrf.mxu0
      %v4762 = vadd.f32 0.0, %v4761
      %4763 = vmatmul.f32.gmra.mxu0 %v4649
      %v4764 = vpop.f32.mrf.mxu0
      %v4765 = vadd.f32 0.0, %v4764
      %4766 = vmatmul.f32.gmra.mxu0 %v4652
      %v4767 = vpop.f32.mrf.mxu0
      %v4768 = vadd.f32 0.0, %v4767
      %4769 = vmatmul.f32.gmra.mxu0 %v4655
      %v4770 = vpop.f32.mrf.mxu0
      %v4771 = vadd.f32 0.0, %v4770
      %4772 = vmatmul.f32.gmra.mxu0 %v4658
      %v4773 = vpop.f32.mrf.mxu0
      %v4774 = vadd.f32 0.0, %v4773
      %4775 = vmatmul.f32.gmra.mxu0 %v4661
      %v4776 = vpop.f32.mrf.mxu0
      %v4777 = vadd.f32 0.0, %v4776
      %4778 = vmatmul.f32.gmra.mxu0 %v4664
      %v4779 = vpop.f32.mrf.mxu0
      %v4780 = vadd.f32 0.0, %v4779
      %4781 = vmatmul.f32.gmra.mxu0 %v4667
      %v4782 = vpop.f32.mrf.mxu0
      %v4783 = vadd.f32 0.0, %v4782
      %4784 = vmatmul.f32.gmra.mxu0 %v4670
      %v4785 = vpop.f32.mrf.mxu0
      %v4786 = vadd.f32 0.0, %v4785
      %4787 = vmatmul.f32.gmra.mxu0 %v4673
      %v4788 = vpop.f32.mrf.mxu0
      %v4789 = vadd.f32 0.0, %v4788
      %4790 = vmatmul.f32.gmra.mxu0 %v4676
      %v4791 = vpop.f32.mrf.mxu0
      %v4792 = vadd.f32 0.0, %v4791
      %4793 = vmatmul.f32.gmra.mxu0 %v4679
      %v4794 = vpop.f32.mrf.mxu0
      %v4795 = vadd.f32 0.0, %v4794
      %4796 = vmatmul.f32.gmra.mxu0 %v4682
      %v4797 = vpop.f32.mrf.mxu0
      %v4798 = vadd.f32 0.0, %v4797
      %4799 = vmatmul.f32.gmra.mxu0 %v4685
      %v4800 = vpop.f32.mrf.mxu0
      %v4801 = vadd.f32 0.0, %v4800
      %4802 = vmatmul.f32.gmra.mxu0 %v4688
      %v4803 = vpop.f32.mrf.mxu0
      %v4804 = vadd.f32 0.0, %v4803
      %4805 = vmatmul.f32.gmra.mxu0 %v4691
      %v4806 = vpop.f32.mrf.mxu0
      %v4807 = vadd.f32 0.0, %v4806
      %4808 = vmatmul.f32.gmra.mxu0 %v4694
      %v4809 = vpop.f32.mrf.mxu0
      %v4810 = vadd.f32 0.0, %v4809
      %4811 = vmatmul.f32.gmra.mxu0 %v4697
      %v4812 = vpop.f32.mrf.mxu0
      %v4813 = vadd.f32 0.0, %v4812
      %4814 = vmatmul.f32.gmra.mxu0 %v4700
      %v4815 = vpop.f32.mrf.mxu0
      %v4816 = vadd.f32 0.0, %v4815
      %4817 = vmatmul.f32.gmra.mxu0 %v4703
      %v4818 = vpop.f32.mrf.mxu0
      %v4819 = vadd.f32 0.0, %v4818
      %4820 = vmatmul.f32.gmra.mxu0 %v4706
      %v4821 = vpop.f32.mrf.mxu0
      %v4822 = vadd.f32 0.0, %v4821
      %4823 = vmatmul.f32.gmra.mxu0 %v4709
      %v4824 = vpop.f32.mrf.mxu0
      %v4825 = vadd.f32 0.0, %v4824
      %4826 = vmatmul.f32.gmra.mxu0 %v4712
      %v4827 = vpop.f32.mrf.mxu0
      %v4828 = vadd.f32 0.0, %v4827
      %4829 = vmatmul.f32.gmra.mxu0 %v4715
      %v4830 = vpop.f32.mrf.mxu0
      %v4831 = vadd.f32 0.0, %v4830
      %4832 = vmatmul.f32.gmra.mxu0 %v4718
      %v4833 = vpop.f32.mrf.mxu0
      %v4834 = vadd.f32 0.0, %v4833
      %4835 = vmatmul.f32.gmra.mxu0 %v4721
      %v4836 = vpop.f32.mrf.mxu0
      %v4837 = vadd.f32 0.0, %v4836
      %4838 = vmatmul.f32.gmra.mxu0 %v4724
      %v4839 = vpop.f32.mrf.mxu0
      %v4840 = vadd.f32 0.0, %v4839
      %4841 = vmatmul.f32.gmra.mxu0 %v4727
      %v4842 = vpop.f32.mrf.mxu0
      %v4843 = vadd.f32 0.0, %v4842
      %4844 = vmatmul.f32.gmra.mxu0 %v4730
      %v4845 = vpop.f32.mrf.mxu0
      %v4846 = vadd.f32 0.0, %v4845
      %4847 = vdwg.mxu0
      %v4849 = vsel %vm307, %v4598, 0
      %v4852 = vsel %vm307, %v4599, 0
      %v4855 = vsel %vm998, %v4631, 0
      %4857 = vmatpush.msra.mxu0 0.0
      %4858 = vmatpush.msra.mxu0 0.0
      %4859 = vmatpush.msra.mxu0 0.0
      %4860 = vmatpush.msra.mxu0 0.0
      %4861 = vmatpush.msra.mxu0 0.0
      %4862 = vmatpush.msra.mxu0 0.0
      %4863 = vmatpush.msra.mxu0 0.0
      %4864 = vmatpush.msra.mxu0 0.0
      %4865 = vmatpush.msra.mxu0 0.0
      %4866 = vmatpush.msra.mxu0 0.0
      %4867 = vmatpush.msra.mxu0 0.0
      %4868 = vmatpush.msra.mxu0 0.0
      %4869 = vmatpush.msra.mxu0 0.0
      %4870 = vmatpush.msra.mxu0 0.0
      %4871 = vmatpush.msra.mxu0 0.0
      %4872 = vmatpush.msra.mxu0 %v4855
      %4873 = vmatmul.f32.gmra.mxu0 %v4849
      %v4874 = vpop.f32.mrf.mxu0
      %v4875 = vadd.f32 %v4753, %v4874
      %4876 = vmatmul.f32.gmra.mxu0 %v4852
      %v4877 = vpop.f32.mrf.mxu0
      %v4878 = vadd.f32 %v4756, %v4877
      %4879 = vmatmul.f32.gmra.mxu0 %v4637
      %v4880 = vpop.f32.mrf.mxu0
      %v4881 = vadd.f32 %v4759, %v4880
      %4882 = vmatmul.f32.gmra.mxu0 %v4640
      %v4883 = vpop.f32.mrf.mxu0
      %v4884 = vadd.f32 %v4762, %v4883
      %4885 = vmatmul.f32.gmra.mxu0 %v4643
      %v4886 = vpop.f32.mrf.mxu0
      %v4887 = vadd.f32 %v4765, %v4886
      %4888 = vmatmul.f32.gmra.mxu0 %v4646
      %v4889 = vpop.f32.mrf.mxu0
      %v4890 = vadd.f32 %v4768, %v4889
      %4891 = vmatmul.f32.gmra.mxu0 %v4649
      %v4892 = vpop.f32.mrf.mxu0
      %v4893 = vadd.f32 %v4771, %v4892
      %4894 = vmatmul.f32.gmra.mxu0 %v4652
      %v4895 = vpop.f32.mrf.mxu0
      %v4896 = vadd.f32 %v4774, %v4895
      %4897 = vmatmul.f32.gmra.mxu0 %v4655
      %v4898 = vpop.f32.mrf.mxu0
      %v4899 = vadd.f32 %v4777, %v4898
      %4900 = vmatmul.f32.gmra.mxu0 %v4658
      %v4901 = vpop.f32.mrf.mxu0
      %v4902 = vadd.f32 %v4780, %v4901
      %4903 = vmatmul.f32.gmra.mxu0 %v4661
      %v4904 = vpop.f32.mrf.mxu0
      %v4905 = vadd.f32 %v4783, %v4904
      %4906 = vmatmul.f32.gmra.mxu0 %v4664
      %v4907 = vpop.f32.mrf.mxu0
      %v4908 = vadd.f32 %v4786, %v4907
      %4909 = vmatmul.f32.gmra.mxu0 %v4667
      %v4910 = vpop.f32.mrf.mxu0
      %v4911 = vadd.f32 %v4789, %v4910
      %4912 = vmatmul.f32.gmra.mxu0 %v4670
      %v4913 = vpop.f32.mrf.mxu0
      %v4914 = vadd.f32 %v4792, %v4913
      %4915 = vmatmul.f32.gmra.mxu0 %v4673
      %v4916 = vpop.f32.mrf.mxu0
      %v4917 = vadd.f32 %v4795, %v4916
      %4918 = vmatmul.f32.gmra.mxu0 %v4676
      %v4919 = vpop.f32.mrf.mxu0
      %v4920 = vadd.f32 %v4798, %v4919
      %4921 = vmatmul.f32.gmra.mxu0 %v4679
      %v4922 = vpop.f32.mrf.mxu0
      %v4923 = vadd.f32 %v4801, %v4922
      %4924 = vmatmul.f32.gmra.mxu0 %v4682
      %v4925 = vpop.f32.mrf.mxu0
      %v4926 = vadd.f32 %v4804, %v4925
      %4927 = vmatmul.f32.gmra.mxu0 %v4685
      %v4928 = vpop.f32.mrf.mxu0
      %v4929 = vadd.f32 %v4807, %v4928
      %4930 = vmatmul.f32.gmra.mxu0 %v4688
      %v4931 = vpop.f32.mrf.mxu0
      %v4932 = vadd.f32 %v4810, %v4931
      %4933 = vmatmul.f32.gmra.mxu0 %v4691
      %v4934 = vpop.f32.mrf.mxu0
      %v4935 = vadd.f32 %v4813, %v4934
      %4936 = vmatmul.f32.gmra.mxu0 %v4694
      %v4937 = vpop.f32.mrf.mxu0
      %v4938 = vadd.f32 %v4816, %v4937
      %4939 = vmatmul.f32.gmra.mxu0 %v4697
      %v4940 = vpop.f32.mrf.mxu0
      %v4941 = vadd.f32 %v4819, %v4940
      %4942 = vmatmul.f32.gmra.mxu0 %v4700
      %v4943 = vpop.f32.mrf.mxu0
      %v4944 = vadd.f32 %v4822, %v4943
      %4945 = vmatmul.f32.gmra.mxu0 %v4703
      %v4946 = vpop.f32.mrf.mxu0
      %v4947 = vadd.f32 %v4825, %v4946
      %4948 = vmatmul.f32.gmra.mxu0 %v4706
      %v4949 = vpop.f32.mrf.mxu0
      %v4950 = vadd.f32 %v4828, %v4949
      %4951 = vmatmul.f32.gmra.mxu0 %v4709
      %v4952 = vpop.f32.mrf.mxu0
      %v4953 = vadd.f32 %v4831, %v4952
      %4954 = vmatmul.f32.gmra.mxu0 %v4712
      %v4955 = vpop.f32.mrf.mxu0
      %v4956 = vadd.f32 %v4834, %v4955
      %4957 = vmatmul.f32.gmra.mxu0 %v4715
      %v4958 = vpop.f32.mrf.mxu0
      %v4959 = vadd.f32 %v4837, %v4958
      %4960 = vmatmul.f32.gmra.mxu0 %v4718
      %v4961 = vpop.f32.mrf.mxu0
      %v4962 = vadd.f32 %v4840, %v4961
      %4963 = vmatmul.f32.gmra.mxu0 %v4721
      %v4964 = vpop.f32.mrf.mxu0
      %v4965 = vadd.f32 %v4843, %v4964
      %4966 = vmatmul.f32.gmra.mxu0 %v4724
      %v4967 = vpop.f32.mrf.mxu0
      %v4968 = vadd.f32 %v4846, %v4967
      %4969 = vdwg.mxu0
      %v4970 = vld [vmem:[#allocation3 + $0x29] sm:$0xff]
      %v4971 = vld [vmem:[#allocation3 + $0x31] sm:$0xff]
      %v4972 = vld [vmem:[#allocation3 + $0x39] sm:$0xff]
      %v4973 = vld [vmem:[#allocation3 + $0x41] sm:$0xff]
      %v4974 = vld [vmem:[#allocation3 + $0x49] sm:$0xff]
      %v4975 = vld [vmem:[#allocation3 + $0x51] sm:$0xff]
      %v4976 = vld [vmem:[#allocation3 + $0x59] sm:$0xff]
      %v4977 = vld [vmem:[#allocation3 + $0x61] sm:$0xff]
      %v4978 = vld [vmem:[#allocation3 + $0x69] sm:$0xff]
      %v4979 = vld [vmem:[#allocation3 + $0x71] sm:$0xff]
      %v4980 = vld [vmem:[#allocation3 + $0x79] sm:$0xff]
      %v4981 = vld [vmem:[#allocation3 + $0x81] sm:$0xff]
      %v4982 = vld [vmem:[#allocation3 + $0x89] sm:$0xff]
      %v4983 = vld [vmem:[#allocation3 + $0x91] sm:$0xff]
      %v4984 = vld [vmem:[#allocation3 + $0x99] sm:$0xff]
      %v4985 = vld [vmem:[#allocation3 + $0xa1] sm:$0xff]
      %v4986 = vld [vmem:[#allocation3 + $0xa9] sm:$0xff]
      %v4987 = vld [vmem:[#allocation3 + $0xb1] sm:$0xff]
      %v4988 = vld [vmem:[#allocation3 + $0xb9] sm:$0xff]
      %v4989 = vld [vmem:[#allocation3 + $0xc1] sm:$0xff]
      %v4990 = vld [vmem:[#allocation3 + $0xc9] sm:$0xff]
      %v4991 = vld [vmem:[#allocation3 + $0xd1] sm:$0xff]
      %v4992 = vld [vmem:[#allocation3 + $0xd9] sm:$0xff]
      %v4993 = vld [vmem:[#allocation3 + $0xe1] sm:$0xff]
      %v4994 = vld [vmem:[#allocation3 + $0xe9] sm:$0xff]
      %v4995 = vld [vmem:[#allocation3 + $0xf1] sm:$0xff]
      %v4996 = vld [vmem:[#allocation3 + $0xf9] sm:$0xff]
      %v4997 = vld [vmem:[#allocation3 + $0x101] sm:$0xff]
      %v4998 = vld [vmem:[#allocation3 + $0x109] sm:$0xff]
      %v4999 = vld [vmem:[#allocation3 + $0x111] sm:$0xff]
      %v5000 = vld [vmem:[#allocation3 + $0x119] sm:$0xff]
      %v5001 = vld [vmem:[#allocation3 + $0x121] sm:$0xff]
      %s5002 = scalar_lea.vmem %s4, 32
      %v5003 = vld [vmem:[%s5002] sm:$0xf]
      %v5005 = vsel %vm307, %v4970, 0
      %v5008 = vsel %vm307, %v4971, 0
      %v5011 = vsel %vm307, %v4972, 0
      %v5014 = vsel %vm307, %v4973, 0
      %v5017 = vsel %vm307, %v4974, 0
      %v5020 = vsel %vm307, %v4975, 0
      %v5023 = vsel %vm307, %v4976, 0
      %v5026 = vsel %vm307, %v4977, 0
      %v5029 = vsel %vm307, %v4978, 0
      %v5032 = vsel %vm307, %v4979, 0
      %v5035 = vsel %vm307, %v4980, 0
      %v5038 = vsel %vm307, %v4981, 0
      %v5041 = vsel %vm307, %v4982, 0
      %v5044 = vsel %vm307, %v4983, 0
      %v5047 = vsel %vm307, %v4984, 0
      %v5050 = vsel %vm307, %v4985, 0
      %v5053 = vsel %vm307, %v4986, 0
      %v5056 = vsel %vm307, %v4987, 0
      %v5059 = vsel %vm307, %v4988, 0
      %v5062 = vsel %vm307, %v4989, 0
      %v5065 = vsel %vm307, %v4990, 0
      %v5068 = vsel %vm307, %v4991, 0
      %v5071 = vsel %vm307, %v4992, 0
      %v5074 = vsel %vm307, %v4993, 0
      %v5077 = vsel %vm307, %v4994, 0
      %v5080 = vsel %vm307, %v4995, 0
      %v5083 = vsel %vm307, %v4996, 0
      %v5086 = vsel %vm307, %v4997, 0
      %v5089 = vsel %vm307, %v4998, 0
      %v5092 = vsel %vm307, %v4999, 0
      %v5095 = vsel %vm307, %v5000, 0
      %v5098 = vsel %vm307, %v5001, 0
      %v5101 = vsel %vm998, %v5003, 0
      %5103 = vmatpush.msra.mxu0 0.0
      %5104 = vmatpush.msra.mxu0 0.0
      %5105 = vmatpush.msra.mxu0 0.0
      %5106 = vmatpush.msra.mxu0 0.0
      %5107 = vmatpush.msra.mxu0 0.0
      %5108 = vmatpush.msra.mxu0 0.0
      %5109 = vmatpush.msra.mxu0 0.0
      %5110 = vmatpush.msra.mxu0 0.0
      %5111 = vmatpush.msra.mxu0 0.0
      %5112 = vmatpush.msra.mxu0 0.0
      %5113 = vmatpush.msra.mxu0 0.0
      %5114 = vmatpush.msra.mxu0 0.0
      %5115 = vmatpush.msra.mxu0 0.0
      %5116 = vmatpush.msra.mxu0 0.0
      %5117 = vmatpush.msra.mxu0 0.0
      %5118 = vmatpush.msra.mxu0 %v5101
      %5119 = vmatmul.f32.gmra.mxu0 %v5005
      %v5120 = vpop.f32.mrf.mxu0
      %v5121 = vadd.f32 0.0, %v5120
      %5122 = vmatmul.f32.gmra.mxu0 %v5008
      %v5123 = vpop.f32.mrf.mxu0
      %v5124 = vadd.f32 0.0, %v5123
      %5125 = vmatmul.f32.gmra.mxu0 %v5011
      %v5126 = vpop.f32.mrf.mxu0
      %v5127 = vadd.f32 0.0, %v5126
      %5128 = vmatmul.f32.gmra.mxu0 %v5014
      %v5129 = vpop.f32.mrf.mxu0
      %v5130 = vadd.f32 0.0, %v5129
      %5131 = vmatmul.f32.gmra.mxu0 %v5017
      %v5132 = vpop.f32.mrf.mxu0
      %v5133 = vadd.f32 0.0, %v5132
      %5134 = vmatmul.f32.gmra.mxu0 %v5020
      %v5135 = vpop.f32.mrf.mxu0
      %v5136 = vadd.f32 0.0, %v5135
      %5137 = vmatmul.f32.gmra.mxu0 %v5023
      %v5138 = vpop.f32.mrf.mxu0
      %v5139 = vadd.f32 0.0, %v5138
      %5140 = vmatmul.f32.gmra.mxu0 %v5026
      %v5141 = vpop.f32.mrf.mxu0
      %v5142 = vadd.f32 0.0, %v5141
      %5143 = vmatmul.f32.gmra.mxu0 %v5029
      %v5144 = vpop.f32.mrf.mxu0
      %v5145 = vadd.f32 0.0, %v5144
      %5146 = vmatmul.f32.gmra.mxu0 %v5032
      %v5147 = vpop.f32.mrf.mxu0
      %v5148 = vadd.f32 0.0, %v5147
      %5149 = vmatmul.f32.gmra.mxu0 %v5035
      %v5150 = vpop.f32.mrf.mxu0
      %v5151 = vadd.f32 0.0, %v5150
      %5152 = vmatmul.f32.gmra.mxu0 %v5038
      %v5153 = vpop.f32.mrf.mxu0
      %v5154 = vadd.f32 0.0, %v5153
      %5155 = vmatmul.f32.gmra.mxu0 %v5041
      %v5156 = vpop.f32.mrf.mxu0
      %v5157 = vadd.f32 0.0, %v5156
      %5158 = vmatmul.f32.gmra.mxu0 %v5044
      %v5159 = vpop.f32.mrf.mxu0
      %v5160 = vadd.f32 0.0, %v5159
      %5161 = vmatmul.f32.gmra.mxu0 %v5047
      %v5162 = vpop.f32.mrf.mxu0
      %v5163 = vadd.f32 0.0, %v5162
      %5164 = vmatmul.f32.gmra.mxu0 %v5050
      %v5165 = vpop.f32.mrf.mxu0
      %v5166 = vadd.f32 0.0, %v5165
      %5167 = vmatmul.f32.gmra.mxu0 %v5053
      %v5168 = vpop.f32.mrf.mxu0
      %v5169 = vadd.f32 0.0, %v5168
      %5170 = vmatmul.f32.gmra.mxu0 %v5056
      %v5171 = vpop.f32.mrf.mxu0
      %v5172 = vadd.f32 0.0, %v5171
      %5173 = vmatmul.f32.gmra.mxu0 %v5059
      %v5174 = vpop.f32.mrf.mxu0
      %v5175 = vadd.f32 0.0, %v5174
      %5176 = vmatmul.f32.gmra.mxu0 %v5062
      %v5177 = vpop.f32.mrf.mxu0
      %v5178 = vadd.f32 0.0, %v5177
      %5179 = vmatmul.f32.gmra.mxu0 %v5065
      %v5180 = vpop.f32.mrf.mxu0
      %v5181 = vadd.f32 0.0, %v5180
      %5182 = vmatmul.f32.gmra.mxu0 %v5068
      %v5183 = vpop.f32.mrf.mxu0
      %v5184 = vadd.f32 0.0, %v5183
      %5185 = vmatmul.f32.gmra.mxu0 %v5071
      %v5186 = vpop.f32.mrf.mxu0
      %v5187 = vadd.f32 0.0, %v5186
      %5188 = vmatmul.f32.gmra.mxu0 %v5074
      %v5189 = vpop.f32.mrf.mxu0
      %v5190 = vadd.f32 0.0, %v5189
      %5191 = vmatmul.f32.gmra.mxu0 %v5077
      %v5192 = vpop.f32.mrf.mxu0
      %v5193 = vadd.f32 0.0, %v5192
      %5194 = vmatmul.f32.gmra.mxu0 %v5080
      %v5195 = vpop.f32.mrf.mxu0
      %v5196 = vadd.f32 0.0, %v5195
      %5197 = vmatmul.f32.gmra.mxu0 %v5083
      %v5198 = vpop.f32.mrf.mxu0
      %v5199 = vadd.f32 0.0, %v5198
      %5200 = vmatmul.f32.gmra.mxu0 %v5086
      %v5201 = vpop.f32.mrf.mxu0
      %v5202 = vadd.f32 0.0, %v5201
      %5203 = vmatmul.f32.gmra.mxu0 %v5089
      %v5204 = vpop.f32.mrf.mxu0
      %v5205 = vadd.f32 0.0, %v5204
      %5206 = vmatmul.f32.gmra.mxu0 %v5092
      %v5207 = vpop.f32.mrf.mxu0
      %v5208 = vadd.f32 0.0, %v5207
      %5209 = vmatmul.f32.gmra.mxu0 %v5095
      %v5210 = vpop.f32.mrf.mxu0
      %v5211 = vadd.f32 0.0, %v5210
      %5212 = vmatmul.f32.gmra.mxu0 %v5098
      %v5213 = vpop.f32.mrf.mxu0
      %v5214 = vadd.f32 0.0, %v5213
      %5215 = vdwg.mxu0
      %v5216 = vadd.f32 %v4875, %v5121
      %v5217 = vadd.f32 %v4878, %v5124
      %v5218 = vadd.f32 %v4881, %v5127
      %v5219 = vadd.f32 %v4884, %v5130
      %v5220 = vadd.f32 %v4887, %v5133
      %v5221 = vadd.f32 %v4890, %v5136
      %v5222 = vadd.f32 %v4893, %v5139
      %v5223 = vadd.f32 %v4896, %v5142
      %v5224 = vadd.f32 %v4899, %v5145
      %v5225 = vadd.f32 %v4902, %v5148
      %v5226 = vadd.f32 %v4905, %v5151
      %v5227 = vadd.f32 %v4908, %v5154
      %v5228 = vadd.f32 %v4911, %v5157
      %v5229 = vadd.f32 %v4914, %v5160
      %v5230 = vadd.f32 %v4917, %v5163
      %v5231 = vadd.f32 %v4920, %v5166
      %v5232 = vadd.f32 %v4923, %v5169
      %v5233 = vadd.f32 %v4926, %v5172
      %v5234 = vadd.f32 %v4929, %v5175
      %v5235 = vadd.f32 %v4932, %v5178
      %v5236 = vadd.f32 %v4935, %v5181
      %v5237 = vadd.f32 %v4938, %v5184
      %v5238 = vadd.f32 %v4941, %v5187
      %v5239 = vadd.f32 %v4944, %v5190
      %v5240 = vadd.f32 %v4947, %v5193
      %v5241 = vadd.f32 %v4950, %v5196
      %v5242 = vadd.f32 %v4953, %v5199
      %v5243 = vadd.f32 %v4956, %v5202
      %v5244 = vadd.f32 %v4959, %v5205
      %v5245 = vadd.f32 %v4962, %v5208
      %v5246 = vadd.f32 %v4965, %v5211
      %v5247 = vadd.f32 %v4968, %v5214
      %v5248 = vsel %vm2975, %v5216, 0.0
      %v5249 = vsel %vm2976, %v5217, 0.0
      %v5250 = vsel %vm2977, %v5218, 0.0
      %v5251 = vsel %vm2978, %v5219, 0.0
      %v5252 = vsel %vm2979, %v5220, 0.0
      %v5253 = vsel %vm2980, %v5221, 0.0
      %v5254 = vsel %vm2981, %v5222, 0.0
      %v5255 = vsel %vm2982, %v5223, 0.0
      %v5256 = vsel %vm2983, %v5224, 0.0
      %v5257 = vsel %vm2984, %v5225, 0.0
      %v5258 = vsel %vm2985, %v5226, 0.0
      %v5259 = vsel %vm2986, %v5227, 0.0
      %v5260 = vsel %vm2987, %v5228, 0.0
      %v5261 = vsel %vm2988, %v5229, 0.0
      %v5262 = vsel %vm2989, %v5230, 0.0
      %v5263 = vsel %vm2990, %v5231, 0.0
      %v5264 = vsel %vm2991, %v5232, 0.0
      %v5265 = vsel %vm2992, %v5233, 0.0
      %v5266 = vsel %vm2993, %v5234, 0.0
      %v5267 = vsel %vm2994, %v5235, 0.0
      %v5268 = vsel %vm2995, %v5236, 0.0
      %v5269 = vsel %vm2996, %v5237, 0.0
      %v5270 = vsel %vm2997, %v5238, 0.0
      %v5271 = vsel %vm2998, %v5239, 0.0
      %v5272 = vsel %vm2999, %v5240, 0.0
      %v5273 = vsel %vm3000, %v5241, 0.0
      %v5274 = vsel %vm3001, %v5242, 0.0
      %v5275 = vsel %vm3002, %v5243, 0.0
      %v5276 = vsel %vm3003, %v5244, 0.0
      %v5277 = vsel %vm3004, %v5245, 0.0
      %v5278 = vsel %vm3005, %v5246, 0.0
      %v5279 = vsel %vm3006, %v5247, 0.0
      %v5280 = vadd.f32 %v4566, %v5248
      %v5281 = vadd.f32 %v4567, %v5249
      %v5282 = vadd.f32 %v4568, %v5250
      %v5283 = vadd.f32 %v4569, %v5251
      %v5284 = vadd.f32 %v4570, %v5252
      %v5285 = vadd.f32 %v4571, %v5253
      %v5286 = vadd.f32 %v4572, %v5254
      %v5287 = vadd.f32 %v4573, %v5255
      %v5288 = vadd.f32 %v4574, %v5256
      %v5289 = vadd.f32 %v4575, %v5257
      %v5290 = vadd.f32 %v4576, %v5258
      %v5291 = vadd.f32 %v4577, %v5259
      %v5292 = vadd.f32 %v4578, %v5260
      %v5293 = vadd.f32 %v4579, %v5261
      %v5294 = vadd.f32 %v4580, %v5262
      %v5295 = vadd.f32 %v4581, %v5263
      %v5296 = vadd.f32 %v4582, %v5264
      %v5297 = vadd.f32 %v4583, %v5265
      %v5298 = vadd.f32 %v4584, %v5266
      %v5299 = vadd.f32 %v4585, %v5267
      %v5300 = vadd.f32 %v4586, %v5268
      %v5301 = vadd.f32 %v4587, %v5269
      %v5302 = vadd.f32 %v4588, %v5270
      %v5303 = vadd.f32 %v4589, %v5271
      %v5304 = vadd.f32 %v4590, %v5272
      %v5305 = vadd.f32 %v4591, %v5273
      %v5306 = vadd.f32 %v4592, %v5274
      %v5307 = vadd.f32 %v4593, %v5275
      %v5308 = vadd.f32 %v4594, %v5276
      %v5309 = vadd.f32 %v4595, %v5277
      %v5310 = vadd.f32 %v4596, %v5278
      %v5311 = vadd.f32 %v4597, %v5279
      %v5312 = vld [vmem:[%s5] sm:$0x1]
      %v5314 = vperm.slane %v5312, 0
      %v5316 = vadd.f32 %v5280, %v5314
      %v5317 = vadd.f32 %v5281, %v5314
      %v5318 = vadd.f32 %v5282, %v5314
      %v5319 = vadd.f32 %v5283, %v5314
      %v5320 = vadd.f32 %v5284, %v5314
      %v5321 = vadd.f32 %v5285, %v5314
      %v5322 = vadd.f32 %v5286, %v5314
      %v5323 = vadd.f32 %v5287, %v5314
      %v5324 = vadd.f32 %v5288, %v5314
      %v5325 = vadd.f32 %v5289, %v5314
      %v5326 = vadd.f32 %v5290, %v5314
      %v5327 = vadd.f32 %v5291, %v5314
      %v5328 = vadd.f32 %v5292, %v5314
      %v5329 = vadd.f32 %v5293, %v5314
      %v5330 = vadd.f32 %v5294, %v5314
      %v5331 = vadd.f32 %v5295, %v5314
      %v5332 = vadd.f32 %v5296, %v5314
      %v5333 = vadd.f32 %v5297, %v5314
      %v5334 = vadd.f32 %v5298, %v5314
      %v5335 = vadd.f32 %v5299, %v5314
      %v5336 = vadd.f32 %v5300, %v5314
      %v5337 = vadd.f32 %v5301, %v5314
      %v5338 = vadd.f32 %v5302, %v5314
      %v5339 = vadd.f32 %v5303, %v5314
      %v5340 = vadd.f32 %v5304, %v5314
      %v5341 = vadd.f32 %v5305, %v5314
      %v5342 = vadd.f32 %v5306, %v5314
      %v5343 = vadd.f32 %v5307, %v5314
      %v5344 = vadd.f32 %v5308, %v5314
      %v5345 = vadd.f32 %v5309, %v5314
      %v5346 = vadd.f32 %v5310, %v5314
      %v5347 = vadd.f32 %v5311, %v5314
      %vm5348 = vcmp.gt.f32.partialorder %v5316, 0.0
      %vm5349 = vcmp.gt.f32.partialorder %v5317, 0.0
      %vm5350 = vcmp.gt.f32.partialorder %v5318, 0.0
      %vm5351 = vcmp.gt.f32.partialorder %v5319, 0.0
      %vm5352 = vcmp.gt.f32.partialorder %v5320, 0.0
      %vm5353 = vcmp.gt.f32.partialorder %v5321, 0.0
      %vm5354 = vcmp.gt.f32.partialorder %v5322, 0.0
      %vm5355 = vcmp.gt.f32.partialorder %v5323, 0.0
      %vm5356 = vcmp.gt.f32.partialorder %v5324, 0.0
      %vm5357 = vcmp.gt.f32.partialorder %v5325, 0.0
      %vm5358 = vcmp.gt.f32.partialorder %v5326, 0.0
      %vm5359 = vcmp.gt.f32.partialorder %v5327, 0.0
      %vm5360 = vcmp.gt.f32.partialorder %v5328, 0.0
      %vm5361 = vcmp.gt.f32.partialorder %v5329, 0.0
      %vm5362 = vcmp.gt.f32.partialorder %v5330, 0.0
      %vm5363 = vcmp.gt.f32.partialorder %v5331, 0.0
      %vm5364 = vcmp.gt.f32.partialorder %v5332, 0.0
      %vm5365 = vcmp.gt.f32.partialorder %v5333, 0.0
      %vm5366 = vcmp.gt.f32.partialorder %v5334, 0.0
      %vm5367 = vcmp.gt.f32.partialorder %v5335, 0.0
      %vm5368 = vcmp.gt.f32.partialorder %v5336, 0.0
      %vm5369 = vcmp.gt.f32.partialorder %v5337, 0.0
      %vm5370 = vcmp.gt.f32.partialorder %v5338, 0.0
      %vm5371 = vcmp.gt.f32.partialorder %v5339, 0.0
      %vm5372 = vcmp.gt.f32.partialorder %v5340, 0.0
      %vm5373 = vcmp.gt.f32.partialorder %v5341, 0.0
      %vm5374 = vcmp.gt.f32.partialorder %v5342, 0.0
      %vm5375 = vcmp.gt.f32.partialorder %v5343, 0.0
      %vm5376 = vcmp.gt.f32.partialorder %v5344, 0.0
      %vm5377 = vcmp.gt.f32.partialorder %v5345, 0.0
      %vm5378 = vcmp.gt.f32.partialorder %v5346, 0.0
      %vm5379 = vcmp.gt.f32.partialorder %v5347, 0.0
      %v5380 = vmul.f32 %v5316, 0.2
      %v5381 = vmul.f32 %v5317, 0.2
      %v5382 = vmul.f32 %v5318, 0.2
      %v5383 = vmul.f32 %v5319, 0.2
      %v5384 = vmul.f32 %v5320, 0.2
      %v5385 = vmul.f32 %v5321, 0.2
      %v5386 = vmul.f32 %v5322, 0.2
      %v5387 = vmul.f32 %v5323, 0.2
      %v5388 = vmul.f32 %v5324, 0.2
      %v5389 = vmul.f32 %v5325, 0.2
      %v5390 = vmul.f32 %v5326, 0.2
      %v5391 = vmul.f32 %v5327, 0.2
      %v5392 = vmul.f32 %v5328, 0.2
      %v5393 = vmul.f32 %v5329, 0.2
      %v5394 = vmul.f32 %v5330, 0.2
      %v5395 = vmul.f32 %v5331, 0.2
      %v5396 = vmul.f32 %v5332, 0.2
      %v5397 = vmul.f32 %v5333, 0.2
      %v5398 = vmul.f32 %v5334, 0.2
      %v5399 = vmul.f32 %v5335, 0.2
      %v5400 = vmul.f32 %v5336, 0.2
      %v5401 = vmul.f32 %v5337, 0.2
      %v5402 = vmul.f32 %v5338, 0.2
      %v5403 = vmul.f32 %v5339, 0.2
      %v5404 = vmul.f32 %v5340, 0.2
      %v5405 = vmul.f32 %v5341, 0.2
      %v5406 = vmul.f32 %v5342, 0.2
      %v5407 = vmul.f32 %v5343, 0.2
      %v5408 = vmul.f32 %v5344, 0.2
      %v5409 = vmul.f32 %v5345, 0.2
      %v5410 = vmul.f32 %v5346, 0.2
      %v5411 = vmul.f32 %v5347, 0.2
      %v5412 = vsel %vm5348, %v5316, %v5380
      %v5413 = vsel %vm5349, %v5317, %v5381
      %v5414 = vsel %vm5350, %v5318, %v5382
      %v5415 = vsel %vm5351, %v5319, %v5383
      %v5416 = vsel %vm5352, %v5320, %v5384
      %v5417 = vsel %vm5353, %v5321, %v5385
      %v5418 = vsel %vm5354, %v5322, %v5386
      %v5419 = vsel %vm5355, %v5323, %v5387
      %v5420 = vsel %vm5356, %v5324, %v5388
      %v5421 = vsel %vm5357, %v5325, %v5389
      %v5422 = vsel %vm5358, %v5326, %v5390
      %v5423 = vsel %vm5359, %v5327, %v5391
      %v5424 = vsel %vm5360, %v5328, %v5392
      %v5425 = vsel %vm5361, %v5329, %v5393
      %v5426 = vsel %vm5362, %v5330, %v5394
      %v5427 = vsel %vm5363, %v5331, %v5395
      %v5428 = vsel %vm5364, %v5332, %v5396
      %v5429 = vsel %vm5365, %v5333, %v5397
      %v5430 = vsel %vm5366, %v5334, %v5398
      %v5431 = vsel %vm5367, %v5335, %v5399
      %v5432 = vsel %vm5368, %v5336, %v5400
      %v5433 = vsel %vm5369, %v5337, %v5401
      %v5434 = vsel %vm5370, %v5338, %v5402
      %v5435 = vsel %vm5371, %v5339, %v5403
      %v5436 = vsel %vm5372, %v5340, %v5404
      %v5437 = vsel %vm5373, %v5341, %v5405
      %v5438 = vsel %vm5374, %v5342, %v5406
      %v5439 = vsel %vm5375, %v5343, %v5407
      %v5440 = vsel %vm5376, %v5344, %v5408
      %v5441 = vsel %vm5377, %v5345, %v5409
      %v5442 = vsel %vm5378, %v5346, %v5410
      %v5443 = vsel %vm5379, %v5347, %v5411
      %v5444 = vsel %vm307, %v5412, 0.0
      %v5445 = vsel %vm307, %v5413, 0.0
      %v5446 = vadd.f32 %v5444, %v5445
      %v5447 = vsel %vm307, %v5414, 0.0
      %v5448 = vadd.f32 %v5446, %v5447
      %v5449 = vsel %vm307, %v5415, 0.0
      %v5450 = vadd.f32 %v5448, %v5449
      %v5451 = vsel %vm307, %v5416, 0.0
      %v5452 = vadd.f32 %v5450, %v5451
      %v5453 = vsel %vm307, %v5417, 0.0
      %v5454 = vadd.f32 %v5452, %v5453
      %v5455 = vsel %vm307, %v5418, 0.0
      %v5456 = vadd.f32 %v5454, %v5455
      %v5457 = vsel %vm307, %v5419, 0.0
      %v5458 = vadd.f32 %v5456, %v5457
      %v5459 = vsel %vm307, %v5420, 0.0
      %v5460 = vadd.f32 %v5458, %v5459
      %v5461 = vsel %vm307, %v5421, 0.0
      %v5462 = vadd.f32 %v5460, %v5461
      %v5463 = vsel %vm307, %v5422, 0.0
      %v5464 = vadd.f32 %v5462, %v5463
      %v5465 = vsel %vm307, %v5423, 0.0
      %v5466 = vadd.f32 %v5464, %v5465
      %v5467 = vsel %vm307, %v5424, 0.0
      %v5468 = vadd.f32 %v5466, %v5467
      %v5469 = vsel %vm307, %v5425, 0.0
      %v5470 = vadd.f32 %v5468, %v5469
      %v5471 = vsel %vm307, %v5426, 0.0
      %v5472 = vadd.f32 %v5470, %v5471
      %v5473 = vsel %vm307, %v5427, 0.0
      %v5474 = vadd.f32 %v5472, %v5473
      %v5475 = vsel %vm307, %v5428, 0.0
      %v5476 = vadd.f32 %v5474, %v5475
      %v5477 = vsel %vm307, %v5429, 0.0
      %v5478 = vadd.f32 %v5476, %v5477
      %v5479 = vsel %vm307, %v5430, 0.0
      %v5480 = vadd.f32 %v5478, %v5479
      %v5481 = vsel %vm307, %v5431, 0.0
      %v5482 = vadd.f32 %v5480, %v5481
      %v5483 = vsel %vm307, %v5432, 0.0
      %v5484 = vadd.f32 %v5482, %v5483
      %v5485 = vsel %vm307, %v5433, 0.0
      %v5486 = vadd.f32 %v5484, %v5485
      %v5487 = vsel %vm307, %v5434, 0.0
      %v5488 = vadd.f32 %v5486, %v5487
      %v5489 = vsel %vm307, %v5435, 0.0
      %v5490 = vadd.f32 %v5488, %v5489
      %v5491 = vsel %vm307, %v5436, 0.0
      %v5492 = vadd.f32 %v5490, %v5491
      %v5493 = vsel %vm307, %v5437, 0.0
      %v5494 = vadd.f32 %v5492, %v5493
      %v5495 = vsel %vm307, %v5438, 0.0
      %v5496 = vadd.f32 %v5494, %v5495
      %v5497 = vsel %vm307, %v5439, 0.0
      %v5498 = vadd.f32 %v5496, %v5497
      %v5499 = vsel %vm307, %v5440, 0.0
      %v5500 = vadd.f32 %v5498, %v5499
      %v5501 = vsel %vm307, %v5441, 0.0
      %v5502 = vadd.f32 %v5500, %v5501
      %v5503 = vsel %vm307, %v5442, 0.0
      %v5504 = vadd.f32 %v5502, %v5503
      %v5505 = vsel %vm307, %v5443, 0.0
      %v5506 = vadd.f32 %v5504, %v5505
      %v5507 = vrot.slane %v5506, 4
      %v5508 = vadd.f32 %v5506, %v5507
      %v5509 = vrot.slane %v5508, 2
      %v5510 = vadd.f32 %v5508, %v5509
      %v5511 = vrot.slane %v5510, 1
      %v5512 = vadd.f32 %v5510, %v5511
      %v5513 = vrcp.pop 256.0
      %v5514 = vmul.f32 256.0, %v5513
      %v5515 = vsub.f32 1.0, %v5514
      %v5516 = vmul.f32 %v5513, %v5515
      %v5517 = vadd.f32 %v5513, %v5516
      %vm5518 = vweird.f32 %v5513
      %v5519 = vsel %vm5518, %v5513, %v5517
      %v5520 = vmul.f32 %v5512, %v5519
      %v5521 = vld [vmem:[%s6] sm:$0xf]
      %v5522 = vld [vmem:[%s7] sm:$0x1]
      %v5524 = vsel %vm307, %v5520, 0
      %v5527 = vsel %vm998, %v5521, 0
      %5529 = vmatpush.msra.mxu0 0.0
      %5530 = vmatpush.msra.mxu0 0.0
      %5531 = vmatpush.msra.mxu0 0.0
      %5532 = vmatpush.msra.mxu0 0.0
      %5533 = vmatpush.msra.mxu0 0.0
      %5534 = vmatpush.msra.mxu0 0.0
      %5535 = vmatpush.msra.mxu0 0.0
      %5536 = vmatpush.msra.mxu0 0.0
      %5537 = vmatpush.msra.mxu0 0.0
      %5538 = vmatpush.msra.mxu0 0.0
      %5539 = vmatpush.msra.mxu0 0.0
      %5540 = vmatpush.msra.mxu0 0.0
      %5541 = vmatpush.msra.mxu0 0.0
      %5542 = vmatpush.msra.mxu0 0.0
      %5543 = vmatpush.msra.mxu0 0.0
      %5544 = vmatpush.msra.mxu0 %v5527
      %5545 = vmatmul.f32.gmra.mxu0 %v5524
      %v5546 = vpop.f32.mrf.mxu0
      %v5547 = vadd.f32 %v5522, %v5546
      %5548 = vdwg.mxu0
      %v5549 = vtanh.pop %v5547
      %s5550 = sld [smem:[#allocation4]]
      %v5551 = vstv %s5550
      %v5552 = vmul.f32 %v5549, %v5551
      %v5553 = vperm.slane %v5552, 0
      %v5554 = vmul.f32 %v5412, %v5553
      %v5555 = vmul.f32 %v5413, %v5553
      %v5556 = vmul.f32 %v5414, %v5553
      %v5557 = vmul.f32 %v5415, %v5553
      %v5558 = vmul.f32 %v5416, %v5553
      %v5559 = vmul.f32 %v5417, %v5553
      %v5560 = vmul.f32 %v5418, %v5553
      %v5561 = vmul.f32 %v5419, %v5553
      %v5562 = vmul.f32 %v5420, %v5553
      %v5563 = vmul.f32 %v5421, %v5553
      %v5564 = vmul.f32 %v5422, %v5553
      %v5565 = vmul.f32 %v5423, %v5553
      %v5566 = vmul.f32 %v5424, %v5553
      %v5567 = vmul.f32 %v5425, %v5553
      %v5568 = vmul.f32 %v5426, %v5553
      %v5569 = vmul.f32 %v5427, %v5553
      %v5570 = vmul.f32 %v5428, %v5553
      %v5571 = vmul.f32 %v5429, %v5553
      %v5572 = vmul.f32 %v5430, %v5553
      %v5573 = vmul.f32 %v5431, %v5553
      %v5574 = vmul.f32 %v5432, %v5553
      %v5575 = vmul.f32 %v5433, %v5553
      %v5576 = vmul.f32 %v5434, %v5553
      %v5577 = vmul.f32 %v5435, %v5553
      %v5578 = vmul.f32 %v5436, %v5553
      %v5579 = vmul.f32 %v5437, %v5553
      %v5580 = vmul.f32 %v5438, %v5553
      %v5581 = vmul.f32 %v5439, %v5553
      %v5582 = vmul.f32 %v5440, %v5553
      %v5583 = vmul.f32 %v5441, %v5553
      %v5584 = vmul.f32 %v5442, %v5553
      %v5585 = vmul.f32 %v5443, %v5553
      %v5586 = vld [vmem:[#allocation2 + $0x18] sm:$0xff]
      %v5587 = vld [vmem:[#allocation2 + $0x20] sm:$0xff]
      %v5588 = vld [vmem:[#allocation2 + $0x28] sm:$0xff]
      %v5589 = vld [vmem:[#allocation2 + $0x30] sm:$0xff]
      %v5590 = vld [vmem:[#allocation2 + $0x38] sm:$0xff]
      %v5591 = vld [vmem:[#allocation2 + $0x40] sm:$0xff]
      %v5592 = vld [vmem:[#allocation2 + $0x48] sm:$0xff]
      %v5593 = vld [vmem:[#allocation2 + $0x50] sm:$0xff]
      %v5594 = vld [vmem:[#allocation2 + $0x58] sm:$0xff]
      %v5595 = vld [vmem:[#allocation2 + $0x60] sm:$0xff]
      %v5596 = vld [vmem:[#allocation2 + $0x68] sm:$0xff]
      %v5597 = vld [vmem:[#allocation2 + $0x70] sm:$0xff]
      %v5598 = vld [vmem:[#allocation2 + $0x78] sm:$0xff]
      %v5599 = vld [vmem:[#allocation2 + $0x80] sm:$0xff]
      %v5600 = vld [vmem:[#allocation2 + $0x88] sm:$0xff]
      %v5601 = vld [vmem:[#allocation2 + $0x90] sm:$0xff]
      %v5602 = vld [vmem:[#allocation2 + $0x98] sm:$0xff]
      %v5603 = vld [vmem:[#allocation2 + $0xa0] sm:$0xff]
      %v5604 = vld [vmem:[#allocation2 + $0xa8] sm:$0xff]
      %v5605 = vld [vmem:[#allocation2 + $0xb0] sm:$0xff]
      %v5606 = vld [vmem:[#allocation2 + $0xb8] sm:$0xff]
      %v5607 = vld [vmem:[#allocation2 + $0xc0] sm:$0xff]
      %v5608 = vld [vmem:[#allocation2 + $0xc8] sm:$0xff]
      %v5609 = vld [vmem:[#allocation2 + $0xd0] sm:$0xff]
      %v5610 = vld [vmem:[#allocation2 + $0xd8] sm:$0xff]
      %v5611 = vld [vmem:[#allocation2 + $0xe0] sm:$0xff]
      %v5612 = vld [vmem:[#allocation2 + $0xe8] sm:$0xff]
      %v5613 = vld [vmem:[#allocation2 + $0xf0] sm:$0xff]
      %v5614 = vld [vmem:[#allocation2 + $0xf8] sm:$0xff]
      %v5615 = vld [vmem:[#allocation2 + $0x100] sm:$0xff]
      %v5616 = vld [vmem:[#allocation2 + $0x108] sm:$0xff]
      %v5617 = vld [vmem:[#allocation2 + $0x110] sm:$0xff]
      %v5618 = vadd.f32 %v5554, %v5586
      %v5619 = vadd.f32 %v5555, %v5587
      %v5620 = vadd.f32 %v5556, %v5588
      %v5621 = vadd.f32 %v5557, %v5589
      %v5622 = vadd.f32 %v5558, %v5590
      %v5623 = vadd.f32 %v5559, %v5591
      %v5624 = vadd.f32 %v5560, %v5592
      %v5625 = vadd.f32 %v5561, %v5593
      %v5626 = vadd.f32 %v5562, %v5594
      %v5627 = vadd.f32 %v5563, %v5595
      %v5628 = vadd.f32 %v5564, %v5596
      %v5629 = vadd.f32 %v5565, %v5597
      %v5630 = vadd.f32 %v5566, %v5598
      %v5631 = vadd.f32 %v5567, %v5599
      %v5632 = vadd.f32 %v5568, %v5600
      %v5633 = vadd.f32 %v5569, %v5601
      %v5634 = vadd.f32 %v5570, %v5602
      %v5635 = vadd.f32 %v5571, %v5603
      %v5636 = vadd.f32 %v5572, %v5604
      %v5637 = vadd.f32 %v5573, %v5605
      %v5638 = vadd.f32 %v5574, %v5606
      %v5639 = vadd.f32 %v5575, %v5607
      %v5640 = vadd.f32 %v5576, %v5608
      %v5641 = vadd.f32 %v5577, %v5609
      %v5642 = vadd.f32 %v5578, %v5610
      %v5643 = vadd.f32 %v5579, %v5611
      %v5644 = vadd.f32 %v5580, %v5612
      %v5645 = vadd.f32 %v5581, %v5613
      %v5646 = vadd.f32 %v5582, %v5614
      %v5647 = vadd.f32 %v5583, %v5615
      %v5648 = vadd.f32 %v5584, %v5616
      %v5649 = vadd.f32 %v5585, %v5617
      %5650 = vst.msk [vmem:[%s306] sm:$0xff] %vm307, %v5618
      %5651 = vst.msk [vmem:[%s306 + $0x8] sm:$0xff] %vm307, %v5619
      %5652 = vst.msk [vmem:[%s306 + $0x10] sm:$0xff] %vm307, %v5620
      %5653 = vst.msk [vmem:[%s306 + $0x18] sm:$0xff] %vm307, %v5621
      %5654 = vst.msk [vmem:[%s306 + $0x20] sm:$0xff] %vm307, %v5622
      %5655 = vst.msk [vmem:[%s306 + $0x28] sm:$0xff] %vm307, %v5623
      %5656 = vst.msk [vmem:[%s306 + $0x30] sm:$0xff] %vm307, %v5624
      %5657 = vst.msk [vmem:[%s306 + $0x38] sm:$0xff] %vm307, %v5625
      %5658 = vst.msk [vmem:[%s306 + $0x40] sm:$0xff] %vm307, %v5626
      %5659 = vst.msk [vmem:[%s306 + $0x48] sm:$0xff] %vm307, %v5627
      %5660 = vst.msk [vmem:[%s306 + $0x50] sm:$0xff] %vm307, %v5628
      %5661 = vst.msk [vmem:[%s306 + $0x58] sm:$0xff] %vm307, %v5629
      %5662 = vst.msk [vmem:[%s306 + $0x60] sm:$0xff] %vm307, %v5630
      %5663 = vst.msk [vmem:[%s306 + $0x68] sm:$0xff] %vm307, %v5631
      %5664 = vst.msk [vmem:[%s306 + $0x70] sm:$0xff] %vm307, %v5632
      %5665 = vst.msk [vmem:[%s306 + $0x78] sm:$0xff] %vm307, %v5633
      %5666 = vst.msk [vmem:[%s306 + $0x80] sm:$0xff] %vm307, %v5634
      %5667 = vst.msk [vmem:[%s306 + $0x88] sm:$0xff] %vm307, %v5635
      %5668 = vst.msk [vmem:[%s306 + $0x90] sm:$0xff] %vm307, %v5636
      %5669 = vst.msk [vmem:[%s306 + $0x98] sm:$0xff] %vm307, %v5637
      %5670 = vst.msk [vmem:[%s306 + $0xa0] sm:$0xff] %vm307, %v5638
      %5671 = vst.msk [vmem:[%s306 + $0xa8] sm:$0xff] %vm307, %v5639
      %5672 = vst.msk [vmem:[%s306 + $0xb0] sm:$0xff] %vm307, %v5640
      %5673 = vst.msk [vmem:[%s306 + $0xb8] sm:$0xff] %vm307, %v5641
      %5674 = vst.msk [vmem:[%s306 + $0xc0] sm:$0xff] %vm307, %v5642
      %5675 = vst.msk [vmem:[%s306 + $0xc8] sm:$0xff] %vm307, %v5643
      %5676 = vst.msk [vmem:[%s306 + $0xd0] sm:$0xff] %vm307, %v5644
      %5677 = vst.msk [vmem:[%s306 + $0xd8] sm:$0xff] %vm307, %v5645
      %5678 = vst.msk [vmem:[%s306 + $0xe0] sm:$0xff] %vm307, %v5646
      %5679 = vst.msk [vmem:[%s306 + $0xe8] sm:$0xff] %vm307, %v5647
      %5680 = vst.msk [vmem:[%s306 + $0xf0] sm:$0xff] %vm307, %v5648
      %5681 = vst.msk [vmem:[%s306 + $0xf8] sm:$0xff] %vm307, %v5649
      %p5682 = scmp.lt.s32.totalorder %s20, 1
      %s5683 = scalar_select %p5682, %s20, 1
      %s5684 = smul.addr %s5683, 32
      %s5685 = smul.addr %s5684, 8
      %s5686 = scalar_lea.vmem %s8, %s5685
      // Predicated region
      $region53: #{tpu_custom_call.1} parent=51 // pred_check
        %p5687 = pneg %p211
      $region54: #{tpu_custom_call.1} parent=51 // pred_check_branch
        %5689 = sbr.rel (%p5687) target = $region56
      $region55: #{tpu_custom_call.1} parent=51 // pred_region
        _
      $region56: #{tpu_custom_call.1} parent=51 // pred_fallthru
        _
    $region52: #{tpu_custom_call.1} parent=5 // pred_fallthru
      _
    %p5690 = scmp.le.s32.totalorder 2, %s15
    // Predicated region
    $region57: #{tpu_custom_call.1} parent=5 // pred_check
      %p5691 = pneg %p5690
    $region58: #{tpu_custom_call.1} parent=5 // pred_check_branch
      %5693 = sbr.rel (%p5691) target = $region60
    $region59: #{tpu_custom_call.1} parent=5 // pred_region
      %s5694 = ssub.s32 %s15, 2
      // Predicated region
      $region61: #{tpu_custom_call.1} parent=59 // pred_check
        %p5695 = pneg %p217
      $region62: #{tpu_custom_call.1} parent=59 // pred_check_branch
        %5697 = sbr.rel (%p5695) target = $region64
      $region63: #{tpu_custom_call.1} parent=59 // pred_region
        %p5698 = scmp.lt.s32.totalorder %s21, 1
        %s5699 = scalar_select %p5698, %s21, 1
        %s5700 = smul.addr %s5699, 32
        %s5701 = smul.addr %s5700, 8
        %s5702 = scalar_lea.vmem %s8, %s5701
      $region64: #{tpu_custom_call.1} parent=59 // pred_fallthru
        _
    $region60: #{tpu_custom_call.1} parent=5 // pred_fallthru
      _
  $region6: #{tpu_custom_call.1} parent=0 // loop_footer
    %s19 = sadd.s32 1, %s15
  $region7: #{tpu_custom_call.1} parent=0 // loop_footer_branch
    %14 = sbr.rel target = $region3
  $region8: #{tpu_custom_call.1} parent=0 // loop_exit
    _

</llo_original>
